<compile_context>
chip_gen: v5e
topology: v5e:2x2
jax: 0.10.0
libtpu: 0.0.40
codegen_flags: <defaults>
</compile_context>

<pallas_src>
from functools import partial

import jax
import jax.numpy as jnp
from jax.experimental import pallas as pl
from jax.experimental.pallas import tpu as pltpu


def _bgmf_kernel(x_ref, w_ref, b_ref, o_ref):
    # x: (TN, K) batch tile (any float dtype), w: (K, D) = softplus(_W)
    # (precomputed f32), b: (1, D) f32.
    z = x_ref[...].astype(jnp.float32)

    # z = 0.0001 + z * (1 - 0.0002);  logit(z) = log(z) - log1p(-z)
    # (log/log1p form avoids an f32 divide; mathematically == log(z/(1-z)))
    z = 0.0001 + z * (1.0 - 0.0002)
    z = jnp.log(z) - jnp.log1p(-z)

    # l = z @ W + b   (MXU matmul, f32 accumulation)
    l = jnp.dot(z, w_ref[...], preferred_element_type=jnp.float32)
    l = l + b_ref[...]

    # sigmoid(l) = 0.5 * tanh(0.5 * l) + 0.5 : single EUP push per vreg,
    # result exactly in [0, 1].
    o_ref[...] = (0.5 * jnp.tanh(0.5 * l) + 0.5).astype(o_ref.dtype)


def _round_up(a, m):
    return ((a + m - 1) // m) * m


def bgmf_forward(x, W_raw, b, *, block_n=1024, out_dtype=jnp.float32):
    """Forward pass of BGMF.

    x:        (N, K) float, values in (0, 1). Streamed in its given dtype
              (pass bf16 to halve the input HBM stream; kernel upcasts to f32).
    W_raw:    (K, D) float, pre-softplus parameter (_W)
    b:        (D,)   float bias
    block_n:  rows per grid step (rounded to a multiple of 8)
    out_dtype: output dtype (bf16 halves the dominant output stream on v5e)
    """
    N, K = x.shape
    Kw, D = W_raw.shape
    assert K == Kw, (K, Kw)

    # Hoist softplus(_W) out of the per-tile hot path: one K x D transcendental
    # pass per parameter value instead of one per grid step inside the kernel.
    W_sp = jax.nn.softplus(W_raw.astype(jnp.float32))
    b2 = b.reshape(1, D).astype(jnp.float32)

    # Batch tile: multiple of 8 sublanes, capped at round_up(N, 8).
    tn = max(8, min(int(block_n), _round_up(N, 8)))
    tn = _round_up(tn, 8)
    n_pad = pl.cdiv(N, tn) * tn
    if n_pad != N:
        # pad with an interior value (0.5) so the logit stays finite; padded
        # rows are independent and sliced away below.
        x = jnp.pad(x, ((0, n_pad - N), (0, 0)), constant_values=0.5)

    grid = (n_pad // tn,)

    # Scoped-VMEM budget from the actual tile footprint: double-buffered x and
    # output tiles + (conservatively double-buffered) resident W and bias,
    # plus headroom. Capped well under v7x's 64 MiB physical VMEM.
    x_bytes = jnp.dtype(x.dtype).itemsize
    o_bytes = jnp.dtype(out_dtype).itemsize
    x_tile = tn * _round_up(K, 128) * x_bytes
    o_tile = tn * _round_up(D, 128) * o_bytes
    w_res = _round_up(K, 8) * _round_up(D, 128) * 4
    b_res = 8 * _round_up(D, 128) * 4
    vmem_bytes = 2 * (x_tile + o_tile) + 2 * (w_res + b_res) + (4 << 20)
    vmem_bytes = int(min(max(vmem_bytes, 8 << 20), 48 << 20))

    out = pl.pallas_call(
        _bgmf_kernel,
        out_shape=jax.ShapeDtypeStruct((n_pad, D), out_dtype),
        grid=grid,
        in_specs=[
            # x: stream (TN, K) row tiles over the grid, in the caller's dtype
            pl.BlockSpec((tn, K), lambda i: (i, 0),
                         memory_space=pltpu.MemorySpace.VMEM),
            # W (already softplus'd): resident, same block every step
            pl.BlockSpec((K, D), lambda i: (0, 0),
                         memory_space=pltpu.MemorySpace.VMEM),
            # bias: resident (1, D)
            pl.BlockSpec((1, D), lambda i: (0, 0),
                         memory_space=pltpu.MemorySpace.VMEM),
        ],
        out_specs=pl.BlockSpec((tn, D), lambda i: (i, 0),
                               memory_space=pltpu.MemorySpace.VMEM),
        compiler_params=pltpu.CompilerParams(
            # independent row tiles -> megacore sharding where available
            # TODO(synk): on v7x, profile and switch to pltpu.CORE_PARALLEL (or
            # pl.core_map over create_tensorcore_mesh) if only one TC is busy.
            dimension_semantics=("parallel",),
            vmem_limit_bytes=vmem_bytes,
        ),
    )(x, W_sp, b2)

    return out[:N] if n_pad != N else out


def init_bgmf_params(key, D, K, low=0.1, high=0.2):
    """Deterministic synthetic init matching the PyTorch __init__."""
    # W ~ Uniform(low, high), shape (K, D); _W = log(exp(W) - 1) (inverse softplus)
    W = jax.random.uniform(key, (K, D), dtype=jnp.float32, minval=low, maxval=high)
    W_raw = jnp.log(jnp.expm1(W))
    b = jnp.zeros((D,), dtype=jnp.float32)
    return W_raw, b


def bgmf_reference(x, W_raw, b):
    z = 0.0001 + x * (1.0 - 0.0002)
    z = jnp.log(z / (1.0 - z))
    l = z @ jax.nn.softplus(W_raw) + b
    return jax.nn.sigmoid(l)


if __name__ == "__main__":
    # Batch large enough to exercise the N grid (2 tiles of 1024, with padding),
    # latent K=32, data dim D=128 (lane-dense output).
    N, K, D = 2000, 32, 128
    key = jax.random.PRNGKey(0)
    k_param, k_x = jax.random.split(key)

    W_raw, b = init_bgmf_params(k_param, D=D, K=K)
    # forward input x plays the role of z in conditional_mean: values in (0, 1)
    x = jax.random.uniform(k_x, (N, K), dtype=jnp.float32, minval=0.05, maxval=0.95)

    fwd = jax.jit(partial(bgmf_forward, block_n=1024, out_dtype=jnp.float32))
    out = jax.block_until_ready(fwd(x, W_raw, b))

    ref = bgmf_reference(x, W_raw, b)
    assert out.shape == (N, D)
    # tanh-form sigmoid is numerically tight (no approx reciprocal), so the
    # tolerance can be much stricter than before.
    max_err = float(jnp.max(jnp.abs(out - ref)))
    assert max_err < 1e-4, f"mismatch vs reference: max abs err {max_err}"

    print("KERNEL_OK")
</pallas_src>

<mosaic_0001>
module attributes {stable_mosaic.version = 11 : i64} {
  func.func @_bgmf_kernel(%arg0: i32, %arg1: memref<1024x32xf32, #tpu.memory_space<vmem>>, %arg2: memref<32x128xf32, #tpu.memory_space<vmem>>, %arg3: memref<1x128xf32, #tpu.memory_space<vmem>>, %arg4: memref<1024x128xf32, #tpu.memory_space<vmem>>) attributes {dimension_semantics = [#tpu.dimension_semantics<parallel>], iteration_bounds = array<i64: 2>, scalar_prefetch = 0 : i64, scratch_operands = 0 : i64, tpu.core_type = #tpu.core_type<tc>, window_params = [{transform_indices = @transform_0, window_bounds = array<i64: 1024, 32>}, {pipeline_mode = #tpu.pipeline_mode<synchronous>, transform_indices = @transform_1, window_bounds = array<i64: 32, 128>}, {pipeline_mode = #tpu.pipeline_mode<synchronous>, transform_indices = @transform_2, window_bounds = array<i64: 1, 128>}, {transform_indices = @transform_3, window_bounds = array<i64: 1024, 128>}]} {
    %c0 = arith.constant 0 : index
    %c0_0 = arith.constant 0 : index
    %0 = vector.load %arg1[%c0, %c0_0] : memref<1024x32xf32, #tpu.memory_space<vmem>>, vector<1024x32xf32>
    %cst = arith.constant 9.998000e-01 : f32
    %1 = vector.broadcast %cst : f32 to vector<1024x32xf32>
    %2 = arith.mulf %0, %1 : vector<1024x32xf32>
    %cst_1 = arith.constant 9.99999974E-5 : f32
    %3 = vector.broadcast %cst_1 : f32 to vector<1024x32xf32>
    %4 = arith.addf %3, %2 : vector<1024x32xf32>
    %5 = math.log %4 : vector<1024x32xf32>
    %cst_2 = arith.constant 0.000000e+00 : f32
    %6 = vector.broadcast %cst_2 : f32 to vector<1024x32xf32>
    %7 = arith.subf %6, %4 : vector<1024x32xf32>
    %8 = math.log1p %7 : vector<1024x32xf32>
    %9 = arith.subf %5, %8 : vector<1024x32xf32>
    %c0_3 = arith.constant 0 : index
    %c0_4 = arith.constant 0 : index
    %10 = vector.load %arg2[%c0_3, %c0_4] : memref<32x128xf32, #tpu.memory_space<vmem>>, vector<32x128xf32>
    %cst_5 = arith.constant dense<0.000000e+00> : vector<1024x128xf32>
    %11 = tpu.matmul %9, %10, %cst_5 {dimension_numbers = #tpu.dot_dimension_numbers<[1], [0], [0], [1], [0, 0, 1, 1], [], []>} : vector<1024x32xf32>, vector<32x128xf32>, vector<1024x128xf32> -> vector<1024x128xf32>
    %c0_6 = arith.constant 0 : index
    %c0_7 = arith.constant 0 : index
    %12 = vector.load %arg3[%c0_6, %c0_7] : memref<1x128xf32, #tpu.memory_space<vmem>>, vector<1x128xf32>
    %13 = vector.broadcast %12 : vector<1x128xf32> to vector<1024x128xf32>
    %14 = arith.addf %11, %13 : vector<1024x128xf32>
    %cst_8 = arith.constant 5.000000e-01 : f32
    %15 = vector.broadcast %cst_8 : f32 to vector<1024x128xf32>
    %16 = arith.mulf %15, %14 : vector<1024x128xf32>
    %17 = math.tanh %16 : vector<1024x128xf32>
    %cst_9 = arith.constant 5.000000e-01 : f32
    %18 = vector.broadcast %cst_9 : f32 to vector<1024x128xf32>
    %19 = arith.mulf %18, %17 : vector<1024x128xf32>
    %cst_10 = arith.constant 5.000000e-01 : f32
    %20 = vector.broadcast %cst_10 : f32 to vector<1024x128xf32>
    %21 = arith.addf %19, %20 : vector<1024x128xf32>
    %c0_11 = arith.constant 0 : index
    %c0_12 = arith.constant 0 : index
    %22 = vector.load %arg4[%c0_11, %c0_12] : memref<1024x128xf32, #tpu.memory_space<vmem>>, vector<1024x128xf32>
    tpu.vector_store %arg4[%c0_11, %c0_12], %21 {strides = array<i32>} : memref<1024x128xf32, #tpu.memory_space<vmem>>, vector<1024x128xf32>,
    return
  }
  func.func @transform_0(%arg0: i32) -> (i32, i32) {
    %c0_i32 = arith.constant 0 : i32
    %c0_i32_0 = arith.constant 0 : i32
    return %arg0, %c0_i32 : i32, i32
  }
  func.func @transform_1(%arg0: i32) -> (i32, i32) {
    %c0_i32 = arith.constant 0 : i32
    %c0_i32_0 = arith.constant 0 : i32
    %c0_i32_1 = arith.constant 0 : i32
    return %c0_i32, %c0_i32_0 : i32, i32
  }
  func.func @transform_2(%arg0: i32) -> (i32, i32) {
    %c0_i32 = arith.constant 0 : i32
    %c0_i32_0 = arith.constant 0 : i32
    %c0_i32_1 = arith.constant 0 : i32
    return %c0_i32, %c0_i32_0 : i32, i32
  }
  func.func @transform_3(%arg0: i32) -> (i32, i32) {
    %c0_i32 = arith.constant 0 : i32
    %c0_i32_0 = arith.constant 0 : i32
    return %arg0, %c0_i32 : i32, i32
  }
}

</mosaic_0001>

<llo_original>
// kernel: bgmf_forward.1
$region0: #{bgmf_forward.1}
  #allocation0 [shape = 'u32[]', space=smem, size = 0x4, offset = 0x4, fixed_abs, tag = 'smem constant byte address 0x4 - core index']
  #allocation1 [shape = 'u32[72,128]{1,0:T(1,128)}', space=vmem, size = 0x9000, scoped, tag = 'internal scratch']
  %s0 = inlined_call_operand.vmem [shape: f32[2048,32], index: 0, kind: input, shape index: {}]
  %s1 = inlined_call_operand.vmem [shape: f32[32,128], index: 1, kind: input, shape index: {}]
  %s2 = inlined_call_operand.vmem [shape: f32[1,128], index: 2, kind: input, shape index: {}]
  %s3 = inlined_call_operand.vmem [shape: f32[2048,128], index: 3, kind: output, shape index: {}]
  %s4 = sld [smem:[#allocation0]]
  $region45: #{bgmf_forward.1} parent=0
    _
  %s6 = ssub.s32 1, %s4
  %s7 = scalar_select 0, %s6, %s4
  loop: start=0, step=1, limit=4
  $region2: #{bgmf_forward.1} parent=0 // loop_pre_header
    _
  $region3: #{bgmf_forward.1} parent=0 // loop_header
    %s9 = sphi 0, %s13
    %p10 = scmp.ge.s32.totalorder %s9, 4
    %s19 = sphi 0, %s21
    %s22 = sphi 0, %s19
    %s23 = sphi 0, %s22
    %s39 = sphi 0, %s23
    %s43 = sphi 0, %s43
    %s45 = sphi 0, %s43
    %s46 = sphi 0, %s45
    %s60 = sphi 0, %s46
    %s64 = sphi 0, %s64
    %s66 = sphi 0, %s64
    %s67 = sphi 0, %s66
    %s81 = sphi 0, %s67
    %s87 = sphi 0, %s89
    %s90 = sphi 0, %s87
    %s91 = sphi 0, %s90
    %s107 = sphi 0, %s91
  $region4: #{bgmf_forward.1} parent=0 // loop_header_branch
    %12 = sbr.rel (%p10) target = $region8
  $region5: #{bgmf_forward.1} parent=0 // loop_body
    %s14 = ssub.s32 %s9, 1
    %s15 = ssub.s32 %s9, 2
    %s16 = sadd.s32 %s9, 1
    %s17 = ssub.s32 %s9, %s16
    %p18 = scmp.eq.s32.totalorder %s17, 0
    %s20 = sadd.s32 %s19, 1
    %s21 = scalar_select %p18, %s19, %s20
    %p24 = pneg %p18
    %p25 = scmp.eq.s32.totalorder %s9, 1
    %p26 = por %p24, %p25
    %p27 = scmp.ne.s32.totalorder %s19, %s22
    %p28 = scmp.eq.s32.totalorder %s9, 0
    %p29 = por %p27, %p28
    %p30 = scmp.ne.s32.totalorder %s19, %s22
    %p31 = scmp.eq.s32.totalorder %s14, 1
    %p32 = por %p30, %p31
    %p33 = scmp.ne.s32.totalorder %s22, %s23
    %p34 = scmp.eq.s32.totalorder %s14, 0
    %p35 = por %p33, %p34
    %p36 = scmp.ne.s32.totalorder %s22, %s23
    %p37 = scmp.eq.s32.totalorder %s15, 1
    %p38 = por %p36, %p37
    %p40 = scmp.ne.s32.totalorder %s23, %s39
    %p41 = scmp.eq.s32.totalorder %s15, 0
    %p42 = por %p40, %p41
    %s44 = sadd.s32 %s43, 1
    %p47 = scmp.eq.s32.totalorder %s9, 1
    %p48 = scmp.ne.s32.totalorder %s43, %s45
    %p49 = scmp.eq.s32.totalorder %s9, 0
    %p50 = por %p48, %p49
    %p51 = scmp.ne.s32.totalorder %s43, %s45
    %p52 = scmp.eq.s32.totalorder %s14, 1
    %p53 = por %p51, %p52
    %p54 = scmp.ne.s32.totalorder %s45, %s46
    %p55 = scmp.eq.s32.totalorder %s14, 0
    %p56 = por %p54, %p55
    %p57 = scmp.ne.s32.totalorder %s45, %s46
    %p58 = scmp.eq.s32.totalorder %s15, 1
    %p59 = por %p57, %p58
    %p61 = scmp.ne.s32.totalorder %s46, %s60
    %p62 = scmp.eq.s32.totalorder %s15, 0
    %p63 = por %p61, %p62
    %s65 = sadd.s32 %s64, 1
    %p68 = scmp.eq.s32.totalorder %s9, 1
    %p69 = scmp.ne.s32.totalorder %s64, %s66
    %p70 = scmp.eq.s32.totalorder %s9, 0
    %p71 = por %p69, %p70
    %p72 = scmp.ne.s32.totalorder %s64, %s66
    %p73 = scmp.eq.s32.totalorder %s14, 1
    %p74 = por %p72, %p73
    %p75 = scmp.ne.s32.totalorder %s66, %s67
    %p76 = scmp.eq.s32.totalorder %s14, 0
    %p77 = por %p75, %p76
    %p78 = scmp.ne.s32.totalorder %s66, %s67
    %p79 = scmp.eq.s32.totalorder %s15, 1
    %p80 = por %p78, %p79
    %p82 = scmp.ne.s32.totalorder %s67, %s81
    %p83 = scmp.eq.s32.totalorder %s15, 0
    %p84 = por %p82, %p83
    %s85 = ssub.s32 %s9, %s16
    %p86 = scmp.eq.s32.totalorder %s85, 0
    %s88 = sadd.s32 %s87, 1
    %s89 = scalar_select %p86, %s87, %s88
    %p92 = pneg %p86
    %p93 = scmp.eq.s32.totalorder %s9, 1
    %p94 = por %p92, %p93
    %p95 = scmp.ne.s32.totalorder %s87, %s90
    %p96 = scmp.eq.s32.totalorder %s9, 0
    %p97 = por %p95, %p96
    %p98 = scmp.ne.s32.totalorder %s87, %s90
    %p99 = scmp.eq.s32.totalorder %s14, 1
    %p100 = por %p98, %p99
    %p101 = scmp.ne.s32.totalorder %s90, %s91
    %p102 = scmp.eq.s32.totalorder %s14, 0
    %p103 = por %p101, %p102
    %p104 = scmp.ne.s32.totalorder %s90, %s91
    %p105 = scmp.eq.s32.totalorder %s15, 1
    %p106 = por %p104, %p105
    %p108 = scmp.ne.s32.totalorder %s91, %s107
    %p109 = scmp.eq.s32.totalorder %s15, 0
    %p110 = por %p108, %p109
    %p111 = scmp.le.s32.totalorder 1, %s9
    %p112 = scmp.lt.s32.totalorder %s9, 3
    %p113 = pnand %p111, %p112
    %p114 = pneg %p113
    // Predicated region
    $region9: #{bgmf_forward.1} parent=5 // pred_check
      _
    $region10: #{bgmf_forward.1} parent=5 // pred_check_branch
      %116 = sbr.rel (%p113) target = $region12
    $region11: #{bgmf_forward.1} parent=5 // pred_region
      %s117 = ssub.s32 %s9, 1
      // Predicated region
      $region13: #{bgmf_forward.1} parent=11 // pred_check
        %p118 = pneg %p56
      $region14: #{bgmf_forward.1} parent=11 // pred_check_branch
        %120 = sbr.rel (%p118) target = $region16
      $region15: #{bgmf_forward.1} parent=11 // pred_region
        _
      $region16: #{bgmf_forward.1} parent=11 // pred_fallthru
        _
      // Predicated region
      $region17: #{bgmf_forward.1} parent=11 // pred_check
        %p121 = pneg %p77
      $region18: #{bgmf_forward.1} parent=11 // pred_check_branch
        %123 = sbr.rel (%p121) target = $region20
      $region19: #{bgmf_forward.1} parent=11 // pred_region
        _
      $region20: #{bgmf_forward.1} parent=11 // pred_fallthru
        _
    $region12: #{bgmf_forward.1} parent=5 // pred_fallthru
      _
    %p124 = scmp.lt.s32.totalorder %s9, 2
    // Predicated region
    $region21: #{bgmf_forward.1} parent=5 // pred_check
      %p125 = pneg %p124
    $region22: #{bgmf_forward.1} parent=5 // pred_check_branch
      %127 = sbr.rel (%p125) target = $region24
    $region23: #{bgmf_forward.1} parent=5 // pred_region
      // Predicated region
      $region25: #{bgmf_forward.1} parent=23 // pred_check
        %p128 = pneg %p29
      $region26: #{bgmf_forward.1} parent=23 // pred_check_branch
        %130 = sbr.rel (%p128) target = $region28
      $region27: #{bgmf_forward.1} parent=23 // pred_region
        %s131 = smul.u32 128, %s9
        %p132 = scmp.lt.s32.totalorder %s131, 255
        %s133 = scalar_select %p132, %s131, 255
        %s134 = smul.addr %s133, 8
        %s135 = scalar_lea.vmem %s0, %s134
        %s136 = smul.u32 128, %s9
      $region28: #{bgmf_forward.1} parent=23 // pred_fallthru
        _
    $region24: #{bgmf_forward.1} parent=5 // pred_fallthru
      _
    %p137 = scmp.le.s32.totalorder 1, %s9
    %p138 = scmp.lt.s32.totalorder %s9, 3
    %p139 = pnand %p137, %p138
    %p140 = pneg %p139
    // Predicated region
    $region29: #{bgmf_forward.1} parent=5 // pred_check
      _
    $region30: #{bgmf_forward.1} parent=5 // pred_check_branch
      %142 = sbr.rel (%p139) target = $region32
    $region31: #{bgmf_forward.1} parent=5 // pred_region
      %s143 = ssub.s32 %s9, 1
      %s144 = smul.u32 128, %s14
      %p145 = scmp.lt.s32.totalorder %s144, 255
      %s146 = scalar_select %p145, %s144, 255
      %s147 = smul.addr %s146, 8
      %s148 = scalar_lea.vmem %s0, %s147
      %p149 = pneg %p35
      %p150 = pneg %p32
      %p151 = pneg %p56
      %p152 = pneg %p53
      %p153 = pneg %p77
      %p154 = pneg %p74
      %p155 = pneg %p103
      %p156 = pneg %p100
      %s157 = smul.u32 128, %s14
      %p158 = scmp.lt.s32.totalorder %s157, 255
      %s159 = scalar_select %p158, %s157, 255
      %s160 = smul.addr %s159, 8
      %s161 = scalar_lea.vmem %s3, %s160
      %s162 = smul.u32 128, %s14
      %p163 = scmp.lt.s32.totalorder %s162, 255
      %s164 = scalar_select %p163, %s162, 255
      %s165 = smul.addr %s164, 8
      %s166 = scalar_lea.vmem %s0, %s165
      %s167 = smul.u32 128, %s14
      %s168 = smul.u32 128, %s14
      %p169 = scmp.lt.s32.totalorder %s168, 255
      %s170 = scalar_select %p169, %s168, 255
      %s171 = smul.addr %s170, 8
      %s172 = scalar_lea.vmem %s3, %s171
      %s173 = smul.u32 128, %s14
      %v174 = vld [vmem:[%s166] sm:$0xff]
      %v175 = vld [vmem:[%s166 + $0x8] sm:$0xff]
      %v176 = vld [vmem:[%s166 + $0x10] sm:$0xff]
      %v177 = vld [vmem:[%s166 + $0x18] sm:$0xff]
      %v178 = vld [vmem:[%s166 + $0x20] sm:$0xff]
      %v179 = vld [vmem:[%s166 + $0x28] sm:$0xff]
      %v180 = vld [vmem:[%s166 + $0x30] sm:$0xff]
      %v181 = vld [vmem:[%s166 + $0x38] sm:$0xff]
      %v182 = vld [vmem:[%s166 + $0x40] sm:$0xff]
      %v183 = vld [vmem:[%s166 + $0x48] sm:$0xff]
      %v184 = vld [vmem:[%s166 + $0x50] sm:$0xff]
      %v185 = vld [vmem:[%s166 + $0x58] sm:$0xff]
      %v186 = vld [vmem:[%s166 + $0x60] sm:$0xff]
      %v187 = vld [vmem:[%s166 + $0x68] sm:$0xff]
      %v188 = vld [vmem:[%s166 + $0x70] sm:$0xff]
      %v189 = vld [vmem:[%s166 + $0x78] sm:$0xff]
      %v190 = vld [vmem:[%s166 + $0x80] sm:$0xff]
      %v191 = vld [vmem:[%s166 + $0x88] sm:$0xff]
      %v192 = vld [vmem:[%s166 + $0x90] sm:$0xff]
      %v193 = vld [vmem:[%s166 + $0x98] sm:$0xff]
      %v194 = vld [vmem:[%s166 + $0xa0] sm:$0xff]
      %v195 = vld [vmem:[%s166 + $0xa8] sm:$0xff]
      %v196 = vld [vmem:[%s166 + $0xb0] sm:$0xff]
      %v197 = vld [vmem:[%s166 + $0xb8] sm:$0xff]
      %v198 = vld [vmem:[%s166 + $0xc0] sm:$0xff]
      %v199 = vld [vmem:[%s166 + $0xc8] sm:$0xff]
      %v200 = vld [vmem:[%s166 + $0xd0] sm:$0xff]
      %v201 = vld [vmem:[%s166 + $0xd8] sm:$0xff]
      %v202 = vld [vmem:[%s166 + $0xe0] sm:$0xff]
      %v203 = vld [vmem:[%s166 + $0xe8] sm:$0xff]
      %v204 = vld [vmem:[%s166 + $0xf0] sm:$0xff]
      %v205 = vld [vmem:[%s166 + $0xf8] sm:$0xff]
      %v206 = vld [vmem:[%s166 + $0x100] sm:$0xff]
      %v207 = vld [vmem:[%s166 + $0x108] sm:$0xff]
      %v208 = vld [vmem:[%s166 + $0x110] sm:$0xff]
      %v209 = vld [vmem:[%s166 + $0x118] sm:$0xff]
      %v210 = vld [vmem:[%s166 + $0x120] sm:$0xff]
      %v211 = vld [vmem:[%s166 + $0x128] sm:$0xff]
      %v212 = vld [vmem:[%s166 + $0x130] sm:$0xff]
      %v213 = vld [vmem:[%s166 + $0x138] sm:$0xff]
      %v214 = vld [vmem:[%s166 + $0x140] sm:$0xff]
      %v215 = vld [vmem:[%s166 + $0x148] sm:$0xff]
      %v216 = vld [vmem:[%s166 + $0x150] sm:$0xff]
      %v217 = vld [vmem:[%s166 + $0x158] sm:$0xff]
      %v218 = vld [vmem:[%s166 + $0x160] sm:$0xff]
      %v219 = vld [vmem:[%s166 + $0x168] sm:$0xff]
      %v220 = vld [vmem:[%s166 + $0x170] sm:$0xff]
      %v221 = vld [vmem:[%s166 + $0x178] sm:$0xff]
      %v222 = vld [vmem:[%s166 + $0x180] sm:$0xff]
      %v223 = vld [vmem:[%s166 + $0x188] sm:$0xff]
      %v224 = vld [vmem:[%s166 + $0x190] sm:$0xff]
      %v225 = vld [vmem:[%s166 + $0x198] sm:$0xff]
      %v226 = vld [vmem:[%s166 + $0x1a0] sm:$0xff]
      %v227 = vld [vmem:[%s166 + $0x1a8] sm:$0xff]
      %v228 = vld [vmem:[%s166 + $0x1b0] sm:$0xff]
      %v229 = vld [vmem:[%s166 + $0x1b8] sm:$0xff]
      %v230 = vld [vmem:[%s166 + $0x1c0] sm:$0xff]
      %v231 = vld [vmem:[%s166 + $0x1c8] sm:$0xff]
      %v232 = vld [vmem:[%s166 + $0x1d0] sm:$0xff]
      %v233 = vld [vmem:[%s166 + $0x1d8] sm:$0xff]
      %v234 = vld [vmem:[%s166 + $0x1e0] sm:$0xff]
      %v235 = vld [vmem:[%s166 + $0x1e8] sm:$0xff]
      %v236 = vld [vmem:[%s166 + $0x1f0] sm:$0xff]
      %v237 = vld [vmem:[%s166 + $0x1f8] sm:$0xff]
      %v238 = vld [vmem:[%s166 + $0x200] sm:$0xff]
      %v239 = vld [vmem:[%s166 + $0x208] sm:$0xff]
      %v240 = vld [vmem:[%s166 + $0x210] sm:$0xff]
      %v241 = vld [vmem:[%s166 + $0x218] sm:$0xff]
      %v242 = vld [vmem:[%s166 + $0x220] sm:$0xff]
      %v243 = vld [vmem:[%s166 + $0x228] sm:$0xff]
      %v244 = vld [vmem:[%s166 + $0x230] sm:$0xff]
      %v245 = vld [vmem:[%s166 + $0x238] sm:$0xff]
      %v246 = vld [vmem:[%s166 + $0x240] sm:$0xff]
      %v247 = vld [vmem:[%s166 + $0x248] sm:$0xff]
      %v248 = vld [vmem:[%s166 + $0x250] sm:$0xff]
      %v249 = vld [vmem:[%s166 + $0x258] sm:$0xff]
      %v250 = vld [vmem:[%s166 + $0x260] sm:$0xff]
      %v251 = vld [vmem:[%s166 + $0x268] sm:$0xff]
      %v252 = vld [vmem:[%s166 + $0x270] sm:$0xff]
      %v253 = vld [vmem:[%s166 + $0x278] sm:$0xff]
      %v254 = vld [vmem:[%s166 + $0x280] sm:$0xff]
      %v255 = vld [vmem:[%s166 + $0x288] sm:$0xff]
      %v256 = vld [vmem:[%s166 + $0x290] sm:$0xff]
      %v257 = vld [vmem:[%s166 + $0x298] sm:$0xff]
      %v258 = vld [vmem:[%s166 + $0x2a0] sm:$0xff]
      %v259 = vld [vmem:[%s166 + $0x2a8] sm:$0xff]
      %v260 = vld [vmem:[%s166 + $0x2b0] sm:$0xff]
      %v261 = vld [vmem:[%s166 + $0x2b8] sm:$0xff]
      %v262 = vld [vmem:[%s166 + $0x2c0] sm:$0xff]
      %v263 = vld [vmem:[%s166 + $0x2c8] sm:$0xff]
      %v264 = vld [vmem:[%s166 + $0x2d0] sm:$0xff]
      %v265 = vld [vmem:[%s166 + $0x2d8] sm:$0xff]
      %v266 = vld [vmem:[%s166 + $0x2e0] sm:$0xff]
      %v267 = vld [vmem:[%s166 + $0x2e8] sm:$0xff]
      %v268 = vld [vmem:[%s166 + $0x2f0] sm:$0xff]
      %v269 = vld [vmem:[%s166 + $0x2f8] sm:$0xff]
      %v270 = vld [vmem:[%s166 + $0x300] sm:$0xff]
      %v271 = vld [vmem:[%s166 + $0x308] sm:$0xff]
      %v272 = vld [vmem:[%s166 + $0x310] sm:$0xff]
      %v273 = vld [vmem:[%s166 + $0x318] sm:$0xff]
      %v274 = vld [vmem:[%s166 + $0x320] sm:$0xff]
      %v275 = vld [vmem:[%s166 + $0x328] sm:$0xff]
      %v276 = vld [vmem:[%s166 + $0x330] sm:$0xff]
      %v277 = vld [vmem:[%s166 + $0x338] sm:$0xff]
      %v278 = vld [vmem:[%s166 + $0x340] sm:$0xff]
      %v279 = vld [vmem:[%s166 + $0x348] sm:$0xff]
      %v280 = vld [vmem:[%s166 + $0x350] sm:$0xff]
      %v281 = vld [vmem:[%s166 + $0x358] sm:$0xff]
      %v282 = vld [vmem:[%s166 + $0x360] sm:$0xff]
      %v283 = vld [vmem:[%s166 + $0x368] sm:$0xff]
      %v284 = vld [vmem:[%s166 + $0x370] sm:$0xff]
      %v285 = vld [vmem:[%s166 + $0x378] sm:$0xff]
      %v286 = vld [vmem:[%s166 + $0x380] sm:$0xff]
      %v287 = vld [vmem:[%s166 + $0x388] sm:$0xff]
      %v288 = vld [vmem:[%s166 + $0x390] sm:$0xff]
      %v289 = vld [vmem:[%s166 + $0x398] sm:$0xff]
      %v290 = vld [vmem:[%s166 + $0x3a0] sm:$0xff]
      %v291 = vld [vmem:[%s166 + $0x3a8] sm:$0xff]
      %v292 = vld [vmem:[%s166 + $0x3b0] sm:$0xff]
      %v293 = vld [vmem:[%s166 + $0x3b8] sm:$0xff]
      %v294 = vld [vmem:[%s166 + $0x3c0] sm:$0xff]
      %v295 = vld [vmem:[%s166 + $0x3c8] sm:$0xff]
      %v296 = vld [vmem:[%s166 + $0x3d0] sm:$0xff]
      %v297 = vld [vmem:[%s166 + $0x3d8] sm:$0xff]
      %v298 = vld [vmem:[%s166 + $0x3e0] sm:$0xff]
      %v299 = vld [vmem:[%s166 + $0x3e8] sm:$0xff]
      %v300 = vld [vmem:[%s166 + $0x3f0] sm:$0xff]
      %v301 = vld [vmem:[%s166 + $0x3f8] sm:$0xff]
      %v302 = vmul.f32 %v174, 0.9998
      %v303 = vmul.f32 %v175, 0.9998
      %v304 = vmul.f32 %v176, 0.9998
      %v305 = vmul.f32 %v177, 0.9998
      %v306 = vmul.f32 %v178, 0.9998
      %v307 = vmul.f32 %v179, 0.9998
      %v308 = vmul.f32 %v180, 0.9998
      %v309 = vmul.f32 %v181, 0.9998
      %v310 = vmul.f32 %v182, 0.9998
      %v311 = vmul.f32 %v183, 0.9998
      %v312 = vmul.f32 %v184, 0.9998
      %v313 = vmul.f32 %v185, 0.9998
      %v314 = vmul.f32 %v186, 0.9998
      %v315 = vmul.f32 %v187, 0.9998
      %v316 = vmul.f32 %v188, 0.9998
      %v317 = vmul.f32 %v189, 0.9998
      %v318 = vmul.f32 %v190, 0.9998
      %v319 = vmul.f32 %v191, 0.9998
      %v320 = vmul.f32 %v192, 0.9998
      %v321 = vmul.f32 %v193, 0.9998
      %v322 = vmul.f32 %v194, 0.9998
      %v323 = vmul.f32 %v195, 0.9998
      %v324 = vmul.f32 %v196, 0.9998
      %v325 = vmul.f32 %v197, 0.9998
      %v326 = vmul.f32 %v198, 0.9998
      %v327 = vmul.f32 %v199, 0.9998
      %v328 = vmul.f32 %v200, 0.9998
      %v329 = vmul.f32 %v201, 0.9998
      %v330 = vmul.f32 %v202, 0.9998
      %v331 = vmul.f32 %v203, 0.9998
      %v332 = vmul.f32 %v204, 0.9998
      %v333 = vmul.f32 %v205, 0.9998
      %v334 = vmul.f32 %v206, 0.9998
      %v335 = vmul.f32 %v207, 0.9998
      %v336 = vmul.f32 %v208, 0.9998
      %v337 = vmul.f32 %v209, 0.9998
      %v338 = vmul.f32 %v210, 0.9998
      %v339 = vmul.f32 %v211, 0.9998
      %v340 = vmul.f32 %v212, 0.9998
      %v341 = vmul.f32 %v213, 0.9998
      %v342 = vmul.f32 %v214, 0.9998
      %v343 = vmul.f32 %v215, 0.9998
      %v344 = vmul.f32 %v216, 0.9998
      %v345 = vmul.f32 %v217, 0.9998
      %v346 = vmul.f32 %v218, 0.9998
      %v347 = vmul.f32 %v219, 0.9998
      %v348 = vmul.f32 %v220, 0.9998
      %v349 = vmul.f32 %v221, 0.9998
      %v350 = vmul.f32 %v222, 0.9998
      %v351 = vmul.f32 %v223, 0.9998
      %v352 = vmul.f32 %v224, 0.9998
      %v353 = vmul.f32 %v225, 0.9998
      %v354 = vmul.f32 %v226, 0.9998
      %v355 = vmul.f32 %v227, 0.9998
      %v356 = vmul.f32 %v228, 0.9998
      %v357 = vmul.f32 %v229, 0.9998
      %v358 = vmul.f32 %v230, 0.9998
      %v359 = vmul.f32 %v231, 0.9998
      %v360 = vmul.f32 %v232, 0.9998
      %v361 = vmul.f32 %v233, 0.9998
      %v362 = vmul.f32 %v234, 0.9998
      %v363 = vmul.f32 %v235, 0.9998
      %v364 = vmul.f32 %v236, 0.9998
      %v365 = vmul.f32 %v237, 0.9998
      %v366 = vmul.f32 %v238, 0.9998
      %v367 = vmul.f32 %v239, 0.9998
      %v368 = vmul.f32 %v240, 0.9998
      %v369 = vmul.f32 %v241, 0.9998
      %v370 = vmul.f32 %v242, 0.9998
      %v371 = vmul.f32 %v243, 0.9998
      %v372 = vmul.f32 %v244, 0.9998
      %v373 = vmul.f32 %v245, 0.9998
      %v374 = vmul.f32 %v246, 0.9998
      %v375 = vmul.f32 %v247, 0.9998
      %v376 = vmul.f32 %v248, 0.9998
      %v377 = vmul.f32 %v249, 0.9998
      %v378 = vmul.f32 %v250, 0.9998
      %v379 = vmul.f32 %v251, 0.9998
      %v380 = vmul.f32 %v252, 0.9998
      %v381 = vmul.f32 %v253, 0.9998
      %v382 = vmul.f32 %v254, 0.9998
      %v383 = vmul.f32 %v255, 0.9998
      %v384 = vmul.f32 %v256, 0.9998
      %v385 = vmul.f32 %v257, 0.9998
      %v386 = vmul.f32 %v258, 0.9998
      %v387 = vmul.f32 %v259, 0.9998
      %v388 = vmul.f32 %v260, 0.9998
      %v389 = vmul.f32 %v261, 0.9998
      %v390 = vmul.f32 %v262, 0.9998
      %v391 = vmul.f32 %v263, 0.9998
      %v392 = vmul.f32 %v264, 0.9998
      %v393 = vmul.f32 %v265, 0.9998
      %v394 = vmul.f32 %v266, 0.9998
      %v395 = vmul.f32 %v267, 0.9998
      %v396 = vmul.f32 %v268, 0.9998
      %v397 = vmul.f32 %v269, 0.9998
      %v398 = vmul.f32 %v270, 0.9998
      %v399 = vmul.f32 %v271, 0.9998
      %v400 = vmul.f32 %v272, 0.9998
      %v401 = vmul.f32 %v273, 0.9998
      %v402 = vmul.f32 %v274, 0.9998
      %v403 = vmul.f32 %v275, 0.9998
      %v404 = vmul.f32 %v276, 0.9998
      %v405 = vmul.f32 %v277, 0.9998
      %v406 = vmul.f32 %v278, 0.9998
      %v407 = vmul.f32 %v279, 0.9998
      %v408 = vmul.f32 %v280, 0.9998
      %v409 = vmul.f32 %v281, 0.9998
      %v410 = vmul.f32 %v282, 0.9998
      %v411 = vmul.f32 %v283, 0.9998
      %v412 = vmul.f32 %v284, 0.9998
      %v413 = vmul.f32 %v285, 0.9998
      %v414 = vmul.f32 %v286, 0.9998
      %v415 = vmul.f32 %v287, 0.9998
      %v416 = vmul.f32 %v288, 0.9998
      %v417 = vmul.f32 %v289, 0.9998
      %v418 = vmul.f32 %v290, 0.9998
      %v419 = vmul.f32 %v291, 0.9998
      %v420 = vmul.f32 %v292, 0.9998
      %v421 = vmul.f32 %v293, 0.9998
      %v422 = vmul.f32 %v294, 0.9998
      %v423 = vmul.f32 %v295, 0.9998
      %v424 = vmul.f32 %v296, 0.9998
      %v425 = vmul.f32 %v297, 0.9998
      %v426 = vmul.f32 %v298, 0.9998
      %v427 = vmul.f32 %v299, 0.9998
      %v428 = vmul.f32 %v300, 0.9998
      %v429 = vmul.f32 %v301, 0.9998
      %v430 = vadd.f32 %v302, 0.0001
      %v431 = vadd.f32 %v303, 0.0001
      %v432 = vadd.f32 %v304, 0.0001
      %v433 = vadd.f32 %v305, 0.0001
      %v434 = vadd.f32 %v306, 0.0001
      %v435 = vadd.f32 %v307, 0.0001
      %v436 = vadd.f32 %v308, 0.0001
      %v437 = vadd.f32 %v309, 0.0001
      %v438 = vadd.f32 %v310, 0.0001
      %v439 = vadd.f32 %v311, 0.0001
      %v440 = vadd.f32 %v312, 0.0001
      %v441 = vadd.f32 %v313, 0.0001
      %v442 = vadd.f32 %v314, 0.0001
      %v443 = vadd.f32 %v315, 0.0001
      %v444 = vadd.f32 %v316, 0.0001
      %v445 = vadd.f32 %v317, 0.0001
      %v446 = vadd.f32 %v318, 0.0001
      %v447 = vadd.f32 %v319, 0.0001
      %v448 = vadd.f32 %v320, 0.0001
      %v449 = vadd.f32 %v321, 0.0001
      %v450 = vadd.f32 %v322, 0.0001
      %v451 = vadd.f32 %v323, 0.0001
      %v452 = vadd.f32 %v324, 0.0001
      %v453 = vadd.f32 %v325, 0.0001
      %v454 = vadd.f32 %v326, 0.0001
      %v455 = vadd.f32 %v327, 0.0001
      %v456 = vadd.f32 %v328, 0.0001
      %v457 = vadd.f32 %v329, 0.0001
      %v458 = vadd.f32 %v330, 0.0001
      %v459 = vadd.f32 %v331, 0.0001
      %v460 = vadd.f32 %v332, 0.0001
      %v461 = vadd.f32 %v333, 0.0001
      %v462 = vadd.f32 %v334, 0.0001
      %v463 = vadd.f32 %v335, 0.0001
      %v464 = vadd.f32 %v336, 0.0001
      %v465 = vadd.f32 %v337, 0.0001
      %v466 = vadd.f32 %v338, 0.0001
      %v467 = vadd.f32 %v339, 0.0001
      %v468 = vadd.f32 %v340, 0.0001
      %v469 = vadd.f32 %v341, 0.0001
      %v470 = vadd.f32 %v342, 0.0001
      %v471 = vadd.f32 %v343, 0.0001
      %v472 = vadd.f32 %v344, 0.0001
      %v473 = vadd.f32 %v345, 0.0001
      %v474 = vadd.f32 %v346, 0.0001
      %v475 = vadd.f32 %v347, 0.0001
      %v476 = vadd.f32 %v348, 0.0001
      %v477 = vadd.f32 %v349, 0.0001
      %v478 = vadd.f32 %v350, 0.0001
      %v479 = vadd.f32 %v351, 0.0001
      %v480 = vadd.f32 %v352, 0.0001
      %v481 = vadd.f32 %v353, 0.0001
      %v482 = vadd.f32 %v354, 0.0001
      %v483 = vadd.f32 %v355, 0.0001
      %v484 = vadd.f32 %v356, 0.0001
      %v485 = vadd.f32 %v357, 0.0001
      %v486 = vadd.f32 %v358, 0.0001
      %v487 = vadd.f32 %v359, 0.0001
      %v488 = vadd.f32 %v360, 0.0001
      %v489 = vadd.f32 %v361, 0.0001
      %v490 = vadd.f32 %v362, 0.0001
      %v491 = vadd.f32 %v363, 0.0001
      %v492 = vadd.f32 %v364, 0.0001
      %v493 = vadd.f32 %v365, 0.0001
      %v494 = vadd.f32 %v366, 0.0001
      %v495 = vadd.f32 %v367, 0.0001
      %v496 = vadd.f32 %v368, 0.0001
      %v497 = vadd.f32 %v369, 0.0001
      %v498 = vadd.f32 %v370, 0.0001
      %v499 = vadd.f32 %v371, 0.0001
      %v500 = vadd.f32 %v372, 0.0001
      %v501 = vadd.f32 %v373, 0.0001
      %v502 = vadd.f32 %v374, 0.0001
      %v503 = vadd.f32 %v375, 0.0001
      %v504 = vadd.f32 %v376, 0.0001
      %v505 = vadd.f32 %v377, 0.0001
      %v506 = vadd.f32 %v378, 0.0001
      %v507 = vadd.f32 %v379, 0.0001
      %v508 = vadd.f32 %v380, 0.0001
      %v509 = vadd.f32 %v381, 0.0001
      %v510 = vadd.f32 %v382, 0.0001
      %v511 = vadd.f32 %v383, 0.0001
      %v512 = vadd.f32 %v384, 0.0001
      %v513 = vadd.f32 %v385, 0.0001
      %v514 = vadd.f32 %v386, 0.0001
      %v515 = vadd.f32 %v387, 0.0001
      %v516 = vadd.f32 %v388, 0.0001
      %v517 = vadd.f32 %v389, 0.0001
      %v518 = vadd.f32 %v390, 0.0001
      %v519 = vadd.f32 %v391, 0.0001
      %v520 = vadd.f32 %v392, 0.0001
      %v521 = vadd.f32 %v393, 0.0001
      %v522 = vadd.f32 %v394, 0.0001
      %v523 = vadd.f32 %v395, 0.0001
      %v524 = vadd.f32 %v396, 0.0001
      %v525 = vadd.f32 %v397, 0.0001
      %v526 = vadd.f32 %v398, 0.0001
      %v527 = vadd.f32 %v399, 0.0001
      %v528 = vadd.f32 %v400, 0.0001
      %v529 = vadd.f32 %v401, 0.0001
      %v530 = vadd.f32 %v402, 0.0001
      %v531 = vadd.f32 %v403, 0.0001
      %v532 = vadd.f32 %v404, 0.0001
      %v533 = vadd.f32 %v405, 0.0001
      %v534 = vadd.f32 %v406, 0.0001
      %v535 = vadd.f32 %v407, 0.0001
      %v536 = vadd.f32 %v408, 0.0001
      %v537 = vadd.f32 %v409, 0.0001
      %v538 = vadd.f32 %v410, 0.0001
      %v539 = vadd.f32 %v411, 0.0001
      %v540 = vadd.f32 %v412, 0.0001
      %v541 = vadd.f32 %v413, 0.0001
      %v542 = vadd.f32 %v414, 0.0001
      %v543 = vadd.f32 %v415, 0.0001
      %v544 = vadd.f32 %v416, 0.0001
      %v545 = vadd.f32 %v417, 0.0001
      %v546 = vadd.f32 %v418, 0.0001
      %v547 = vadd.f32 %v419, 0.0001
      %v548 = vadd.f32 %v420, 0.0001
      %v549 = vadd.f32 %v421, 0.0001
      %v550 = vadd.f32 %v422, 0.0001
      %v551 = vadd.f32 %v423, 0.0001
      %v552 = vadd.f32 %v424, 0.0001
      %v553 = vadd.f32 %v425, 0.0001
      %v554 = vadd.f32 %v426, 0.0001
      %v555 = vadd.f32 %v427, 0.0001
      %v556 = vadd.f32 %v428, 0.0001
      %v557 = vadd.f32 %v429, 0.0001
      %v558 = vlog2.pop %v430
      %v559 = vmul.f32 %v558, 0.6931472
      %v560 = vlog2.pop %v431
      %v561 = vmul.f32 %v560, 0.6931472
      %v562 = vlog2.pop %v432
      %v563 = vmul.f32 %v562, 0.6931472
      %v564 = vlog2.pop %v433
      %v565 = vmul.f32 %v564, 0.6931472
      %v566 = vlog2.pop %v434
      %v567 = vmul.f32 %v566, 0.6931472
      %v568 = vlog2.pop %v435
      %v569 = vmul.f32 %v568, 0.6931472
      %v570 = vlog2.pop %v436
      %v571 = vmul.f32 %v570, 0.6931472
      %v572 = vlog2.pop %v437
      %v573 = vmul.f32 %v572, 0.6931472
      %v574 = vlog2.pop %v438
      %v575 = vmul.f32 %v574, 0.6931472
      %v576 = vlog2.pop %v439
      %v577 = vmul.f32 %v576, 0.6931472
      %v578 = vlog2.pop %v440
      %v579 = vmul.f32 %v578, 0.6931472
      %v580 = vlog2.pop %v441
      %v581 = vmul.f32 %v580, 0.6931472
      %v582 = vlog2.pop %v442
      %v583 = vmul.f32 %v582, 0.6931472
      %v584 = vlog2.pop %v443
      %v585 = vmul.f32 %v584, 0.6931472
      %v586 = vlog2.pop %v444
      %v587 = vmul.f32 %v586, 0.6931472
      %v588 = vlog2.pop %v445
      %v589 = vmul.f32 %v588, 0.6931472
      %v590 = vlog2.pop %v446
      %v591 = vmul.f32 %v590, 0.6931472
      %v592 = vlog2.pop %v447
      %v593 = vmul.f32 %v592, 0.6931472
      %v594 = vlog2.pop %v448
      %v595 = vmul.f32 %v594, 0.6931472
      %v596 = vlog2.pop %v449
      %v597 = vmul.f32 %v596, 0.6931472
      %v598 = vlog2.pop %v450
      %v599 = vmul.f32 %v598, 0.6931472
      %v600 = vlog2.pop %v451
      %v601 = vmul.f32 %v600, 0.6931472
      %v602 = vlog2.pop %v452
      %v603 = vmul.f32 %v602, 0.6931472
      %v604 = vlog2.pop %v453
      %v605 = vmul.f32 %v604, 0.6931472
      %v606 = vlog2.pop %v454
      %v607 = vmul.f32 %v606, 0.6931472
      %v608 = vlog2.pop %v455
      %v609 = vmul.f32 %v608, 0.6931472
      %v610 = vlog2.pop %v456
      %v611 = vmul.f32 %v610, 0.6931472
      %v612 = vlog2.pop %v457
      %v613 = vmul.f32 %v612, 0.6931472
      %v614 = vlog2.pop %v458
      %v615 = vmul.f32 %v614, 0.6931472
      %v616 = vlog2.pop %v459
      %v617 = vmul.f32 %v616, 0.6931472
      %v618 = vlog2.pop %v460
      %v619 = vmul.f32 %v618, 0.6931472
      %v620 = vlog2.pop %v461
      %v621 = vmul.f32 %v620, 0.6931472
      %v622 = vlog2.pop %v462
      %v623 = vmul.f32 %v622, 0.6931472
      %v624 = vlog2.pop %v463
      %v625 = vmul.f32 %v624, 0.6931472
      %v626 = vlog2.pop %v464
      %v627 = vmul.f32 %v626, 0.6931472
      %v628 = vlog2.pop %v465
      %v629 = vmul.f32 %v628, 0.6931472
      %v630 = vlog2.pop %v466
      %v631 = vmul.f32 %v630, 0.6931472
      %v632 = vlog2.pop %v467
      %v633 = vmul.f32 %v632, 0.6931472
      %v634 = vlog2.pop %v468
      %v635 = vmul.f32 %v634, 0.6931472
      %v636 = vlog2.pop %v469
      %v637 = vmul.f32 %v636, 0.6931472
      %v638 = vlog2.pop %v470
      %v639 = vmul.f32 %v638, 0.6931472
      %v640 = vlog2.pop %v471
      %v641 = vmul.f32 %v640, 0.6931472
      %v642 = vlog2.pop %v472
      %v643 = vmul.f32 %v642, 0.6931472
      %v644 = vlog2.pop %v473
      %v645 = vmul.f32 %v644, 0.6931472
      %v646 = vlog2.pop %v474
      %v647 = vmul.f32 %v646, 0.6931472
      %v648 = vlog2.pop %v475
      %v649 = vmul.f32 %v648, 0.6931472
      %v650 = vlog2.pop %v476
      %v651 = vmul.f32 %v650, 0.6931472
      %v652 = vlog2.pop %v477
      %v653 = vmul.f32 %v652, 0.6931472
      %v654 = vlog2.pop %v478
      %v655 = vmul.f32 %v654, 0.6931472
      %v656 = vlog2.pop %v479
      %v657 = vmul.f32 %v656, 0.6931472
      %v658 = vlog2.pop %v480
      %v659 = vmul.f32 %v658, 0.6931472
      %v660 = vlog2.pop %v481
      %v661 = vmul.f32 %v660, 0.6931472
      %v662 = vlog2.pop %v482
      %v663 = vmul.f32 %v662, 0.6931472
      %v664 = vlog2.pop %v483
      %v665 = vmul.f32 %v664, 0.6931472
      %v666 = vlog2.pop %v484
      %v667 = vmul.f32 %v666, 0.6931472
      %v668 = vlog2.pop %v485
      %v669 = vmul.f32 %v668, 0.6931472
      %v670 = vlog2.pop %v486
      %v671 = vmul.f32 %v670, 0.6931472
      %v672 = vlog2.pop %v487
      %v673 = vmul.f32 %v672, 0.6931472
      %v674 = vlog2.pop %v488
      %v675 = vmul.f32 %v674, 0.6931472
      %v676 = vlog2.pop %v489
      %v677 = vmul.f32 %v676, 0.6931472
      %v678 = vlog2.pop %v490
      %v679 = vmul.f32 %v678, 0.6931472
      %v680 = vlog2.pop %v491
      %v681 = vmul.f32 %v680, 0.6931472
      %v682 = vlog2.pop %v492
      %v683 = vmul.f32 %v682, 0.6931472
      %v684 = vlog2.pop %v493
      %v685 = vmul.f32 %v684, 0.6931472
      %v686 = vlog2.pop %v494
      %v687 = vmul.f32 %v686, 0.6931472
      %v688 = vlog2.pop %v495
      %v689 = vmul.f32 %v688, 0.6931472
      %v690 = vlog2.pop %v496
      %v691 = vmul.f32 %v690, 0.6931472
      %v692 = vlog2.pop %v497
      %v693 = vmul.f32 %v692, 0.6931472
      %v694 = vlog2.pop %v498
      %v695 = vmul.f32 %v694, 0.6931472
      %v696 = vlog2.pop %v499
      %v697 = vmul.f32 %v696, 0.6931472
      %v698 = vlog2.pop %v500
      %v699 = vmul.f32 %v698, 0.6931472
      %v700 = vlog2.pop %v501
      %v701 = vmul.f32 %v700, 0.6931472
      %v702 = vlog2.pop %v502
      %v703 = vmul.f32 %v702, 0.6931472
      %v704 = vlog2.pop %v503
      %v705 = vmul.f32 %v704, 0.6931472
      %v706 = vlog2.pop %v504
      %v707 = vmul.f32 %v706, 0.6931472
      %v708 = vlog2.pop %v505
      %v709 = vmul.f32 %v708, 0.6931472
      %v710 = vlog2.pop %v506
      %v711 = vmul.f32 %v710, 0.6931472
      %v712 = vlog2.pop %v507
      %v713 = vmul.f32 %v712, 0.6931472
      %v714 = vlog2.pop %v508
      %v715 = vmul.f32 %v714, 0.6931472
      %v716 = vlog2.pop %v509
      %v717 = vmul.f32 %v716, 0.6931472
      %v718 = vlog2.pop %v510
      %v719 = vmul.f32 %v718, 0.6931472
      %v720 = vlog2.pop %v511
      %v721 = vmul.f32 %v720, 0.6931472
      %v722 = vlog2.pop %v512
      %v723 = vmul.f32 %v722, 0.6931472
      %v724 = vlog2.pop %v513
      %v725 = vmul.f32 %v724, 0.6931472
      %v726 = vlog2.pop %v514
      %v727 = vmul.f32 %v726, 0.6931472
      %v728 = vlog2.pop %v515
      %v729 = vmul.f32 %v728, 0.6931472
      %v730 = vlog2.pop %v516
      %v731 = vmul.f32 %v730, 0.6931472
      %v732 = vlog2.pop %v517
      %v733 = vmul.f32 %v732, 0.6931472
      %v734 = vlog2.pop %v518
      %v735 = vmul.f32 %v734, 0.6931472
      %v736 = vlog2.pop %v519
      %v737 = vmul.f32 %v736, 0.6931472
      %v738 = vlog2.pop %v520
      %v739 = vmul.f32 %v738, 0.6931472
      %v740 = vlog2.pop %v521
      %v741 = vmul.f32 %v740, 0.6931472
      %v742 = vlog2.pop %v522
      %v743 = vmul.f32 %v742, 0.6931472
      %v744 = vlog2.pop %v523
      %v745 = vmul.f32 %v744, 0.6931472
      %v746 = vlog2.pop %v524
      %v747 = vmul.f32 %v746, 0.6931472
      %v748 = vlog2.pop %v525
      %v749 = vmul.f32 %v748, 0.6931472
      %v750 = vlog2.pop %v526
      %v751 = vmul.f32 %v750, 0.6931472
      %v752 = vlog2.pop %v527
      %v753 = vmul.f32 %v752, 0.6931472
      %v754 = vlog2.pop %v528
      %v755 = vmul.f32 %v754, 0.6931472
      %v756 = vlog2.pop %v529
      %v757 = vmul.f32 %v756, 0.6931472
      %v758 = vlog2.pop %v530
      %v759 = vmul.f32 %v758, 0.6931472
      %v760 = vlog2.pop %v531
      %v761 = vmul.f32 %v760, 0.6931472
      %v762 = vlog2.pop %v532
      %v763 = vmul.f32 %v762, 0.6931472
      %v764 = vlog2.pop %v533
      %v765 = vmul.f32 %v764, 0.6931472
      %v766 = vlog2.pop %v534
      %v767 = vmul.f32 %v766, 0.6931472
      %v768 = vlog2.pop %v535
      %v769 = vmul.f32 %v768, 0.6931472
      %v770 = vlog2.pop %v536
      %v771 = vmul.f32 %v770, 0.6931472
      %v772 = vlog2.pop %v537
      %v773 = vmul.f32 %v772, 0.6931472
      %v774 = vlog2.pop %v538
      %v775 = vmul.f32 %v774, 0.6931472
      %v776 = vlog2.pop %v539
      %v777 = vmul.f32 %v776, 0.6931472
      %v778 = vlog2.pop %v540
      %v779 = vmul.f32 %v778, 0.6931472
      %v780 = vlog2.pop %v541
      %v781 = vmul.f32 %v780, 0.6931472
      %v782 = vlog2.pop %v542
      %v783 = vmul.f32 %v782, 0.6931472
      %v784 = vlog2.pop %v543
      %v785 = vmul.f32 %v784, 0.6931472
      %v786 = vlog2.pop %v544
      %v787 = vmul.f32 %v786, 0.6931472
      %v788 = vlog2.pop %v545
      %v789 = vmul.f32 %v788, 0.6931472
      %v790 = vlog2.pop %v546
      %v791 = vmul.f32 %v790, 0.6931472
      %v792 = vlog2.pop %v547
      %v793 = vmul.f32 %v792, 0.6931472
      %v794 = vlog2.pop %v548
      %v795 = vmul.f32 %v794, 0.6931472
      %v796 = vlog2.pop %v549
      %v797 = vmul.f32 %v796, 0.6931472
      %v798 = vlog2.pop %v550
      %v799 = vmul.f32 %v798, 0.6931472
      %v800 = vlog2.pop %v551
      %v801 = vmul.f32 %v800, 0.6931472
      %v802 = vlog2.pop %v552
      %v803 = vmul.f32 %v802, 0.6931472
      %v804 = vlog2.pop %v553
      %v805 = vmul.f32 %v804, 0.6931472
      %v806 = vlog2.pop %v554
      %v807 = vmul.f32 %v806, 0.6931472
      %v808 = vlog2.pop %v555
      %v809 = vmul.f32 %v808, 0.6931472
      %v810 = vlog2.pop %v556
      %v811 = vmul.f32 %v810, 0.6931472
      %v812 = vlog2.pop %v557
      %v813 = vmul.f32 %v812, 0.6931472
      %v814 = vsub.f32 0.0, %v430
      %v815 = vsub.f32 0.0, %v431
      %v816 = vsub.f32 0.0, %v432
      %v817 = vsub.f32 0.0, %v433
      %v818 = vsub.f32 0.0, %v434
      %v819 = vsub.f32 0.0, %v435
      %v820 = vsub.f32 0.0, %v436
      %v821 = vsub.f32 0.0, %v437
      %v822 = vsub.f32 0.0, %v438
      %v823 = vsub.f32 0.0, %v439
      %v824 = vsub.f32 0.0, %v440
      %v825 = vsub.f32 0.0, %v441
      %v826 = vsub.f32 0.0, %v442
      %v827 = vsub.f32 0.0, %v443
      %v828 = vsub.f32 0.0, %v444
      %v829 = vsub.f32 0.0, %v445
      %v830 = vsub.f32 0.0, %v446
      %v831 = vsub.f32 0.0, %v447
      %v832 = vsub.f32 0.0, %v448
      %v833 = vsub.f32 0.0, %v449
      %v834 = vsub.f32 0.0, %v450
      %v835 = vsub.f32 0.0, %v451
      %v836 = vsub.f32 0.0, %v452
      %v837 = vsub.f32 0.0, %v453
      %v838 = vsub.f32 0.0, %v454
      %v839 = vsub.f32 0.0, %v455
      %v840 = vsub.f32 0.0, %v456
      %v841 = vsub.f32 0.0, %v457
      %v842 = vsub.f32 0.0, %v458
      %v843 = vsub.f32 0.0, %v459
      %v844 = vsub.f32 0.0, %v460
      %v845 = vsub.f32 0.0, %v461
      %v846 = vsub.f32 0.0, %v462
      %v847 = vsub.f32 0.0, %v463
      %v848 = vsub.f32 0.0, %v464
      %v849 = vsub.f32 0.0, %v465
      %v850 = vsub.f32 0.0, %v466
      %v851 = vsub.f32 0.0, %v467
      %v852 = vsub.f32 0.0, %v468
      %v853 = vsub.f32 0.0, %v469
      %v854 = vsub.f32 0.0, %v470
      %v855 = vsub.f32 0.0, %v471
      %v856 = vsub.f32 0.0, %v472
      %v857 = vsub.f32 0.0, %v473
      %v858 = vsub.f32 0.0, %v474
      %v859 = vsub.f32 0.0, %v475
      %v860 = vsub.f32 0.0, %v476
      %v861 = vsub.f32 0.0, %v477
      %v862 = vsub.f32 0.0, %v478
      %v863 = vsub.f32 0.0, %v479
      %v864 = vsub.f32 0.0, %v480
      %v865 = vsub.f32 0.0, %v481
      %v866 = vsub.f32 0.0, %v482
      %v867 = vsub.f32 0.0, %v483
      %v868 = vsub.f32 0.0, %v484
      %v869 = vsub.f32 0.0, %v485
      %v870 = vsub.f32 0.0, %v486
      %v871 = vsub.f32 0.0, %v487
      %v872 = vsub.f32 0.0, %v488
      %v873 = vsub.f32 0.0, %v489
      %v874 = vsub.f32 0.0, %v490
      %v875 = vsub.f32 0.0, %v491
      %v876 = vsub.f32 0.0, %v492
      %v877 = vsub.f32 0.0, %v493
      %v878 = vsub.f32 0.0, %v494
      %v879 = vsub.f32 0.0, %v495
      %v880 = vsub.f32 0.0, %v496
      %v881 = vsub.f32 0.0, %v497
      %v882 = vsub.f32 0.0, %v498
      %v883 = vsub.f32 0.0, %v499
      %v884 = vsub.f32 0.0, %v500
      %v885 = vsub.f32 0.0, %v501
      %v886 = vsub.f32 0.0, %v502
      %v887 = vsub.f32 0.0, %v503
      %v888 = vsub.f32 0.0, %v504
      %v889 = vsub.f32 0.0, %v505
      %v890 = vsub.f32 0.0, %v506
      %v891 = vsub.f32 0.0, %v507
      %v892 = vsub.f32 0.0, %v508
      %v893 = vsub.f32 0.0, %v509
      %v894 = vsub.f32 0.0, %v510
      %v895 = vsub.f32 0.0, %v511
      %v896 = vsub.f32 0.0, %v512
      %v897 = vsub.f32 0.0, %v513
      %v898 = vsub.f32 0.0, %v514
      %v899 = vsub.f32 0.0, %v515
      %v900 = vsub.f32 0.0, %v516
      %v901 = vsub.f32 0.0, %v517
      %v902 = vsub.f32 0.0, %v518
      %v903 = vsub.f32 0.0, %v519
      %v904 = vsub.f32 0.0, %v520
      %v905 = vsub.f32 0.0, %v521
      %v906 = vsub.f32 0.0, %v522
      %v907 = vsub.f32 0.0, %v523
      %v908 = vsub.f32 0.0, %v524
      %v909 = vsub.f32 0.0, %v525
      %v910 = vsub.f32 0.0, %v526
      %v911 = vsub.f32 0.0, %v527
      %v912 = vsub.f32 0.0, %v528
      %v913 = vsub.f32 0.0, %v529
      %v914 = vsub.f32 0.0, %v530
      %v915 = vsub.f32 0.0, %v531
      %v916 = vsub.f32 0.0, %v532
      %v917 = vsub.f32 0.0, %v533
      %v918 = vsub.f32 0.0, %v534
      %v919 = vsub.f32 0.0, %v535
      %v920 = vsub.f32 0.0, %v536
      %v921 = vsub.f32 0.0, %v537
      %v922 = vsub.f32 0.0, %v538
      %v923 = vsub.f32 0.0, %v539
      %v924 = vsub.f32 0.0, %v540
      %v925 = vsub.f32 0.0, %v541
      %v926 = vsub.f32 0.0, %v542
      %v927 = vsub.f32 0.0, %v543
      %v928 = vsub.f32 0.0, %v544
      %v929 = vsub.f32 0.0, %v545
      %v930 = vsub.f32 0.0, %v546
      %v931 = vsub.f32 0.0, %v547
      %v932 = vsub.f32 0.0, %v548
      %v933 = vsub.f32 0.0, %v549
      %v934 = vsub.f32 0.0, %v550
      %v935 = vsub.f32 0.0, %v551
      %v936 = vsub.f32 0.0, %v552
      %v937 = vsub.f32 0.0, %v553
      %v938 = vsub.f32 0.0, %v554
      %v939 = vsub.f32 0.0, %v555
      %v940 = vsub.f32 0.0, %v556
      %v941 = vsub.f32 0.0, %v557
      %v942 = vadd.f32 %v814, 1.0
      %v943 = vlog2.pop %v942
      %v944 = vmul.f32 %v943, 0.6931472
      %v945 = vmul.f32 -0.5, %v814
      %v946 = vadd.f32 %v945, 1.0
      %v947 = vmul.f32 %v946, %v814
      %v948 = vand.u32 2147483647, %v814
      %vm949 = vcmp.lt.f32.partialorder %v948, 0.0004427343
      %v950 = vsel %vm949, %v947, %v944
      %v951 = vadd.f32 %v815, 1.0
      %v952 = vlog2.pop %v951
      %v953 = vmul.f32 %v952, 0.6931472
      %v954 = vmul.f32 -0.5, %v815
      %v955 = vadd.f32 %v954, 1.0
      %v956 = vmul.f32 %v955, %v815
      %v957 = vand.u32 2147483647, %v815
      %vm958 = vcmp.lt.f32.partialorder %v957, 0.0004427343
      %v959 = vsel %vm958, %v956, %v953
      %v960 = vadd.f32 %v816, 1.0
      %v961 = vlog2.pop %v960
      %v962 = vmul.f32 %v961, 0.6931472
      %v963 = vmul.f32 -0.5, %v816
      %v964 = vadd.f32 %v963, 1.0
      %v965 = vmul.f32 %v964, %v816
      %v966 = vand.u32 2147483647, %v816
      %vm967 = vcmp.lt.f32.partialorder %v966, 0.0004427343
      %v968 = vsel %vm967, %v965, %v962
      %v969 = vadd.f32 %v817, 1.0
      %v970 = vlog2.pop %v969
      %v971 = vmul.f32 %v970, 0.6931472
      %v972 = vmul.f32 -0.5, %v817
      %v973 = vadd.f32 %v972, 1.0
      %v974 = vmul.f32 %v973, %v817
      %v975 = vand.u32 2147483647, %v817
      %vm976 = vcmp.lt.f32.partialorder %v975, 0.0004427343
      %v977 = vsel %vm976, %v974, %v971
      %v978 = vadd.f32 %v818, 1.0
      %v979 = vlog2.pop %v978
      %v980 = vmul.f32 %v979, 0.6931472
      %v981 = vmul.f32 -0.5, %v818
      %v982 = vadd.f32 %v981, 1.0
      %v983 = vmul.f32 %v982, %v818
      %v984 = vand.u32 2147483647, %v818
      %vm985 = vcmp.lt.f32.partialorder %v984, 0.0004427343
      %v986 = vsel %vm985, %v983, %v980
      %v987 = vadd.f32 %v819, 1.0
      %v988 = vlog2.pop %v987
      %v989 = vmul.f32 %v988, 0.6931472
      %v990 = vmul.f32 -0.5, %v819
      %v991 = vadd.f32 %v990, 1.0
      %v992 = vmul.f32 %v991, %v819
      %v993 = vand.u32 2147483647, %v819
      %vm994 = vcmp.lt.f32.partialorder %v993, 0.0004427343
      %v995 = vsel %vm994, %v992, %v989
      %v996 = vadd.f32 %v820, 1.0
      %v997 = vlog2.pop %v996
      %v998 = vmul.f32 %v997, 0.6931472
      %v999 = vmul.f32 -0.5, %v820
      %v1000 = vadd.f32 %v999, 1.0
      %v1001 = vmul.f32 %v1000, %v820
      %v1002 = vand.u32 2147483647, %v820
      %vm1003 = vcmp.lt.f32.partialorder %v1002, 0.0004427343
      %v1004 = vsel %vm1003, %v1001, %v998
      %v1005 = vadd.f32 %v821, 1.0
      %v1006 = vlog2.pop %v1005
      %v1007 = vmul.f32 %v1006, 0.6931472
      %v1008 = vmul.f32 -0.5, %v821
      %v1009 = vadd.f32 %v1008, 1.0
      %v1010 = vmul.f32 %v1009, %v821
      %v1011 = vand.u32 2147483647, %v821
      %vm1012 = vcmp.lt.f32.partialorder %v1011, 0.0004427343
      %v1013 = vsel %vm1012, %v1010, %v1007
      %v1014 = vadd.f32 %v822, 1.0
      %v1015 = vlog2.pop %v1014
      %v1016 = vmul.f32 %v1015, 0.6931472
      %v1017 = vmul.f32 -0.5, %v822
      %v1018 = vadd.f32 %v1017, 1.0
      %v1019 = vmul.f32 %v1018, %v822
      %v1020 = vand.u32 2147483647, %v822
      %vm1021 = vcmp.lt.f32.partialorder %v1020, 0.0004427343
      %v1022 = vsel %vm1021, %v1019, %v1016
      %v1023 = vadd.f32 %v823, 1.0
      %v1024 = vlog2.pop %v1023
      %v1025 = vmul.f32 %v1024, 0.6931472
      %v1026 = vmul.f32 -0.5, %v823
      %v1027 = vadd.f32 %v1026, 1.0
      %v1028 = vmul.f32 %v1027, %v823
      %v1029 = vand.u32 2147483647, %v823
      %vm1030 = vcmp.lt.f32.partialorder %v1029, 0.0004427343
      %v1031 = vsel %vm1030, %v1028, %v1025
      %v1032 = vadd.f32 %v824, 1.0
      %v1033 = vlog2.pop %v1032
      %v1034 = vmul.f32 %v1033, 0.6931472
      %v1035 = vmul.f32 -0.5, %v824
      %v1036 = vadd.f32 %v1035, 1.0
      %v1037 = vmul.f32 %v1036, %v824
      %v1038 = vand.u32 2147483647, %v824
      %vm1039 = vcmp.lt.f32.partialorder %v1038, 0.0004427343
      %v1040 = vsel %vm1039, %v1037, %v1034
      %v1041 = vadd.f32 %v825, 1.0
      %v1042 = vlog2.pop %v1041
      %v1043 = vmul.f32 %v1042, 0.6931472
      %v1044 = vmul.f32 -0.5, %v825
      %v1045 = vadd.f32 %v1044, 1.0
      %v1046 = vmul.f32 %v1045, %v825
      %v1047 = vand.u32 2147483647, %v825
      %vm1048 = vcmp.lt.f32.partialorder %v1047, 0.0004427343
      %v1049 = vsel %vm1048, %v1046, %v1043
      %v1050 = vadd.f32 %v826, 1.0
      %v1051 = vlog2.pop %v1050
      %v1052 = vmul.f32 %v1051, 0.6931472
      %v1053 = vmul.f32 -0.5, %v826
      %v1054 = vadd.f32 %v1053, 1.0
      %v1055 = vmul.f32 %v1054, %v826
      %v1056 = vand.u32 2147483647, %v826
      %vm1057 = vcmp.lt.f32.partialorder %v1056, 0.0004427343
      %v1058 = vsel %vm1057, %v1055, %v1052
      %v1059 = vadd.f32 %v827, 1.0
      %v1060 = vlog2.pop %v1059
      %v1061 = vmul.f32 %v1060, 0.6931472
      %v1062 = vmul.f32 -0.5, %v827
      %v1063 = vadd.f32 %v1062, 1.0
      %v1064 = vmul.f32 %v1063, %v827
      %v1065 = vand.u32 2147483647, %v827
      %vm1066 = vcmp.lt.f32.partialorder %v1065, 0.0004427343
      %v1067 = vsel %vm1066, %v1064, %v1061
      %v1068 = vadd.f32 %v828, 1.0
      %v1069 = vlog2.pop %v1068
      %v1070 = vmul.f32 %v1069, 0.6931472
      %v1071 = vmul.f32 -0.5, %v828
      %v1072 = vadd.f32 %v1071, 1.0
      %v1073 = vmul.f32 %v1072, %v828
      %v1074 = vand.u32 2147483647, %v828
      %vm1075 = vcmp.lt.f32.partialorder %v1074, 0.0004427343
      %v1076 = vsel %vm1075, %v1073, %v1070
      %v1077 = vadd.f32 %v829, 1.0
      %v1078 = vlog2.pop %v1077
      %v1079 = vmul.f32 %v1078, 0.6931472
      %v1080 = vmul.f32 -0.5, %v829
      %v1081 = vadd.f32 %v1080, 1.0
      %v1082 = vmul.f32 %v1081, %v829
      %v1083 = vand.u32 2147483647, %v829
      %vm1084 = vcmp.lt.f32.partialorder %v1083, 0.0004427343
      %v1085 = vsel %vm1084, %v1082, %v1079
      %v1086 = vadd.f32 %v830, 1.0
      %v1087 = vlog2.pop %v1086
      %v1088 = vmul.f32 %v1087, 0.6931472
      %v1089 = vmul.f32 -0.5, %v830
      %v1090 = vadd.f32 %v1089, 1.0
      %v1091 = vmul.f32 %v1090, %v830
      %v1092 = vand.u32 2147483647, %v830
      %vm1093 = vcmp.lt.f32.partialorder %v1092, 0.0004427343
      %v1094 = vsel %vm1093, %v1091, %v1088
      %v1095 = vadd.f32 %v831, 1.0
      %v1096 = vlog2.pop %v1095
      %v1097 = vmul.f32 %v1096, 0.6931472
      %v1098 = vmul.f32 -0.5, %v831
      %v1099 = vadd.f32 %v1098, 1.0
      %v1100 = vmul.f32 %v1099, %v831
      %v1101 = vand.u32 2147483647, %v831
      %vm1102 = vcmp.lt.f32.partialorder %v1101, 0.0004427343
      %v1103 = vsel %vm1102, %v1100, %v1097
      %v1104 = vadd.f32 %v832, 1.0
      %v1105 = vlog2.pop %v1104
      %v1106 = vmul.f32 %v1105, 0.6931472
      %v1107 = vmul.f32 -0.5, %v832
      %v1108 = vadd.f32 %v1107, 1.0
      %v1109 = vmul.f32 %v1108, %v832
      %v1110 = vand.u32 2147483647, %v832
      %vm1111 = vcmp.lt.f32.partialorder %v1110, 0.0004427343
      %v1112 = vsel %vm1111, %v1109, %v1106
      %v1113 = vadd.f32 %v833, 1.0
      %v1114 = vlog2.pop %v1113
      %v1115 = vmul.f32 %v1114, 0.6931472
      %v1116 = vmul.f32 -0.5, %v833
      %v1117 = vadd.f32 %v1116, 1.0
      %v1118 = vmul.f32 %v1117, %v833
      %v1119 = vand.u32 2147483647, %v833
      %vm1120 = vcmp.lt.f32.partialorder %v1119, 0.0004427343
      %v1121 = vsel %vm1120, %v1118, %v1115
      %v1122 = vadd.f32 %v834, 1.0
      %v1123 = vlog2.pop %v1122
      %v1124 = vmul.f32 %v1123, 0.6931472
      %v1125 = vmul.f32 -0.5, %v834
      %v1126 = vadd.f32 %v1125, 1.0
      %v1127 = vmul.f32 %v1126, %v834
      %v1128 = vand.u32 2147483647, %v834
      %vm1129 = vcmp.lt.f32.partialorder %v1128, 0.0004427343
      %v1130 = vsel %vm1129, %v1127, %v1124
      %v1131 = vadd.f32 %v835, 1.0
      %v1132 = vlog2.pop %v1131
      %v1133 = vmul.f32 %v1132, 0.6931472
      %v1134 = vmul.f32 -0.5, %v835
      %v1135 = vadd.f32 %v1134, 1.0
      %v1136 = vmul.f32 %v1135, %v835
      %v1137 = vand.u32 2147483647, %v835
      %vm1138 = vcmp.lt.f32.partialorder %v1137, 0.0004427343
      %v1139 = vsel %vm1138, %v1136, %v1133
      %v1140 = vadd.f32 %v836, 1.0
      %v1141 = vlog2.pop %v1140
      %v1142 = vmul.f32 %v1141, 0.6931472
      %v1143 = vmul.f32 -0.5, %v836
      %v1144 = vadd.f32 %v1143, 1.0
      %v1145 = vmul.f32 %v1144, %v836
      %v1146 = vand.u32 2147483647, %v836
      %vm1147 = vcmp.lt.f32.partialorder %v1146, 0.0004427343
      %v1148 = vsel %vm1147, %v1145, %v1142
      %v1149 = vadd.f32 %v837, 1.0
      %v1150 = vlog2.pop %v1149
      %v1151 = vmul.f32 %v1150, 0.6931472
      %v1152 = vmul.f32 -0.5, %v837
      %v1153 = vadd.f32 %v1152, 1.0
      %v1154 = vmul.f32 %v1153, %v837
      %v1155 = vand.u32 2147483647, %v837
      %vm1156 = vcmp.lt.f32.partialorder %v1155, 0.0004427343
      %v1157 = vsel %vm1156, %v1154, %v1151
      %v1158 = vadd.f32 %v838, 1.0
      %v1159 = vlog2.pop %v1158
      %v1160 = vmul.f32 %v1159, 0.6931472
      %v1161 = vmul.f32 -0.5, %v838
      %v1162 = vadd.f32 %v1161, 1.0
      %v1163 = vmul.f32 %v1162, %v838
      %v1164 = vand.u32 2147483647, %v838
      %vm1165 = vcmp.lt.f32.partialorder %v1164, 0.0004427343
      %v1166 = vsel %vm1165, %v1163, %v1160
      %v1167 = vadd.f32 %v839, 1.0
      %v1168 = vlog2.pop %v1167
      %v1169 = vmul.f32 %v1168, 0.6931472
      %v1170 = vmul.f32 -0.5, %v839
      %v1171 = vadd.f32 %v1170, 1.0
      %v1172 = vmul.f32 %v1171, %v839
      %v1173 = vand.u32 2147483647, %v839
      %vm1174 = vcmp.lt.f32.partialorder %v1173, 0.0004427343
      %v1175 = vsel %vm1174, %v1172, %v1169
      %v1176 = vadd.f32 %v840, 1.0
      %v1177 = vlog2.pop %v1176
      %v1178 = vmul.f32 %v1177, 0.6931472
      %v1179 = vmul.f32 -0.5, %v840
      %v1180 = vadd.f32 %v1179, 1.0
      %v1181 = vmul.f32 %v1180, %v840
      %v1182 = vand.u32 2147483647, %v840
      %vm1183 = vcmp.lt.f32.partialorder %v1182, 0.0004427343
      %v1184 = vsel %vm1183, %v1181, %v1178
      %v1185 = vadd.f32 %v841, 1.0
      %v1186 = vlog2.pop %v1185
      %v1187 = vmul.f32 %v1186, 0.6931472
      %v1188 = vmul.f32 -0.5, %v841
      %v1189 = vadd.f32 %v1188, 1.0
      %v1190 = vmul.f32 %v1189, %v841
      %v1191 = vand.u32 2147483647, %v841
      %vm1192 = vcmp.lt.f32.partialorder %v1191, 0.0004427343
      %v1193 = vsel %vm1192, %v1190, %v1187
      %v1194 = vadd.f32 %v842, 1.0
      %v1195 = vlog2.pop %v1194
      %v1196 = vmul.f32 %v1195, 0.6931472
      %v1197 = vmul.f32 -0.5, %v842
      %v1198 = vadd.f32 %v1197, 1.0
      %v1199 = vmul.f32 %v1198, %v842
      %v1200 = vand.u32 2147483647, %v842
      %vm1201 = vcmp.lt.f32.partialorder %v1200, 0.0004427343
      %v1202 = vsel %vm1201, %v1199, %v1196
      %v1203 = vadd.f32 %v843, 1.0
      %v1204 = vlog2.pop %v1203
      %v1205 = vmul.f32 %v1204, 0.6931472
      %v1206 = vmul.f32 -0.5, %v843
      %v1207 = vadd.f32 %v1206, 1.0
      %v1208 = vmul.f32 %v1207, %v843
      %v1209 = vand.u32 2147483647, %v843
      %vm1210 = vcmp.lt.f32.partialorder %v1209, 0.0004427343
      %v1211 = vsel %vm1210, %v1208, %v1205
      %v1212 = vadd.f32 %v844, 1.0
      %v1213 = vlog2.pop %v1212
      %v1214 = vmul.f32 %v1213, 0.6931472
      %v1215 = vmul.f32 -0.5, %v844
      %v1216 = vadd.f32 %v1215, 1.0
      %v1217 = vmul.f32 %v1216, %v844
      %v1218 = vand.u32 2147483647, %v844
      %vm1219 = vcmp.lt.f32.partialorder %v1218, 0.0004427343
      %v1220 = vsel %vm1219, %v1217, %v1214
      %v1221 = vadd.f32 %v845, 1.0
      %v1222 = vlog2.pop %v1221
      %v1223 = vmul.f32 %v1222, 0.6931472
      %v1224 = vmul.f32 -0.5, %v845
      %v1225 = vadd.f32 %v1224, 1.0
      %v1226 = vmul.f32 %v1225, %v845
      %v1227 = vand.u32 2147483647, %v845
      %vm1228 = vcmp.lt.f32.partialorder %v1227, 0.0004427343
      %v1229 = vsel %vm1228, %v1226, %v1223
      %v1230 = vadd.f32 %v846, 1.0
      %v1231 = vlog2.pop %v1230
      %v1232 = vmul.f32 %v1231, 0.6931472
      %v1233 = vmul.f32 -0.5, %v846
      %v1234 = vadd.f32 %v1233, 1.0
      %v1235 = vmul.f32 %v1234, %v846
      %v1236 = vand.u32 2147483647, %v846
      %vm1237 = vcmp.lt.f32.partialorder %v1236, 0.0004427343
      %v1238 = vsel %vm1237, %v1235, %v1232
      %v1239 = vadd.f32 %v847, 1.0
      %v1240 = vlog2.pop %v1239
      %v1241 = vmul.f32 %v1240, 0.6931472
      %v1242 = vmul.f32 -0.5, %v847
      %v1243 = vadd.f32 %v1242, 1.0
      %v1244 = vmul.f32 %v1243, %v847
      %v1245 = vand.u32 2147483647, %v847
      %vm1246 = vcmp.lt.f32.partialorder %v1245, 0.0004427343
      %v1247 = vsel %vm1246, %v1244, %v1241
      %v1248 = vadd.f32 %v848, 1.0
      %v1249 = vlog2.pop %v1248
      %v1250 = vmul.f32 %v1249, 0.6931472
      %v1251 = vmul.f32 -0.5, %v848
      %v1252 = vadd.f32 %v1251, 1.0
      %v1253 = vmul.f32 %v1252, %v848
      %v1254 = vand.u32 2147483647, %v848
      %vm1255 = vcmp.lt.f32.partialorder %v1254, 0.0004427343
      %v1256 = vsel %vm1255, %v1253, %v1250
      %v1257 = vadd.f32 %v849, 1.0
      %v1258 = vlog2.pop %v1257
      %v1259 = vmul.f32 %v1258, 0.6931472
      %v1260 = vmul.f32 -0.5, %v849
      %v1261 = vadd.f32 %v1260, 1.0
      %v1262 = vmul.f32 %v1261, %v849
      %v1263 = vand.u32 2147483647, %v849
      %vm1264 = vcmp.lt.f32.partialorder %v1263, 0.0004427343
      %v1265 = vsel %vm1264, %v1262, %v1259
      %v1266 = vadd.f32 %v850, 1.0
      %v1267 = vlog2.pop %v1266
      %v1268 = vmul.f32 %v1267, 0.6931472
      %v1269 = vmul.f32 -0.5, %v850
      %v1270 = vadd.f32 %v1269, 1.0
      %v1271 = vmul.f32 %v1270, %v850
      %v1272 = vand.u32 2147483647, %v850
      %vm1273 = vcmp.lt.f32.partialorder %v1272, 0.0004427343
      %v1274 = vsel %vm1273, %v1271, %v1268
      %v1275 = vadd.f32 %v851, 1.0
      %v1276 = vlog2.pop %v1275
      %v1277 = vmul.f32 %v1276, 0.6931472
      %v1278 = vmul.f32 -0.5, %v851
      %v1279 = vadd.f32 %v1278, 1.0
      %v1280 = vmul.f32 %v1279, %v851
      %v1281 = vand.u32 2147483647, %v851
      %vm1282 = vcmp.lt.f32.partialorder %v1281, 0.0004427343
      %v1283 = vsel %vm1282, %v1280, %v1277
      %v1284 = vadd.f32 %v852, 1.0
      %v1285 = vlog2.pop %v1284
      %v1286 = vmul.f32 %v1285, 0.6931472
      %v1287 = vmul.f32 -0.5, %v852
      %v1288 = vadd.f32 %v1287, 1.0
      %v1289 = vmul.f32 %v1288, %v852
      %v1290 = vand.u32 2147483647, %v852
      %vm1291 = vcmp.lt.f32.partialorder %v1290, 0.0004427343
      %v1292 = vsel %vm1291, %v1289, %v1286
      %v1293 = vadd.f32 %v853, 1.0
      %v1294 = vlog2.pop %v1293
      %v1295 = vmul.f32 %v1294, 0.6931472
      %v1296 = vmul.f32 -0.5, %v853
      %v1297 = vadd.f32 %v1296, 1.0
      %v1298 = vmul.f32 %v1297, %v853
      %v1299 = vand.u32 2147483647, %v853
      %vm1300 = vcmp.lt.f32.partialorder %v1299, 0.0004427343
      %v1301 = vsel %vm1300, %v1298, %v1295
      %v1302 = vadd.f32 %v854, 1.0
      %v1303 = vlog2.pop %v1302
      %v1304 = vmul.f32 %v1303, 0.6931472
      %v1305 = vmul.f32 -0.5, %v854
      %v1306 = vadd.f32 %v1305, 1.0
      %v1307 = vmul.f32 %v1306, %v854
      %v1308 = vand.u32 2147483647, %v854
      %vm1309 = vcmp.lt.f32.partialorder %v1308, 0.0004427343
      %v1310 = vsel %vm1309, %v1307, %v1304
      %v1311 = vadd.f32 %v855, 1.0
      %v1312 = vlog2.pop %v1311
      %v1313 = vmul.f32 %v1312, 0.6931472
      %v1314 = vmul.f32 -0.5, %v855
      %v1315 = vadd.f32 %v1314, 1.0
      %v1316 = vmul.f32 %v1315, %v855
      %v1317 = vand.u32 2147483647, %v855
      %vm1318 = vcmp.lt.f32.partialorder %v1317, 0.0004427343
      %v1319 = vsel %vm1318, %v1316, %v1313
      %v1320 = vadd.f32 %v856, 1.0
      %v1321 = vlog2.pop %v1320
      %v1322 = vmul.f32 %v1321, 0.6931472
      %v1323 = vmul.f32 -0.5, %v856
      %v1324 = vadd.f32 %v1323, 1.0
      %v1325 = vmul.f32 %v1324, %v856
      %v1326 = vand.u32 2147483647, %v856
      %vm1327 = vcmp.lt.f32.partialorder %v1326, 0.0004427343
      %v1328 = vsel %vm1327, %v1325, %v1322
      %v1329 = vadd.f32 %v857, 1.0
      %v1330 = vlog2.pop %v1329
      %v1331 = vmul.f32 %v1330, 0.6931472
      %v1332 = vmul.f32 -0.5, %v857
      %v1333 = vadd.f32 %v1332, 1.0
      %v1334 = vmul.f32 %v1333, %v857
      %v1335 = vand.u32 2147483647, %v857
      %vm1336 = vcmp.lt.f32.partialorder %v1335, 0.0004427343
      %v1337 = vsel %vm1336, %v1334, %v1331
      %v1338 = vadd.f32 %v858, 1.0
      %v1339 = vlog2.pop %v1338
      %v1340 = vmul.f32 %v1339, 0.6931472
      %v1341 = vmul.f32 -0.5, %v858
      %v1342 = vadd.f32 %v1341, 1.0
      %v1343 = vmul.f32 %v1342, %v858
      %v1344 = vand.u32 2147483647, %v858
      %vm1345 = vcmp.lt.f32.partialorder %v1344, 0.0004427343
      %v1346 = vsel %vm1345, %v1343, %v1340
      %v1347 = vadd.f32 %v859, 1.0
      %v1348 = vlog2.pop %v1347
      %v1349 = vmul.f32 %v1348, 0.6931472
      %v1350 = vmul.f32 -0.5, %v859
      %v1351 = vadd.f32 %v1350, 1.0
      %v1352 = vmul.f32 %v1351, %v859
      %v1353 = vand.u32 2147483647, %v859
      %vm1354 = vcmp.lt.f32.partialorder %v1353, 0.0004427343
      %v1355 = vsel %vm1354, %v1352, %v1349
      %v1356 = vadd.f32 %v860, 1.0
      %v1357 = vlog2.pop %v1356
      %v1358 = vmul.f32 %v1357, 0.6931472
      %v1359 = vmul.f32 -0.5, %v860
      %v1360 = vadd.f32 %v1359, 1.0
      %v1361 = vmul.f32 %v1360, %v860
      %v1362 = vand.u32 2147483647, %v860
      %vm1363 = vcmp.lt.f32.partialorder %v1362, 0.0004427343
      %v1364 = vsel %vm1363, %v1361, %v1358
      %v1365 = vadd.f32 %v861, 1.0
      %v1366 = vlog2.pop %v1365
      %v1367 = vmul.f32 %v1366, 0.6931472
      %v1368 = vmul.f32 -0.5, %v861
      %v1369 = vadd.f32 %v1368, 1.0
      %v1370 = vmul.f32 %v1369, %v861
      %v1371 = vand.u32 2147483647, %v861
      %vm1372 = vcmp.lt.f32.partialorder %v1371, 0.0004427343
      %v1373 = vsel %vm1372, %v1370, %v1367
      %v1374 = vadd.f32 %v862, 1.0
      %v1375 = vlog2.pop %v1374
      %v1376 = vmul.f32 %v1375, 0.6931472
      %v1377 = vmul.f32 -0.5, %v862
      %v1378 = vadd.f32 %v1377, 1.0
      %v1379 = vmul.f32 %v1378, %v862
      %v1380 = vand.u32 2147483647, %v862
      %vm1381 = vcmp.lt.f32.partialorder %v1380, 0.0004427343
      %v1382 = vsel %vm1381, %v1379, %v1376
      %v1383 = vadd.f32 %v863, 1.0
      %v1384 = vlog2.pop %v1383
      %v1385 = vmul.f32 %v1384, 0.6931472
      %v1386 = vmul.f32 -0.5, %v863
      %v1387 = vadd.f32 %v1386, 1.0
      %v1388 = vmul.f32 %v1387, %v863
      %v1389 = vand.u32 2147483647, %v863
      %vm1390 = vcmp.lt.f32.partialorder %v1389, 0.0004427343
      %v1391 = vsel %vm1390, %v1388, %v1385
      %v1392 = vadd.f32 %v864, 1.0
      %v1393 = vlog2.pop %v1392
      %v1394 = vmul.f32 %v1393, 0.6931472
      %v1395 = vmul.f32 -0.5, %v864
      %v1396 = vadd.f32 %v1395, 1.0
      %v1397 = vmul.f32 %v1396, %v864
      %v1398 = vand.u32 2147483647, %v864
      %vm1399 = vcmp.lt.f32.partialorder %v1398, 0.0004427343
      %v1400 = vsel %vm1399, %v1397, %v1394
      %v1401 = vadd.f32 %v865, 1.0
      %v1402 = vlog2.pop %v1401
      %v1403 = vmul.f32 %v1402, 0.6931472
      %v1404 = vmul.f32 -0.5, %v865
      %v1405 = vadd.f32 %v1404, 1.0
      %v1406 = vmul.f32 %v1405, %v865
      %v1407 = vand.u32 2147483647, %v865
      %vm1408 = vcmp.lt.f32.partialorder %v1407, 0.0004427343
      %v1409 = vsel %vm1408, %v1406, %v1403
      %v1410 = vadd.f32 %v866, 1.0
      %v1411 = vlog2.pop %v1410
      %v1412 = vmul.f32 %v1411, 0.6931472
      %v1413 = vmul.f32 -0.5, %v866
      %v1414 = vadd.f32 %v1413, 1.0
      %v1415 = vmul.f32 %v1414, %v866
      %v1416 = vand.u32 2147483647, %v866
      %vm1417 = vcmp.lt.f32.partialorder %v1416, 0.0004427343
      %v1418 = vsel %vm1417, %v1415, %v1412
      %v1419 = vadd.f32 %v867, 1.0
      %v1420 = vlog2.pop %v1419
      %v1421 = vmul.f32 %v1420, 0.6931472
      %v1422 = vmul.f32 -0.5, %v867
      %v1423 = vadd.f32 %v1422, 1.0
      %v1424 = vmul.f32 %v1423, %v867
      %v1425 = vand.u32 2147483647, %v867
      %vm1426 = vcmp.lt.f32.partialorder %v1425, 0.0004427343
      %v1427 = vsel %vm1426, %v1424, %v1421
      %v1428 = vadd.f32 %v868, 1.0
      %v1429 = vlog2.pop %v1428
      %v1430 = vmul.f32 %v1429, 0.6931472
      %v1431 = vmul.f32 -0.5, %v868
      %v1432 = vadd.f32 %v1431, 1.0
      %v1433 = vmul.f32 %v1432, %v868
      %v1434 = vand.u32 2147483647, %v868
      %vm1435 = vcmp.lt.f32.partialorder %v1434, 0.0004427343
      %v1436 = vsel %vm1435, %v1433, %v1430
      %v1437 = vadd.f32 %v869, 1.0
      %v1438 = vlog2.pop %v1437
      %v1439 = vmul.f32 %v1438, 0.6931472
      %v1440 = vmul.f32 -0.5, %v869
      %v1441 = vadd.f32 %v1440, 1.0
      %v1442 = vmul.f32 %v1441, %v869
      %v1443 = vand.u32 2147483647, %v869
      %vm1444 = vcmp.lt.f32.partialorder %v1443, 0.0004427343
      %v1445 = vsel %vm1444, %v1442, %v1439
      %v1446 = vadd.f32 %v870, 1.0
      %v1447 = vlog2.pop %v1446
      %v1448 = vmul.f32 %v1447, 0.6931472
      %v1449 = vmul.f32 -0.5, %v870
      %v1450 = vadd.f32 %v1449, 1.0
      %v1451 = vmul.f32 %v1450, %v870
      %v1452 = vand.u32 2147483647, %v870
      %vm1453 = vcmp.lt.f32.partialorder %v1452, 0.0004427343
      %v1454 = vsel %vm1453, %v1451, %v1448
      %v1455 = vadd.f32 %v871, 1.0
      %v1456 = vlog2.pop %v1455
      %v1457 = vmul.f32 %v1456, 0.6931472
      %v1458 = vmul.f32 -0.5, %v871
      %v1459 = vadd.f32 %v1458, 1.0
      %v1460 = vmul.f32 %v1459, %v871
      %v1461 = vand.u32 2147483647, %v871
      %vm1462 = vcmp.lt.f32.partialorder %v1461, 0.0004427343
      %v1463 = vsel %vm1462, %v1460, %v1457
      %v1464 = vadd.f32 %v872, 1.0
      %v1465 = vlog2.pop %v1464
      %v1466 = vmul.f32 %v1465, 0.6931472
      %v1467 = vmul.f32 -0.5, %v872
      %v1468 = vadd.f32 %v1467, 1.0
      %v1469 = vmul.f32 %v1468, %v872
      %v1470 = vand.u32 2147483647, %v872
      %vm1471 = vcmp.lt.f32.partialorder %v1470, 0.0004427343
      %v1472 = vsel %vm1471, %v1469, %v1466
      %v1473 = vadd.f32 %v873, 1.0
      %v1474 = vlog2.pop %v1473
      %v1475 = vmul.f32 %v1474, 0.6931472
      %v1476 = vmul.f32 -0.5, %v873
      %v1477 = vadd.f32 %v1476, 1.0
      %v1478 = vmul.f32 %v1477, %v873
      %v1479 = vand.u32 2147483647, %v873
      %vm1480 = vcmp.lt.f32.partialorder %v1479, 0.0004427343
      %v1481 = vsel %vm1480, %v1478, %v1475
      %v1482 = vadd.f32 %v874, 1.0
      %v1483 = vlog2.pop %v1482
      %v1484 = vmul.f32 %v1483, 0.6931472
      %v1485 = vmul.f32 -0.5, %v874
      %v1486 = vadd.f32 %v1485, 1.0
      %v1487 = vmul.f32 %v1486, %v874
      %v1488 = vand.u32 2147483647, %v874
      %vm1489 = vcmp.lt.f32.partialorder %v1488, 0.0004427343
      %v1490 = vsel %vm1489, %v1487, %v1484
      %v1491 = vadd.f32 %v875, 1.0
      %v1492 = vlog2.pop %v1491
      %v1493 = vmul.f32 %v1492, 0.6931472
      %v1494 = vmul.f32 -0.5, %v875
      %v1495 = vadd.f32 %v1494, 1.0
      %v1496 = vmul.f32 %v1495, %v875
      %v1497 = vand.u32 2147483647, %v875
      %vm1498 = vcmp.lt.f32.partialorder %v1497, 0.0004427343
      %v1499 = vsel %vm1498, %v1496, %v1493
      %v1500 = vadd.f32 %v876, 1.0
      %v1501 = vlog2.pop %v1500
      %v1502 = vmul.f32 %v1501, 0.6931472
      %v1503 = vmul.f32 -0.5, %v876
      %v1504 = vadd.f32 %v1503, 1.0
      %v1505 = vmul.f32 %v1504, %v876
      %v1506 = vand.u32 2147483647, %v876
      %vm1507 = vcmp.lt.f32.partialorder %v1506, 0.0004427343
      %v1508 = vsel %vm1507, %v1505, %v1502
      %v1509 = vadd.f32 %v877, 1.0
      %v1510 = vlog2.pop %v1509
      %v1511 = vmul.f32 %v1510, 0.6931472
      %v1512 = vmul.f32 -0.5, %v877
      %v1513 = vadd.f32 %v1512, 1.0
      %v1514 = vmul.f32 %v1513, %v877
      %v1515 = vand.u32 2147483647, %v877
      %vm1516 = vcmp.lt.f32.partialorder %v1515, 0.0004427343
      %v1517 = vsel %vm1516, %v1514, %v1511
      %v1518 = vadd.f32 %v878, 1.0
      %v1519 = vlog2.pop %v1518
      %v1520 = vmul.f32 %v1519, 0.6931472
      %v1521 = vmul.f32 -0.5, %v878
      %v1522 = vadd.f32 %v1521, 1.0
      %v1523 = vmul.f32 %v1522, %v878
      %v1524 = vand.u32 2147483647, %v878
      %vm1525 = vcmp.lt.f32.partialorder %v1524, 0.0004427343
      %v1526 = vsel %vm1525, %v1523, %v1520
      %v1527 = vadd.f32 %v879, 1.0
      %v1528 = vlog2.pop %v1527
      %v1529 = vmul.f32 %v1528, 0.6931472
      %v1530 = vmul.f32 -0.5, %v879
      %v1531 = vadd.f32 %v1530, 1.0
      %v1532 = vmul.f32 %v1531, %v879
      %v1533 = vand.u32 2147483647, %v879
      %vm1534 = vcmp.lt.f32.partialorder %v1533, 0.0004427343
      %v1535 = vsel %vm1534, %v1532, %v1529
      %v1536 = vadd.f32 %v880, 1.0
      %v1537 = vlog2.pop %v1536
      %v1538 = vmul.f32 %v1537, 0.6931472
      %v1539 = vmul.f32 -0.5, %v880
      %v1540 = vadd.f32 %v1539, 1.0
      %v1541 = vmul.f32 %v1540, %v880
      %v1542 = vand.u32 2147483647, %v880
      %vm1543 = vcmp.lt.f32.partialorder %v1542, 0.0004427343
      %v1544 = vsel %vm1543, %v1541, %v1538
      %v1545 = vadd.f32 %v881, 1.0
      %v1546 = vlog2.pop %v1545
      %v1547 = vmul.f32 %v1546, 0.6931472
      %v1548 = vmul.f32 -0.5, %v881
      %v1549 = vadd.f32 %v1548, 1.0
      %v1550 = vmul.f32 %v1549, %v881
      %v1551 = vand.u32 2147483647, %v881
      %vm1552 = vcmp.lt.f32.partialorder %v1551, 0.0004427343
      %v1553 = vsel %vm1552, %v1550, %v1547
      %v1554 = vadd.f32 %v882, 1.0
      %v1555 = vlog2.pop %v1554
      %v1556 = vmul.f32 %v1555, 0.6931472
      %v1557 = vmul.f32 -0.5, %v882
      %v1558 = vadd.f32 %v1557, 1.0
      %v1559 = vmul.f32 %v1558, %v882
      %v1560 = vand.u32 2147483647, %v882
      %vm1561 = vcmp.lt.f32.partialorder %v1560, 0.0004427343
      %v1562 = vsel %vm1561, %v1559, %v1556
      %v1563 = vadd.f32 %v883, 1.0
      %v1564 = vlog2.pop %v1563
      %v1565 = vmul.f32 %v1564, 0.6931472
      %v1566 = vmul.f32 -0.5, %v883
      %v1567 = vadd.f32 %v1566, 1.0
      %v1568 = vmul.f32 %v1567, %v883
      %v1569 = vand.u32 2147483647, %v883
      %vm1570 = vcmp.lt.f32.partialorder %v1569, 0.0004427343
      %v1571 = vsel %vm1570, %v1568, %v1565
      %v1572 = vadd.f32 %v884, 1.0
      %v1573 = vlog2.pop %v1572
      %v1574 = vmul.f32 %v1573, 0.6931472
      %v1575 = vmul.f32 -0.5, %v884
      %v1576 = vadd.f32 %v1575, 1.0
      %v1577 = vmul.f32 %v1576, %v884
      %v1578 = vand.u32 2147483647, %v884
      %vm1579 = vcmp.lt.f32.partialorder %v1578, 0.0004427343
      %v1580 = vsel %vm1579, %v1577, %v1574
      %v1581 = vadd.f32 %v885, 1.0
      %v1582 = vlog2.pop %v1581
      %v1583 = vmul.f32 %v1582, 0.6931472
      %v1584 = vmul.f32 -0.5, %v885
      %v1585 = vadd.f32 %v1584, 1.0
      %v1586 = vmul.f32 %v1585, %v885
      %v1587 = vand.u32 2147483647, %v885
      %vm1588 = vcmp.lt.f32.partialorder %v1587, 0.0004427343
      %v1589 = vsel %vm1588, %v1586, %v1583
      %v1590 = vadd.f32 %v886, 1.0
      %v1591 = vlog2.pop %v1590
      %v1592 = vmul.f32 %v1591, 0.6931472
      %v1593 = vmul.f32 -0.5, %v886
      %v1594 = vadd.f32 %v1593, 1.0
      %v1595 = vmul.f32 %v1594, %v886
      %v1596 = vand.u32 2147483647, %v886
      %vm1597 = vcmp.lt.f32.partialorder %v1596, 0.0004427343
      %v1598 = vsel %vm1597, %v1595, %v1592
      %v1599 = vadd.f32 %v887, 1.0
      %v1600 = vlog2.pop %v1599
      %v1601 = vmul.f32 %v1600, 0.6931472
      %v1602 = vmul.f32 -0.5, %v887
      %v1603 = vadd.f32 %v1602, 1.0
      %v1604 = vmul.f32 %v1603, %v887
      %v1605 = vand.u32 2147483647, %v887
      %vm1606 = vcmp.lt.f32.partialorder %v1605, 0.0004427343
      %v1607 = vsel %vm1606, %v1604, %v1601
      %v1608 = vadd.f32 %v888, 1.0
      %v1609 = vlog2.pop %v1608
      %v1610 = vmul.f32 %v1609, 0.6931472
      %v1611 = vmul.f32 -0.5, %v888
      %v1612 = vadd.f32 %v1611, 1.0
      %v1613 = vmul.f32 %v1612, %v888
      %v1614 = vand.u32 2147483647, %v888
      %vm1615 = vcmp.lt.f32.partialorder %v1614, 0.0004427343
      %v1616 = vsel %vm1615, %v1613, %v1610
      %v1617 = vadd.f32 %v889, 1.0
      %v1618 = vlog2.pop %v1617
      %v1619 = vmul.f32 %v1618, 0.6931472
      %v1620 = vmul.f32 -0.5, %v889
      %v1621 = vadd.f32 %v1620, 1.0
      %v1622 = vmul.f32 %v1621, %v889
      %v1623 = vand.u32 2147483647, %v889
      %vm1624 = vcmp.lt.f32.partialorder %v1623, 0.0004427343
      %v1625 = vsel %vm1624, %v1622, %v1619
      %v1626 = vadd.f32 %v890, 1.0
      %v1627 = vlog2.pop %v1626
      %v1628 = vmul.f32 %v1627, 0.6931472
      %v1629 = vmul.f32 -0.5, %v890
      %v1630 = vadd.f32 %v1629, 1.0
      %v1631 = vmul.f32 %v1630, %v890
      %v1632 = vand.u32 2147483647, %v890
      %vm1633 = vcmp.lt.f32.partialorder %v1632, 0.0004427343
      %v1634 = vsel %vm1633, %v1631, %v1628
      %v1635 = vadd.f32 %v891, 1.0
      %v1636 = vlog2.pop %v1635
      %v1637 = vmul.f32 %v1636, 0.6931472
      %v1638 = vmul.f32 -0.5, %v891
      %v1639 = vadd.f32 %v1638, 1.0
      %v1640 = vmul.f32 %v1639, %v891
      %v1641 = vand.u32 2147483647, %v891
      %vm1642 = vcmp.lt.f32.partialorder %v1641, 0.0004427343
      %v1643 = vsel %vm1642, %v1640, %v1637
      %v1644 = vadd.f32 %v892, 1.0
      %v1645 = vlog2.pop %v1644
      %v1646 = vmul.f32 %v1645, 0.6931472
      %v1647 = vmul.f32 -0.5, %v892
      %v1648 = vadd.f32 %v1647, 1.0
      %v1649 = vmul.f32 %v1648, %v892
      %v1650 = vand.u32 2147483647, %v892
      %vm1651 = vcmp.lt.f32.partialorder %v1650, 0.0004427343
      %v1652 = vsel %vm1651, %v1649, %v1646
      %v1653 = vadd.f32 %v893, 1.0
      %v1654 = vlog2.pop %v1653
      %v1655 = vmul.f32 %v1654, 0.6931472
      %v1656 = vmul.f32 -0.5, %v893
      %v1657 = vadd.f32 %v1656, 1.0
      %v1658 = vmul.f32 %v1657, %v893
      %v1659 = vand.u32 2147483647, %v893
      %vm1660 = vcmp.lt.f32.partialorder %v1659, 0.0004427343
      %v1661 = vsel %vm1660, %v1658, %v1655
      %v1662 = vadd.f32 %v894, 1.0
      %v1663 = vlog2.pop %v1662
      %v1664 = vmul.f32 %v1663, 0.6931472
      %v1665 = vmul.f32 -0.5, %v894
      %v1666 = vadd.f32 %v1665, 1.0
      %v1667 = vmul.f32 %v1666, %v894
      %v1668 = vand.u32 2147483647, %v894
      %vm1669 = vcmp.lt.f32.partialorder %v1668, 0.0004427343
      %v1670 = vsel %vm1669, %v1667, %v1664
      %v1671 = vadd.f32 %v895, 1.0
      %v1672 = vlog2.pop %v1671
      %v1673 = vmul.f32 %v1672, 0.6931472
      %v1674 = vmul.f32 -0.5, %v895
      %v1675 = vadd.f32 %v1674, 1.0
      %v1676 = vmul.f32 %v1675, %v895
      %v1677 = vand.u32 2147483647, %v895
      %vm1678 = vcmp.lt.f32.partialorder %v1677, 0.0004427343
      %v1679 = vsel %vm1678, %v1676, %v1673
      %v1680 = vadd.f32 %v896, 1.0
      %v1681 = vlog2.pop %v1680
      %v1682 = vmul.f32 %v1681, 0.6931472
      %v1683 = vmul.f32 -0.5, %v896
      %v1684 = vadd.f32 %v1683, 1.0
      %v1685 = vmul.f32 %v1684, %v896
      %v1686 = vand.u32 2147483647, %v896
      %vm1687 = vcmp.lt.f32.partialorder %v1686, 0.0004427343
      %v1688 = vsel %vm1687, %v1685, %v1682
      %v1689 = vadd.f32 %v897, 1.0
      %v1690 = vlog2.pop %v1689
      %v1691 = vmul.f32 %v1690, 0.6931472
      %v1692 = vmul.f32 -0.5, %v897
      %v1693 = vadd.f32 %v1692, 1.0
      %v1694 = vmul.f32 %v1693, %v897
      %v1695 = vand.u32 2147483647, %v897
      %vm1696 = vcmp.lt.f32.partialorder %v1695, 0.0004427343
      %v1697 = vsel %vm1696, %v1694, %v1691
      %v1698 = vadd.f32 %v898, 1.0
      %v1699 = vlog2.pop %v1698
      %v1700 = vmul.f32 %v1699, 0.6931472
      %v1701 = vmul.f32 -0.5, %v898
      %v1702 = vadd.f32 %v1701, 1.0
      %v1703 = vmul.f32 %v1702, %v898
      %v1704 = vand.u32 2147483647, %v898
      %vm1705 = vcmp.lt.f32.partialorder %v1704, 0.0004427343
      %v1706 = vsel %vm1705, %v1703, %v1700
      %v1707 = vadd.f32 %v899, 1.0
      %v1708 = vlog2.pop %v1707
      %v1709 = vmul.f32 %v1708, 0.6931472
      %v1710 = vmul.f32 -0.5, %v899
      %v1711 = vadd.f32 %v1710, 1.0
      %v1712 = vmul.f32 %v1711, %v899
      %v1713 = vand.u32 2147483647, %v899
      %vm1714 = vcmp.lt.f32.partialorder %v1713, 0.0004427343
      %v1715 = vsel %vm1714, %v1712, %v1709
      %v1716 = vadd.f32 %v900, 1.0
      %v1717 = vlog2.pop %v1716
      %v1718 = vmul.f32 %v1717, 0.6931472
      %v1719 = vmul.f32 -0.5, %v900
      %v1720 = vadd.f32 %v1719, 1.0
      %v1721 = vmul.f32 %v1720, %v900
      %v1722 = vand.u32 2147483647, %v900
      %vm1723 = vcmp.lt.f32.partialorder %v1722, 0.0004427343
      %v1724 = vsel %vm1723, %v1721, %v1718
      %v1725 = vadd.f32 %v901, 1.0
      %v1726 = vlog2.pop %v1725
      %v1727 = vmul.f32 %v1726, 0.6931472
      %v1728 = vmul.f32 -0.5, %v901
      %v1729 = vadd.f32 %v1728, 1.0
      %v1730 = vmul.f32 %v1729, %v901
      %v1731 = vand.u32 2147483647, %v901
      %vm1732 = vcmp.lt.f32.partialorder %v1731, 0.0004427343
      %v1733 = vsel %vm1732, %v1730, %v1727
      %v1734 = vadd.f32 %v902, 1.0
      %v1735 = vlog2.pop %v1734
      %v1736 = vmul.f32 %v1735, 0.6931472
      %v1737 = vmul.f32 -0.5, %v902
      %v1738 = vadd.f32 %v1737, 1.0
      %v1739 = vmul.f32 %v1738, %v902
      %v1740 = vand.u32 2147483647, %v902
      %vm1741 = vcmp.lt.f32.partialorder %v1740, 0.0004427343
      %v1742 = vsel %vm1741, %v1739, %v1736
      %v1743 = vadd.f32 %v903, 1.0
      %v1744 = vlog2.pop %v1743
      %v1745 = vmul.f32 %v1744, 0.6931472
      %v1746 = vmul.f32 -0.5, %v903
      %v1747 = vadd.f32 %v1746, 1.0
      %v1748 = vmul.f32 %v1747, %v903
      %v1749 = vand.u32 2147483647, %v903
      %vm1750 = vcmp.lt.f32.partialorder %v1749, 0.0004427343
      %v1751 = vsel %vm1750, %v1748, %v1745
      %v1752 = vadd.f32 %v904, 1.0
      %v1753 = vlog2.pop %v1752
      %v1754 = vmul.f32 %v1753, 0.6931472
      %v1755 = vmul.f32 -0.5, %v904
      %v1756 = vadd.f32 %v1755, 1.0
      %v1757 = vmul.f32 %v1756, %v904
      %v1758 = vand.u32 2147483647, %v904
      %vm1759 = vcmp.lt.f32.partialorder %v1758, 0.0004427343
      %v1760 = vsel %vm1759, %v1757, %v1754
      %v1761 = vadd.f32 %v905, 1.0
      %v1762 = vlog2.pop %v1761
      %v1763 = vmul.f32 %v1762, 0.6931472
      %v1764 = vmul.f32 -0.5, %v905
      %v1765 = vadd.f32 %v1764, 1.0
      %v1766 = vmul.f32 %v1765, %v905
      %v1767 = vand.u32 2147483647, %v905
      %vm1768 = vcmp.lt.f32.partialorder %v1767, 0.0004427343
      %v1769 = vsel %vm1768, %v1766, %v1763
      %v1770 = vadd.f32 %v906, 1.0
      %v1771 = vlog2.pop %v1770
      %v1772 = vmul.f32 %v1771, 0.6931472
      %v1773 = vmul.f32 -0.5, %v906
      %v1774 = vadd.f32 %v1773, 1.0
      %v1775 = vmul.f32 %v1774, %v906
      %v1776 = vand.u32 2147483647, %v906
      %vm1777 = vcmp.lt.f32.partialorder %v1776, 0.0004427343
      %v1778 = vsel %vm1777, %v1775, %v1772
      %v1779 = vadd.f32 %v907, 1.0
      %v1780 = vlog2.pop %v1779
      %v1781 = vmul.f32 %v1780, 0.6931472
      %v1782 = vmul.f32 -0.5, %v907
      %v1783 = vadd.f32 %v1782, 1.0
      %v1784 = vmul.f32 %v1783, %v907
      %v1785 = vand.u32 2147483647, %v907
      %vm1786 = vcmp.lt.f32.partialorder %v1785, 0.0004427343
      %v1787 = vsel %vm1786, %v1784, %v1781
      %v1788 = vadd.f32 %v908, 1.0
      %v1789 = vlog2.pop %v1788
      %v1790 = vmul.f32 %v1789, 0.6931472
      %v1791 = vmul.f32 -0.5, %v908
      %v1792 = vadd.f32 %v1791, 1.0
      %v1793 = vmul.f32 %v1792, %v908
      %v1794 = vand.u32 2147483647, %v908
      %vm1795 = vcmp.lt.f32.partialorder %v1794, 0.0004427343
      %v1796 = vsel %vm1795, %v1793, %v1790
      %v1797 = vadd.f32 %v909, 1.0
      %v1798 = vlog2.pop %v1797
      %v1799 = vmul.f32 %v1798, 0.6931472
      %v1800 = vmul.f32 -0.5, %v909
      %v1801 = vadd.f32 %v1800, 1.0
      %v1802 = vmul.f32 %v1801, %v909
      %v1803 = vand.u32 2147483647, %v909
      %vm1804 = vcmp.lt.f32.partialorder %v1803, 0.0004427343
      %v1805 = vsel %vm1804, %v1802, %v1799
      %v1806 = vadd.f32 %v910, 1.0
      %v1807 = vlog2.pop %v1806
      %v1808 = vmul.f32 %v1807, 0.6931472
      %v1809 = vmul.f32 -0.5, %v910
      %v1810 = vadd.f32 %v1809, 1.0
      %v1811 = vmul.f32 %v1810, %v910
      %v1812 = vand.u32 2147483647, %v910
      %vm1813 = vcmp.lt.f32.partialorder %v1812, 0.0004427343
      %v1814 = vsel %vm1813, %v1811, %v1808
      %v1815 = vadd.f32 %v911, 1.0
      %v1816 = vlog2.pop %v1815
      %v1817 = vmul.f32 %v1816, 0.6931472
      %v1818 = vmul.f32 -0.5, %v911
      %v1819 = vadd.f32 %v1818, 1.0
      %v1820 = vmul.f32 %v1819, %v911
      %v1821 = vand.u32 2147483647, %v911
      %vm1822 = vcmp.lt.f32.partialorder %v1821, 0.0004427343
      %v1823 = vsel %vm1822, %v1820, %v1817
      %v1824 = vadd.f32 %v912, 1.0
      %v1825 = vlog2.pop %v1824
      %v1826 = vmul.f32 %v1825, 0.6931472
      %v1827 = vmul.f32 -0.5, %v912
      %v1828 = vadd.f32 %v1827, 1.0
      %v1829 = vmul.f32 %v1828, %v912
      %v1830 = vand.u32 2147483647, %v912
      %vm1831 = vcmp.lt.f32.partialorder %v1830, 0.0004427343
      %v1832 = vsel %vm1831, %v1829, %v1826
      %v1833 = vadd.f32 %v913, 1.0
      %v1834 = vlog2.pop %v1833
      %v1835 = vmul.f32 %v1834, 0.6931472
      %v1836 = vmul.f32 -0.5, %v913
      %v1837 = vadd.f32 %v1836, 1.0
      %v1838 = vmul.f32 %v1837, %v913
      %v1839 = vand.u32 2147483647, %v913
      %vm1840 = vcmp.lt.f32.partialorder %v1839, 0.0004427343
      %v1841 = vsel %vm1840, %v1838, %v1835
      %v1842 = vadd.f32 %v914, 1.0
      %v1843 = vlog2.pop %v1842
      %v1844 = vmul.f32 %v1843, 0.6931472
      %v1845 = vmul.f32 -0.5, %v914
      %v1846 = vadd.f32 %v1845, 1.0
      %v1847 = vmul.f32 %v1846, %v914
      %v1848 = vand.u32 2147483647, %v914
      %vm1849 = vcmp.lt.f32.partialorder %v1848, 0.0004427343
      %v1850 = vsel %vm1849, %v1847, %v1844
      %v1851 = vadd.f32 %v915, 1.0
      %v1852 = vlog2.pop %v1851
      %v1853 = vmul.f32 %v1852, 0.6931472
      %v1854 = vmul.f32 -0.5, %v915
      %v1855 = vadd.f32 %v1854, 1.0
      %v1856 = vmul.f32 %v1855, %v915
      %v1857 = vand.u32 2147483647, %v915
      %vm1858 = vcmp.lt.f32.partialorder %v1857, 0.0004427343
      %v1859 = vsel %vm1858, %v1856, %v1853
      %v1860 = vadd.f32 %v916, 1.0
      %v1861 = vlog2.pop %v1860
      %v1862 = vmul.f32 %v1861, 0.6931472
      %v1863 = vmul.f32 -0.5, %v916
      %v1864 = vadd.f32 %v1863, 1.0
      %v1865 = vmul.f32 %v1864, %v916
      %v1866 = vand.u32 2147483647, %v916
      %vm1867 = vcmp.lt.f32.partialorder %v1866, 0.0004427343
      %v1868 = vsel %vm1867, %v1865, %v1862
      %v1869 = vadd.f32 %v917, 1.0
      %v1870 = vlog2.pop %v1869
      %v1871 = vmul.f32 %v1870, 0.6931472
      %v1872 = vmul.f32 -0.5, %v917
      %v1873 = vadd.f32 %v1872, 1.0
      %v1874 = vmul.f32 %v1873, %v917
      %v1875 = vand.u32 2147483647, %v917
      %vm1876 = vcmp.lt.f32.partialorder %v1875, 0.0004427343
      %v1877 = vsel %vm1876, %v1874, %v1871
      %v1878 = vadd.f32 %v918, 1.0
      %v1879 = vlog2.pop %v1878
      %v1880 = vmul.f32 %v1879, 0.6931472
      %v1881 = vmul.f32 -0.5, %v918
      %v1882 = vadd.f32 %v1881, 1.0
      %v1883 = vmul.f32 %v1882, %v918
      %v1884 = vand.u32 2147483647, %v918
      %vm1885 = vcmp.lt.f32.partialorder %v1884, 0.0004427343
      %v1886 = vsel %vm1885, %v1883, %v1880
      %v1887 = vadd.f32 %v919, 1.0
      %v1888 = vlog2.pop %v1887
      %v1889 = vmul.f32 %v1888, 0.6931472
      %v1890 = vmul.f32 -0.5, %v919
      %v1891 = vadd.f32 %v1890, 1.0
      %v1892 = vmul.f32 %v1891, %v919
      %v1893 = vand.u32 2147483647, %v919
      %vm1894 = vcmp.lt.f32.partialorder %v1893, 0.0004427343
      %v1895 = vsel %vm1894, %v1892, %v1889
      %v1896 = vadd.f32 %v920, 1.0
      %v1897 = vlog2.pop %v1896
      %v1898 = vmul.f32 %v1897, 0.6931472
      %v1899 = vmul.f32 -0.5, %v920
      %v1900 = vadd.f32 %v1899, 1.0
      %v1901 = vmul.f32 %v1900, %v920
      %v1902 = vand.u32 2147483647, %v920
      %vm1903 = vcmp.lt.f32.partialorder %v1902, 0.0004427343
      %v1904 = vsel %vm1903, %v1901, %v1898
      %v1905 = vadd.f32 %v921, 1.0
      %v1906 = vlog2.pop %v1905
      %v1907 = vmul.f32 %v1906, 0.6931472
      %v1908 = vmul.f32 -0.5, %v921
      %v1909 = vadd.f32 %v1908, 1.0
      %v1910 = vmul.f32 %v1909, %v921
      %v1911 = vand.u32 2147483647, %v921
      %vm1912 = vcmp.lt.f32.partialorder %v1911, 0.0004427343
      %v1913 = vsel %vm1912, %v1910, %v1907
      %v1914 = vadd.f32 %v922, 1.0
      %v1915 = vlog2.pop %v1914
      %v1916 = vmul.f32 %v1915, 0.6931472
      %v1917 = vmul.f32 -0.5, %v922
      %v1918 = vadd.f32 %v1917, 1.0
      %v1919 = vmul.f32 %v1918, %v922
      %v1920 = vand.u32 2147483647, %v922
      %vm1921 = vcmp.lt.f32.partialorder %v1920, 0.0004427343
      %v1922 = vsel %vm1921, %v1919, %v1916
      %v1923 = vadd.f32 %v923, 1.0
      %v1924 = vlog2.pop %v1923
      %v1925 = vmul.f32 %v1924, 0.6931472
      %v1926 = vmul.f32 -0.5, %v923
      %v1927 = vadd.f32 %v1926, 1.0
      %v1928 = vmul.f32 %v1927, %v923
      %v1929 = vand.u32 2147483647, %v923
      %vm1930 = vcmp.lt.f32.partialorder %v1929, 0.0004427343
      %v1931 = vsel %vm1930, %v1928, %v1925
      %v1932 = vadd.f32 %v924, 1.0
      %v1933 = vlog2.pop %v1932
      %v1934 = vmul.f32 %v1933, 0.6931472
      %v1935 = vmul.f32 -0.5, %v924
      %v1936 = vadd.f32 %v1935, 1.0
      %v1937 = vmul.f32 %v1936, %v924
      %v1938 = vand.u32 2147483647, %v924
      %vm1939 = vcmp.lt.f32.partialorder %v1938, 0.0004427343
      %v1940 = vsel %vm1939, %v1937, %v1934
      %v1941 = vadd.f32 %v925, 1.0
      %v1942 = vlog2.pop %v1941
      %v1943 = vmul.f32 %v1942, 0.6931472
      %v1944 = vmul.f32 -0.5, %v925
      %v1945 = vadd.f32 %v1944, 1.0
      %v1946 = vmul.f32 %v1945, %v925
      %v1947 = vand.u32 2147483647, %v925
      %vm1948 = vcmp.lt.f32.partialorder %v1947, 0.0004427343
      %v1949 = vsel %vm1948, %v1946, %v1943
      %v1950 = vadd.f32 %v926, 1.0
      %v1951 = vlog2.pop %v1950
      %v1952 = vmul.f32 %v1951, 0.6931472
      %v1953 = vmul.f32 -0.5, %v926
      %v1954 = vadd.f32 %v1953, 1.0
      %v1955 = vmul.f32 %v1954, %v926
      %v1956 = vand.u32 2147483647, %v926
      %vm1957 = vcmp.lt.f32.partialorder %v1956, 0.0004427343
      %v1958 = vsel %vm1957, %v1955, %v1952
      %v1959 = vadd.f32 %v927, 1.0
      %v1960 = vlog2.pop %v1959
      %v1961 = vmul.f32 %v1960, 0.6931472
      %v1962 = vmul.f32 -0.5, %v927
      %v1963 = vadd.f32 %v1962, 1.0
      %v1964 = vmul.f32 %v1963, %v927
      %v1965 = vand.u32 2147483647, %v927
      %vm1966 = vcmp.lt.f32.partialorder %v1965, 0.0004427343
      %v1967 = vsel %vm1966, %v1964, %v1961
      %v1968 = vadd.f32 %v928, 1.0
      %v1969 = vlog2.pop %v1968
      %v1970 = vmul.f32 %v1969, 0.6931472
      %v1971 = vmul.f32 -0.5, %v928
      %v1972 = vadd.f32 %v1971, 1.0
      %v1973 = vmul.f32 %v1972, %v928
      %v1974 = vand.u32 2147483647, %v928
      %vm1975 = vcmp.lt.f32.partialorder %v1974, 0.0004427343
      %v1976 = vsel %vm1975, %v1973, %v1970
      %v1977 = vadd.f32 %v929, 1.0
      %v1978 = vlog2.pop %v1977
      %v1979 = vmul.f32 %v1978, 0.6931472
      %v1980 = vmul.f32 -0.5, %v929
      %v1981 = vadd.f32 %v1980, 1.0
      %v1982 = vmul.f32 %v1981, %v929
      %v1983 = vand.u32 2147483647, %v929
      %vm1984 = vcmp.lt.f32.partialorder %v1983, 0.0004427343
      %v1985 = vsel %vm1984, %v1982, %v1979
      %v1986 = vadd.f32 %v930, 1.0
      %v1987 = vlog2.pop %v1986
      %v1988 = vmul.f32 %v1987, 0.6931472
      %v1989 = vmul.f32 -0.5, %v930
      %v1990 = vadd.f32 %v1989, 1.0
      %v1991 = vmul.f32 %v1990, %v930
      %v1992 = vand.u32 2147483647, %v930
      %vm1993 = vcmp.lt.f32.partialorder %v1992, 0.0004427343
      %v1994 = vsel %vm1993, %v1991, %v1988
      %v1995 = vadd.f32 %v931, 1.0
      %v1996 = vlog2.pop %v1995
      %v1997 = vmul.f32 %v1996, 0.6931472
      %v1998 = vmul.f32 -0.5, %v931
      %v1999 = vadd.f32 %v1998, 1.0
      %v2000 = vmul.f32 %v1999, %v931
      %v2001 = vand.u32 2147483647, %v931
      %vm2002 = vcmp.lt.f32.partialorder %v2001, 0.0004427343
      %v2003 = vsel %vm2002, %v2000, %v1997
      %v2004 = vadd.f32 %v932, 1.0
      %v2005 = vlog2.pop %v2004
      %v2006 = vmul.f32 %v2005, 0.6931472
      %v2007 = vmul.f32 -0.5, %v932
      %v2008 = vadd.f32 %v2007, 1.0
      %v2009 = vmul.f32 %v2008, %v932
      %v2010 = vand.u32 2147483647, %v932
      %vm2011 = vcmp.lt.f32.partialorder %v2010, 0.0004427343
      %v2012 = vsel %vm2011, %v2009, %v2006
      %v2013 = vadd.f32 %v933, 1.0
      %v2014 = vlog2.pop %v2013
      %v2015 = vmul.f32 %v2014, 0.6931472
      %v2016 = vmul.f32 -0.5, %v933
      %v2017 = vadd.f32 %v2016, 1.0
      %v2018 = vmul.f32 %v2017, %v933
      %v2019 = vand.u32 2147483647, %v933
      %vm2020 = vcmp.lt.f32.partialorder %v2019, 0.0004427343
      %v2021 = vsel %vm2020, %v2018, %v2015
      %v2022 = vadd.f32 %v934, 1.0
      %v2023 = vlog2.pop %v2022
      %v2024 = vmul.f32 %v2023, 0.6931472
      %v2025 = vmul.f32 -0.5, %v934
      %v2026 = vadd.f32 %v2025, 1.0
      %v2027 = vmul.f32 %v2026, %v934
      %v2028 = vand.u32 2147483647, %v934
      %vm2029 = vcmp.lt.f32.partialorder %v2028, 0.0004427343
      %v2030 = vsel %vm2029, %v2027, %v2024
      %v2031 = vadd.f32 %v935, 1.0
      %v2032 = vlog2.pop %v2031
      %v2033 = vmul.f32 %v2032, 0.6931472
      %v2034 = vmul.f32 -0.5, %v935
      %v2035 = vadd.f32 %v2034, 1.0
      %v2036 = vmul.f32 %v2035, %v935
      %v2037 = vand.u32 2147483647, %v935
      %vm2038 = vcmp.lt.f32.partialorder %v2037, 0.0004427343
      %v2039 = vsel %vm2038, %v2036, %v2033
      %v2040 = vadd.f32 %v936, 1.0
      %v2041 = vlog2.pop %v2040
      %v2042 = vmul.f32 %v2041, 0.6931472
      %v2043 = vmul.f32 -0.5, %v936
      %v2044 = vadd.f32 %v2043, 1.0
      %v2045 = vmul.f32 %v2044, %v936
      %v2046 = vand.u32 2147483647, %v936
      %vm2047 = vcmp.lt.f32.partialorder %v2046, 0.0004427343
      %v2048 = vsel %vm2047, %v2045, %v2042
      %v2049 = vadd.f32 %v937, 1.0
      %v2050 = vlog2.pop %v2049
      %v2051 = vmul.f32 %v2050, 0.6931472
      %v2052 = vmul.f32 -0.5, %v937
      %v2053 = vadd.f32 %v2052, 1.0
      %v2054 = vmul.f32 %v2053, %v937
      %v2055 = vand.u32 2147483647, %v937
      %vm2056 = vcmp.lt.f32.partialorder %v2055, 0.0004427343
      %v2057 = vsel %vm2056, %v2054, %v2051
      %v2058 = vadd.f32 %v938, 1.0
      %v2059 = vlog2.pop %v2058
      %v2060 = vmul.f32 %v2059, 0.6931472
      %v2061 = vmul.f32 -0.5, %v938
      %v2062 = vadd.f32 %v2061, 1.0
      %v2063 = vmul.f32 %v2062, %v938
      %v2064 = vand.u32 2147483647, %v938
      %vm2065 = vcmp.lt.f32.partialorder %v2064, 0.0004427343
      %v2066 = vsel %vm2065, %v2063, %v2060
      %v2067 = vadd.f32 %v939, 1.0
      %v2068 = vlog2.pop %v2067
      %v2069 = vmul.f32 %v2068, 0.6931472
      %v2070 = vmul.f32 -0.5, %v939
      %v2071 = vadd.f32 %v2070, 1.0
      %v2072 = vmul.f32 %v2071, %v939
      %v2073 = vand.u32 2147483647, %v939
      %vm2074 = vcmp.lt.f32.partialorder %v2073, 0.0004427343
      %v2075 = vsel %vm2074, %v2072, %v2069
      %v2076 = vadd.f32 %v940, 1.0
      %v2077 = vlog2.pop %v2076
      %v2078 = vmul.f32 %v2077, 0.6931472
      %v2079 = vmul.f32 -0.5, %v940
      %v2080 = vadd.f32 %v2079, 1.0
      %v2081 = vmul.f32 %v2080, %v940
      %v2082 = vand.u32 2147483647, %v940
      %vm2083 = vcmp.lt.f32.partialorder %v2082, 0.0004427343
      %v2084 = vsel %vm2083, %v2081, %v2078
      %v2085 = vadd.f32 %v941, 1.0
      %v2086 = vlog2.pop %v2085
      %v2087 = vmul.f32 %v2086, 0.6931472
      %v2088 = vmul.f32 -0.5, %v941
      %v2089 = vadd.f32 %v2088, 1.0
      %v2090 = vmul.f32 %v2089, %v941
      %v2091 = vand.u32 2147483647, %v941
      %vm2092 = vcmp.lt.f32.partialorder %v2091, 0.0004427343
      %v2093 = vsel %vm2092, %v2090, %v2087
      %v2094 = vsub.f32 %v559, %v950
      %v2095 = vsub.f32 %v561, %v959
      %v2096 = vsub.f32 %v563, %v968
      %v2097 = vsub.f32 %v565, %v977
      %v2098 = vsub.f32 %v567, %v986
      %v2099 = vsub.f32 %v569, %v995
      %v2100 = vsub.f32 %v571, %v1004
      %v2101 = vsub.f32 %v573, %v1013
      %v2102 = vsub.f32 %v575, %v1022
      %v2103 = vsub.f32 %v577, %v1031
      %v2104 = vsub.f32 %v579, %v1040
      %v2105 = vsub.f32 %v581, %v1049
      %v2106 = vsub.f32 %v583, %v1058
      %v2107 = vsub.f32 %v585, %v1067
      %v2108 = vsub.f32 %v587, %v1076
      %v2109 = vsub.f32 %v589, %v1085
      %v2110 = vsub.f32 %v591, %v1094
      %v2111 = vsub.f32 %v593, %v1103
      %v2112 = vsub.f32 %v595, %v1112
      %v2113 = vsub.f32 %v597, %v1121
      %v2114 = vsub.f32 %v599, %v1130
      %v2115 = vsub.f32 %v601, %v1139
      %v2116 = vsub.f32 %v603, %v1148
      %v2117 = vsub.f32 %v605, %v1157
      %v2118 = vsub.f32 %v607, %v1166
      %v2119 = vsub.f32 %v609, %v1175
      %v2120 = vsub.f32 %v611, %v1184
      %v2121 = vsub.f32 %v613, %v1193
      %v2122 = vsub.f32 %v615, %v1202
      %v2123 = vsub.f32 %v617, %v1211
      %v2124 = vsub.f32 %v619, %v1220
      %v2125 = vsub.f32 %v621, %v1229
      %v2126 = vsub.f32 %v623, %v1238
      %v2127 = vsub.f32 %v625, %v1247
      %v2128 = vsub.f32 %v627, %v1256
      %v2129 = vsub.f32 %v629, %v1265
      %v2130 = vsub.f32 %v631, %v1274
      %v2131 = vsub.f32 %v633, %v1283
      %v2132 = vsub.f32 %v635, %v1292
      %v2133 = vsub.f32 %v637, %v1301
      %v2134 = vsub.f32 %v639, %v1310
      %v2135 = vsub.f32 %v641, %v1319
      %v2136 = vsub.f32 %v643, %v1328
      %v2137 = vsub.f32 %v645, %v1337
      %v2138 = vsub.f32 %v647, %v1346
      %v2139 = vsub.f32 %v649, %v1355
      %v2140 = vsub.f32 %v651, %v1364
      %v2141 = vsub.f32 %v653, %v1373
      %v2142 = vsub.f32 %v655, %v1382
      %v2143 = vsub.f32 %v657, %v1391
      %v2144 = vsub.f32 %v659, %v1400
      %v2145 = vsub.f32 %v661, %v1409
      %v2146 = vsub.f32 %v663, %v1418
      %v2147 = vsub.f32 %v665, %v1427
      %v2148 = vsub.f32 %v667, %v1436
      %v2149 = vsub.f32 %v669, %v1445
      %v2150 = vsub.f32 %v671, %v1454
      %v2151 = vsub.f32 %v673, %v1463
      %v2152 = vsub.f32 %v675, %v1472
      %v2153 = vsub.f32 %v677, %v1481
      %v2154 = vsub.f32 %v679, %v1490
      %v2155 = vsub.f32 %v681, %v1499
      %v2156 = vsub.f32 %v683, %v1508
      %v2157 = vsub.f32 %v685, %v1517
      %v2158 = vsub.f32 %v687, %v1526
      %v2159 = vsub.f32 %v689, %v1535
      %v2160 = vsub.f32 %v691, %v1544
      %v2161 = vsub.f32 %v693, %v1553
      %v2162 = vsub.f32 %v695, %v1562
      %v2163 = vsub.f32 %v697, %v1571
      %v2164 = vsub.f32 %v699, %v1580
      %v2165 = vsub.f32 %v701, %v1589
      %v2166 = vsub.f32 %v703, %v1598
      %v2167 = vsub.f32 %v705, %v1607
      %v2168 = vsub.f32 %v707, %v1616
      %v2169 = vsub.f32 %v709, %v1625
      %v2170 = vsub.f32 %v711, %v1634
      %v2171 = vsub.f32 %v713, %v1643
      %v2172 = vsub.f32 %v715, %v1652
      %v2173 = vsub.f32 %v717, %v1661
      %v2174 = vsub.f32 %v719, %v1670
      %v2175 = vsub.f32 %v721, %v1679
      %v2176 = vsub.f32 %v723, %v1688
      %v2177 = vsub.f32 %v725, %v1697
      %v2178 = vsub.f32 %v727, %v1706
      %v2179 = vsub.f32 %v729, %v1715
      %v2180 = vsub.f32 %v731, %v1724
      %v2181 = vsub.f32 %v733, %v1733
      %v2182 = vsub.f32 %v735, %v1742
      %v2183 = vsub.f32 %v737, %v1751
      %v2184 = vsub.f32 %v739, %v1760
      %v2185 = vsub.f32 %v741, %v1769
      %v2186 = vsub.f32 %v743, %v1778
      %v2187 = vsub.f32 %v745, %v1787
      %v2188 = vsub.f32 %v747, %v1796
      %v2189 = vsub.f32 %v749, %v1805
      %v2190 = vsub.f32 %v751, %v1814
      %v2191 = vsub.f32 %v753, %v1823
      %v2192 = vsub.f32 %v755, %v1832
      %v2193 = vsub.f32 %v757, %v1841
      %v2194 = vsub.f32 %v759, %v1850
      %v2195 = vsub.f32 %v761, %v1859
      %v2196 = vsub.f32 %v763, %v1868
      %v2197 = vsub.f32 %v765, %v1877
      %v2198 = vsub.f32 %v767, %v1886
      %v2199 = vsub.f32 %v769, %v1895
      %v2200 = vsub.f32 %v771, %v1904
      %v2201 = vsub.f32 %v773, %v1913
      %v2202 = vsub.f32 %v775, %v1922
      %v2203 = vsub.f32 %v777, %v1931
      %v2204 = vsub.f32 %v779, %v1940
      %v2205 = vsub.f32 %v781, %v1949
      %v2206 = vsub.f32 %v783, %v1958
      %v2207 = vsub.f32 %v785, %v1967
      %v2208 = vsub.f32 %v787, %v1976
      %v2209 = vsub.f32 %v789, %v1985
      %v2210 = vsub.f32 %v791, %v1994
      %v2211 = vsub.f32 %v793, %v2003
      %v2212 = vsub.f32 %v795, %v2012
      %v2213 = vsub.f32 %v797, %v2021
      %v2214 = vsub.f32 %v799, %v2030
      %v2215 = vsub.f32 %v801, %v2039
      %v2216 = vsub.f32 %v803, %v2048
      %v2217 = vsub.f32 %v805, %v2057
      %v2218 = vsub.f32 %v807, %v2066
      %v2219 = vsub.f32 %v809, %v2075
      %v2220 = vsub.f32 %v811, %v2084
      %v2221 = vsub.f32 %v813, %v2093
      %v2222 = vld [vmem:[%s1] sm:$0xff]
      %v2223 = vld [vmem:[%s1 + $0x8] sm:$0xff]
      %v2224 = vld [vmem:[%s1 + $0x10] sm:$0xff]
      %v2225 = vld [vmem:[%s1 + $0x18] sm:$0xff]
      %v2226 = vld [vmem:[%s2] sm:$0x1]
      %v2228 = vperm.slane %v2226, 0
      %vm2230 = vcmask 261120
      %v2232 = vsel %vm2230, %v2094, 0
      %v2235 = vsel %vm2230, %v2095, 0
      %v2238 = vsel %vm2230, %v2096, 0
      %v2241 = vsel %vm2230, %v2097, 0
      %v2244 = vsel %vm2230, %v2098, 0
      %v2247 = vsel %vm2230, %v2099, 0
      %v2250 = vsel %vm2230, %v2100, 0
      %v2253 = vsel %vm2230, %v2101, 0
      %v2256 = vsel %vm2230, %v2102, 0
      %v2259 = vsel %vm2230, %v2103, 0
      %v2262 = vsel %vm2230, %v2104, 0
      %v2265 = vsel %vm2230, %v2105, 0
      %v2268 = vsel %vm2230, %v2106, 0
      %v2271 = vsel %vm2230, %v2107, 0
      %v2274 = vsel %vm2230, %v2108, 0
      %v2277 = vsel %vm2230, %v2109, 0
      %v2280 = vsel %vm2230, %v2110, 0
      %v2283 = vsel %vm2230, %v2111, 0
      %v2286 = vsel %vm2230, %v2112, 0
      %v2289 = vsel %vm2230, %v2113, 0
      %v2292 = vsel %vm2230, %v2114, 0
      %v2295 = vsel %vm2230, %v2115, 0
      %v2298 = vsel %vm2230, %v2116, 0
      %v2301 = vsel %vm2230, %v2117, 0
      %v2304 = vsel %vm2230, %v2118, 0
      %v2307 = vsel %vm2230, %v2119, 0
      %v2310 = vsel %vm2230, %v2120, 0
      %v2313 = vsel %vm2230, %v2121, 0
      %v2316 = vsel %vm2230, %v2122, 0
      %v2319 = vsel %vm2230, %v2123, 0
      %v2322 = vsel %vm2230, %v2124, 0
      %v2325 = vsel %vm2230, %v2125, 0
      %v2328 = vsel %vm2230, %v2126, 0
      %v2331 = vsel %vm2230, %v2127, 0
      %v2334 = vsel %vm2230, %v2128, 0
      %v2337 = vsel %vm2230, %v2129, 0
      %v2340 = vsel %vm2230, %v2130, 0
      %v2343 = vsel %vm2230, %v2131, 0
      %v2346 = vsel %vm2230, %v2132, 0
      %v2349 = vsel %vm2230, %v2133, 0
      %v2352 = vsel %vm2230, %v2134, 0
      %v2355 = vsel %vm2230, %v2135, 0
      %v2358 = vsel %vm2230, %v2136, 0
      %v2361 = vsel %vm2230, %v2137, 0
      %v2364 = vsel %vm2230, %v2138, 0
      %v2367 = vsel %vm2230, %v2139, 0
      %v2370 = vsel %vm2230, %v2140, 0
      %v2373 = vsel %vm2230, %v2141, 0
      %v2376 = vsel %vm2230, %v2142, 0
      %v2379 = vsel %vm2230, %v2143, 0
      %v2382 = vsel %vm2230, %v2144, 0
      %v2385 = vsel %vm2230, %v2145, 0
      %v2388 = vsel %vm2230, %v2146, 0
      %v2391 = vsel %vm2230, %v2147, 0
      %v2394 = vsel %vm2230, %v2148, 0
      %v2397 = vsel %vm2230, %v2149, 0
      %v2400 = vsel %vm2230, %v2150, 0
      %v2403 = vsel %vm2230, %v2151, 0
      %v2406 = vsel %vm2230, %v2152, 0
      %v2409 = vsel %vm2230, %v2153, 0
      %v2412 = vsel %vm2230, %v2154, 0
      %v2415 = vsel %vm2230, %v2155, 0
      %v2418 = vsel %vm2230, %v2156, 0
      %v2421 = vsel %vm2230, %v2157, 0
      %v2424 = vsel %vm2230, %v2158, 0
      %v2427 = vsel %vm2230, %v2159, 0
      %v2430 = vsel %vm2230, %v2160, 0
      %v2433 = vsel %vm2230, %v2161, 0
      %v2436 = vsel %vm2230, %v2162, 0
      %v2439 = vsel %vm2230, %v2163, 0
      %v2442 = vsel %vm2230, %v2164, 0
      %v2445 = vsel %vm2230, %v2165, 0
      %v2448 = vsel %vm2230, %v2166, 0
      %v2451 = vsel %vm2230, %v2167, 0
      %v2454 = vsel %vm2230, %v2168, 0
      %v2457 = vsel %vm2230, %v2169, 0
      %v2460 = vsel %vm2230, %v2170, 0
      %v2463 = vsel %vm2230, %v2171, 0
      %v2466 = vsel %vm2230, %v2172, 0
      %v2469 = vsel %vm2230, %v2173, 0
      %v2472 = vsel %vm2230, %v2174, 0
      %v2475 = vsel %vm2230, %v2175, 0
      %v2478 = vsel %vm2230, %v2176, 0
      %v2481 = vsel %vm2230, %v2177, 0
      %v2484 = vsel %vm2230, %v2178, 0
      %v2487 = vsel %vm2230, %v2179, 0
      %v2490 = vsel %vm2230, %v2180, 0
      %v2493 = vsel %vm2230, %v2181, 0
      %v2496 = vsel %vm2230, %v2182, 0
      %v2499 = vsel %vm2230, %v2183, 0
      %v2502 = vsel %vm2230, %v2184, 0
      %v2505 = vsel %vm2230, %v2185, 0
      %v2508 = vsel %vm2230, %v2186, 0
      %v2511 = vsel %vm2230, %v2187, 0
      %v2514 = vsel %vm2230, %v2188, 0
      %v2517 = vsel %vm2230, %v2189, 0
      %v2520 = vsel %vm2230, %v2190, 0
      %v2523 = vsel %vm2230, %v2191, 0
      %v2526 = vsel %vm2230, %v2192, 0
      %v2529 = vsel %vm2230, %v2193, 0
      %v2532 = vsel %vm2230, %v2194, 0
      %v2535 = vsel %vm2230, %v2195, 0
      %v2538 = vsel %vm2230, %v2196, 0
      %v2541 = vsel %vm2230, %v2197, 0
      %v2544 = vsel %vm2230, %v2198, 0
      %v2547 = vsel %vm2230, %v2199, 0
      %v2550 = vsel %vm2230, %v2200, 0
      %v2553 = vsel %vm2230, %v2201, 0
      %v2556 = vsel %vm2230, %v2202, 0
      %v2559 = vsel %vm2230, %v2203, 0
      %v2562 = vsel %vm2230, %v2204, 0
      %v2565 = vsel %vm2230, %v2205, 0
      %v2568 = vsel %vm2230, %v2206, 0
      %v2571 = vsel %vm2230, %v2207, 0
      %v2574 = vsel %vm2230, %v2208, 0
      %v2577 = vsel %vm2230, %v2209, 0
      %v2580 = vsel %vm2230, %v2210, 0
      %v2583 = vsel %vm2230, %v2211, 0
      %v2586 = vsel %vm2230, %v2212, 0
      %v2589 = vsel %vm2230, %v2213, 0
      %v2592 = vsel %vm2230, %v2214, 0
      %v2595 = vsel %vm2230, %v2215, 0
      %v2598 = vsel %vm2230, %v2216, 0
      %v2601 = vsel %vm2230, %v2217, 0
      %v2604 = vsel %vm2230, %v2218, 0
      %v2607 = vsel %vm2230, %v2219, 0
      %v2610 = vsel %vm2230, %v2220, 0
      %v2613 = vsel %vm2230, %v2221, 0
      %2615 = vmatpush.msra.mxu0 0.0
      %2616 = vmatpush.msra.mxu0 0.0
      %2617 = vmatpush.msra.mxu0 0.0
      %2618 = vmatpush.msra.mxu0 0.0
      %2619 = vmatpush.msra.mxu0 0.0
      %2620 = vmatpush.msra.mxu0 0.0
      %2621 = vmatpush.msra.mxu0 0.0
      %2622 = vmatpush.msra.mxu0 0.0
      %2623 = vmatpush.msra.mxu0 0.0
      %2624 = vmatpush.msra.mxu0 0.0
      %2625 = vmatpush.msra.mxu0 0.0
      %2626 = vmatpush.msra.mxu0 0.0
      %2627 = vmatpush.msra.mxu0 %v2225
      %2628 = vmatpush.msra.mxu0 %v2224
      %2629 = vmatpush.msra.mxu0 %v2223
      %2630 = vmatpush.msra.mxu0 %v2222
      %2631 = vmatmul.f32.gmra.mxu0 %v2232
      %v2632 = vpop.f32.mrf.mxu0
      %v2633 = vadd.f32 %v2228, %v2632
      %2634 = vmatmul.f32.gmra.mxu0 %v2235
      %v2635 = vpop.f32.mrf.mxu0
      %v2636 = vadd.f32 %v2228, %v2635
      %2637 = vmatmul.f32.gmra.mxu0 %v2238
      %v2638 = vpop.f32.mrf.mxu0
      %v2639 = vadd.f32 %v2228, %v2638
      %2640 = vmatmul.f32.gmra.mxu0 %v2241
      %v2641 = vpop.f32.mrf.mxu0
      %v2642 = vadd.f32 %v2228, %v2641
      %2643 = vmatmul.f32.gmra.mxu0 %v2244
      %v2644 = vpop.f32.mrf.mxu0
      %v2645 = vadd.f32 %v2228, %v2644
      %2646 = vmatmul.f32.gmra.mxu0 %v2247
      %v2647 = vpop.f32.mrf.mxu0
      %v2648 = vadd.f32 %v2228, %v2647
      %2649 = vmatmul.f32.gmra.mxu0 %v2250
      %v2650 = vpop.f32.mrf.mxu0
      %v2651 = vadd.f32 %v2228, %v2650
      %2652 = vmatmul.f32.gmra.mxu0 %v2253
      %v2653 = vpop.f32.mrf.mxu0
      %v2654 = vadd.f32 %v2228, %v2653
      %2655 = vmatmul.f32.gmra.mxu0 %v2256
      %v2656 = vpop.f32.mrf.mxu0
      %v2657 = vadd.f32 %v2228, %v2656
      %2658 = vmatmul.f32.gmra.mxu0 %v2259
      %v2659 = vpop.f32.mrf.mxu0
      %v2660 = vadd.f32 %v2228, %v2659
      %2661 = vmatmul.f32.gmra.mxu0 %v2262
      %v2662 = vpop.f32.mrf.mxu0
      %v2663 = vadd.f32 %v2228, %v2662
      %2664 = vmatmul.f32.gmra.mxu0 %v2265
      %v2665 = vpop.f32.mrf.mxu0
      %v2666 = vadd.f32 %v2228, %v2665
      %2667 = vmatmul.f32.gmra.mxu0 %v2268
      %v2668 = vpop.f32.mrf.mxu0
      %v2669 = vadd.f32 %v2228, %v2668
      %2670 = vmatmul.f32.gmra.mxu0 %v2271
      %v2671 = vpop.f32.mrf.mxu0
      %v2672 = vadd.f32 %v2228, %v2671
      %2673 = vmatmul.f32.gmra.mxu0 %v2274
      %v2674 = vpop.f32.mrf.mxu0
      %v2675 = vadd.f32 %v2228, %v2674
      %2676 = vmatmul.f32.gmra.mxu0 %v2277
      %v2677 = vpop.f32.mrf.mxu0
      %v2678 = vadd.f32 %v2228, %v2677
      %2679 = vmatmul.f32.gmra.mxu0 %v2280
      %v2680 = vpop.f32.mrf.mxu0
      %v2681 = vadd.f32 %v2228, %v2680
      %2682 = vmatmul.f32.gmra.mxu0 %v2283
      %v2683 = vpop.f32.mrf.mxu0
      %v2684 = vadd.f32 %v2228, %v2683
      %2685 = vmatmul.f32.gmra.mxu0 %v2286
      %v2686 = vpop.f32.mrf.mxu0
      %v2687 = vadd.f32 %v2228, %v2686
      %2688 = vmatmul.f32.gmra.mxu0 %v2289
      %v2689 = vpop.f32.mrf.mxu0
      %v2690 = vadd.f32 %v2228, %v2689
      %2691 = vmatmul.f32.gmra.mxu0 %v2292
      %v2692 = vpop.f32.mrf.mxu0
      %v2693 = vadd.f32 %v2228, %v2692
      %2694 = vmatmul.f32.gmra.mxu0 %v2295
      %v2695 = vpop.f32.mrf.mxu0
      %v2696 = vadd.f32 %v2228, %v2695
      %2697 = vmatmul.f32.gmra.mxu0 %v2298
      %v2698 = vpop.f32.mrf.mxu0
      %v2699 = vadd.f32 %v2228, %v2698
      %2700 = vmatmul.f32.gmra.mxu0 %v2301
      %v2701 = vpop.f32.mrf.mxu0
      %v2702 = vadd.f32 %v2228, %v2701
      %2703 = vmatmul.f32.gmra.mxu0 %v2304
      %v2704 = vpop.f32.mrf.mxu0
      %v2705 = vadd.f32 %v2228, %v2704
      %2706 = vmatmul.f32.gmra.mxu0 %v2307
      %v2707 = vpop.f32.mrf.mxu0
      %v2708 = vadd.f32 %v2228, %v2707
      %2709 = vmatmul.f32.gmra.mxu0 %v2310
      %v2710 = vpop.f32.mrf.mxu0
      %v2711 = vadd.f32 %v2228, %v2710
      %2712 = vmatmul.f32.gmra.mxu0 %v2313
      %v2713 = vpop.f32.mrf.mxu0
      %v2714 = vadd.f32 %v2228, %v2713
      %2715 = vmatmul.f32.gmra.mxu0 %v2316
      %v2716 = vpop.f32.mrf.mxu0
      %v2717 = vadd.f32 %v2228, %v2716
      %2718 = vmatmul.f32.gmra.mxu0 %v2319
      %v2719 = vpop.f32.mrf.mxu0
      %v2720 = vadd.f32 %v2228, %v2719
      %2721 = vmatmul.f32.gmra.mxu0 %v2322
      %v2722 = vpop.f32.mrf.mxu0
      %v2723 = vadd.f32 %v2228, %v2722
      %2724 = vmatmul.f32.gmra.mxu0 %v2325
      %v2725 = vpop.f32.mrf.mxu0
      %v2726 = vadd.f32 %v2228, %v2725
      %2727 = vmatmul.f32.gmra.mxu0 %v2328
      %v2728 = vpop.f32.mrf.mxu0
      %v2729 = vadd.f32 %v2228, %v2728
      %2730 = vmatmul.f32.gmra.mxu0 %v2331
      %v2731 = vpop.f32.mrf.mxu0
      %v2732 = vadd.f32 %v2228, %v2731
      %2733 = vmatmul.f32.gmra.mxu0 %v2334
      %v2734 = vpop.f32.mrf.mxu0
      %v2735 = vadd.f32 %v2228, %v2734
      %2736 = vmatmul.f32.gmra.mxu0 %v2337
      %v2737 = vpop.f32.mrf.mxu0
      %v2738 = vadd.f32 %v2228, %v2737
      %2739 = vmatmul.f32.gmra.mxu0 %v2340
      %v2740 = vpop.f32.mrf.mxu0
      %v2741 = vadd.f32 %v2228, %v2740
      %2742 = vmatmul.f32.gmra.mxu0 %v2343
      %v2743 = vpop.f32.mrf.mxu0
      %v2744 = vadd.f32 %v2228, %v2743
      %2745 = vmatmul.f32.gmra.mxu0 %v2346
      %v2746 = vpop.f32.mrf.mxu0
      %v2747 = vadd.f32 %v2228, %v2746
      %2748 = vmatmul.f32.gmra.mxu0 %v2349
      %v2749 = vpop.f32.mrf.mxu0
      %v2750 = vadd.f32 %v2228, %v2749
      %2751 = vmatmul.f32.gmra.mxu0 %v2352
      %v2752 = vpop.f32.mrf.mxu0
      %v2753 = vadd.f32 %v2228, %v2752
      %2754 = vmatmul.f32.gmra.mxu0 %v2355
      %v2755 = vpop.f32.mrf.mxu0
      %v2756 = vadd.f32 %v2228, %v2755
      %2757 = vmatmul.f32.gmra.mxu0 %v2358
      %v2758 = vpop.f32.mrf.mxu0
      %v2759 = vadd.f32 %v2228, %v2758
      %2760 = vmatmul.f32.gmra.mxu0 %v2361
      %v2761 = vpop.f32.mrf.mxu0
      %v2762 = vadd.f32 %v2228, %v2761
      %2763 = vmatmul.f32.gmra.mxu0 %v2364
      %v2764 = vpop.f32.mrf.mxu0
      %v2765 = vadd.f32 %v2228, %v2764
      %2766 = vmatmul.f32.gmra.mxu0 %v2367
      %v2767 = vpop.f32.mrf.mxu0
      %v2768 = vadd.f32 %v2228, %v2767
      %2769 = vmatmul.f32.gmra.mxu0 %v2370
      %v2770 = vpop.f32.mrf.mxu0
      %v2771 = vadd.f32 %v2228, %v2770
      %2772 = vmatmul.f32.gmra.mxu0 %v2373
      %v2773 = vpop.f32.mrf.mxu0
      %v2774 = vadd.f32 %v2228, %v2773
      %2775 = vmatmul.f32.gmra.mxu0 %v2376
      %v2776 = vpop.f32.mrf.mxu0
      %v2777 = vadd.f32 %v2228, %v2776
      %2778 = vmatmul.f32.gmra.mxu0 %v2379
      %v2779 = vpop.f32.mrf.mxu0
      %v2780 = vadd.f32 %v2228, %v2779
      %2781 = vmatmul.f32.gmra.mxu0 %v2382
      %v2782 = vpop.f32.mrf.mxu0
      %v2783 = vadd.f32 %v2228, %v2782
      %2784 = vmatmul.f32.gmra.mxu0 %v2385
      %v2785 = vpop.f32.mrf.mxu0
      %v2786 = vadd.f32 %v2228, %v2785
      %2787 = vmatmul.f32.gmra.mxu0 %v2388
      %v2788 = vpop.f32.mrf.mxu0
      %v2789 = vadd.f32 %v2228, %v2788
      %2790 = vmatmul.f32.gmra.mxu0 %v2391
      %v2791 = vpop.f32.mrf.mxu0
      %v2792 = vadd.f32 %v2228, %v2791
      %2793 = vmatmul.f32.gmra.mxu0 %v2394
      %v2794 = vpop.f32.mrf.mxu0
      %v2795 = vadd.f32 %v2228, %v2794
      %2796 = vmatmul.f32.gmra.mxu0 %v2397
      %v2797 = vpop.f32.mrf.mxu0
      %v2798 = vadd.f32 %v2228, %v2797
      %2799 = vmatmul.f32.gmra.mxu0 %v2400
      %v2800 = vpop.f32.mrf.mxu0
      %v2801 = vadd.f32 %v2228, %v2800
      %2802 = vmatmul.f32.gmra.mxu0 %v2403
      %v2803 = vpop.f32.mrf.mxu0
      %v2804 = vadd.f32 %v2228, %v2803
      %2805 = vmatmul.f32.gmra.mxu0 %v2406
      %v2806 = vpop.f32.mrf.mxu0
      %v2807 = vadd.f32 %v2228, %v2806
      %2808 = vmatmul.f32.gmra.mxu0 %v2409
      %v2809 = vpop.f32.mrf.mxu0
      %v2810 = vadd.f32 %v2228, %v2809
      %2811 = vmatmul.f32.gmra.mxu0 %v2412
      %v2812 = vpop.f32.mrf.mxu0
      %v2813 = vadd.f32 %v2228, %v2812
      %2814 = vmatmul.f32.gmra.mxu0 %v2415
      %v2815 = vpop.f32.mrf.mxu0
      %v2816 = vadd.f32 %v2228, %v2815
      %2817 = vmatmul.f32.gmra.mxu0 %v2418
      %v2818 = vpop.f32.mrf.mxu0
      %v2819 = vadd.f32 %v2228, %v2818
      %2820 = vmatmul.f32.gmra.mxu0 %v2421
      %v2821 = vpop.f32.mrf.mxu0
      %v2822 = vadd.f32 %v2228, %v2821
      %2823 = vmatmul.f32.gmra.mxu0 %v2424
      %v2824 = vpop.f32.mrf.mxu0
      %v2825 = vadd.f32 %v2228, %v2824
      %2826 = vmatmul.f32.gmra.mxu0 %v2427
      %v2827 = vpop.f32.mrf.mxu0
      %v2828 = vadd.f32 %v2228, %v2827
      %2829 = vmatmul.f32.gmra.mxu0 %v2430
      %v2830 = vpop.f32.mrf.mxu0
      %v2831 = vadd.f32 %v2228, %v2830
      %2832 = vmatmul.f32.gmra.mxu0 %v2433
      %v2833 = vpop.f32.mrf.mxu0
      %v2834 = vadd.f32 %v2228, %v2833
      %2835 = vmatmul.f32.gmra.mxu0 %v2436
      %v2836 = vpop.f32.mrf.mxu0
      %v2837 = vadd.f32 %v2228, %v2836
      %2838 = vmatmul.f32.gmra.mxu0 %v2439
      %v2839 = vpop.f32.mrf.mxu0
      %v2840 = vadd.f32 %v2228, %v2839
      %2841 = vmatmul.f32.gmra.mxu0 %v2442
      %v2842 = vpop.f32.mrf.mxu0
      %v2843 = vadd.f32 %v2228, %v2842
      %2844 = vmatmul.f32.gmra.mxu0 %v2445
      %v2845 = vpop.f32.mrf.mxu0
      %v2846 = vadd.f32 %v2228, %v2845
      %2847 = vmatmul.f32.gmra.mxu0 %v2448
      %v2848 = vpop.f32.mrf.mxu0
      %v2849 = vadd.f32 %v2228, %v2848
      %2850 = vmatmul.f32.gmra.mxu0 %v2451
      %v2851 = vpop.f32.mrf.mxu0
      %v2852 = vadd.f32 %v2228, %v2851
      %2853 = vmatmul.f32.gmra.mxu0 %v2454
      %v2854 = vpop.f32.mrf.mxu0
      %v2855 = vadd.f32 %v2228, %v2854
      %2856 = vmatmul.f32.gmra.mxu0 %v2457
      %v2857 = vpop.f32.mrf.mxu0
      %v2858 = vadd.f32 %v2228, %v2857
      %2859 = vmatmul.f32.gmra.mxu0 %v2460
      %v2860 = vpop.f32.mrf.mxu0
      %v2861 = vadd.f32 %v2228, %v2860
      %2862 = vmatmul.f32.gmra.mxu0 %v2463
      %v2863 = vpop.f32.mrf.mxu0
      %v2864 = vadd.f32 %v2228, %v2863
      %2865 = vmatmul.f32.gmra.mxu0 %v2466
      %v2866 = vpop.f32.mrf.mxu0
      %v2867 = vadd.f32 %v2228, %v2866
      %2868 = vmatmul.f32.gmra.mxu0 %v2469
      %v2869 = vpop.f32.mrf.mxu0
      %v2870 = vadd.f32 %v2228, %v2869
      %2871 = vmatmul.f32.gmra.mxu0 %v2472
      %v2872 = vpop.f32.mrf.mxu0
      %v2873 = vadd.f32 %v2228, %v2872
      %2874 = vmatmul.f32.gmra.mxu0 %v2475
      %v2875 = vpop.f32.mrf.mxu0
      %v2876 = vadd.f32 %v2228, %v2875
      %2877 = vmatmul.f32.gmra.mxu0 %v2478
      %v2878 = vpop.f32.mrf.mxu0
      %v2879 = vadd.f32 %v2228, %v2878
      %2880 = vmatmul.f32.gmra.mxu0 %v2481
      %v2881 = vpop.f32.mrf.mxu0
      %v2882 = vadd.f32 %v2228, %v2881
      %2883 = vmatmul.f32.gmra.mxu0 %v2484
      %v2884 = vpop.f32.mrf.mxu0
      %v2885 = vadd.f32 %v2228, %v2884
      %2886 = vmatmul.f32.gmra.mxu0 %v2487
      %v2887 = vpop.f32.mrf.mxu0
      %v2888 = vadd.f32 %v2228, %v2887
      %2889 = vmatmul.f32.gmra.mxu0 %v2490
      %v2890 = vpop.f32.mrf.mxu0
      %v2891 = vadd.f32 %v2228, %v2890
      %2892 = vmatmul.f32.gmra.mxu0 %v2493
      %v2893 = vpop.f32.mrf.mxu0
      %v2894 = vadd.f32 %v2228, %v2893
      %2895 = vmatmul.f32.gmra.mxu0 %v2496
      %v2896 = vpop.f32.mrf.mxu0
      %v2897 = vadd.f32 %v2228, %v2896
      %2898 = vmatmul.f32.gmra.mxu0 %v2499
      %v2899 = vpop.f32.mrf.mxu0
      %v2900 = vadd.f32 %v2228, %v2899
      %2901 = vmatmul.f32.gmra.mxu0 %v2502
      %v2902 = vpop.f32.mrf.mxu0
      %v2903 = vadd.f32 %v2228, %v2902
      %2904 = vmatmul.f32.gmra.mxu0 %v2505
      %v2905 = vpop.f32.mrf.mxu0
      %v2906 = vadd.f32 %v2228, %v2905
      %2907 = vmatmul.f32.gmra.mxu0 %v2508
      %v2908 = vpop.f32.mrf.mxu0
      %v2909 = vadd.f32 %v2228, %v2908
      %2910 = vmatmul.f32.gmra.mxu0 %v2511
      %v2911 = vpop.f32.mrf.mxu0
      %v2912 = vadd.f32 %v2228, %v2911
      %2913 = vmatmul.f32.gmra.mxu0 %v2514
      %v2914 = vpop.f32.mrf.mxu0
      %v2915 = vadd.f32 %v2228, %v2914
      %2916 = vmatmul.f32.gmra.mxu0 %v2517
      %v2917 = vpop.f32.mrf.mxu0
      %v2918 = vadd.f32 %v2228, %v2917
      %2919 = vmatmul.f32.gmra.mxu0 %v2520
      %v2920 = vpop.f32.mrf.mxu0
      %v2921 = vadd.f32 %v2228, %v2920
      %2922 = vmatmul.f32.gmra.mxu0 %v2523
      %v2923 = vpop.f32.mrf.mxu0
      %v2924 = vadd.f32 %v2228, %v2923
      %2925 = vmatmul.f32.gmra.mxu0 %v2526
      %v2926 = vpop.f32.mrf.mxu0
      %v2927 = vadd.f32 %v2228, %v2926
      %2928 = vmatmul.f32.gmra.mxu0 %v2529
      %v2929 = vpop.f32.mrf.mxu0
      %v2930 = vadd.f32 %v2228, %v2929
      %2931 = vmatmul.f32.gmra.mxu0 %v2532
      %v2932 = vpop.f32.mrf.mxu0
      %v2933 = vadd.f32 %v2228, %v2932
      %2934 = vmatmul.f32.gmra.mxu0 %v2535
      %v2935 = vpop.f32.mrf.mxu0
      %v2936 = vadd.f32 %v2228, %v2935
      %2937 = vmatmul.f32.gmra.mxu0 %v2538
      %v2938 = vpop.f32.mrf.mxu0
      %v2939 = vadd.f32 %v2228, %v2938
      %2940 = vmatmul.f32.gmra.mxu0 %v2541
      %v2941 = vpop.f32.mrf.mxu0
      %v2942 = vadd.f32 %v2228, %v2941
      %2943 = vmatmul.f32.gmra.mxu0 %v2544
      %v2944 = vpop.f32.mrf.mxu0
      %v2945 = vadd.f32 %v2228, %v2944
      %2946 = vmatmul.f32.gmra.mxu0 %v2547
      %v2947 = vpop.f32.mrf.mxu0
      %v2948 = vadd.f32 %v2228, %v2947
      %2949 = vmatmul.f32.gmra.mxu0 %v2550
      %v2950 = vpop.f32.mrf.mxu0
      %v2951 = vadd.f32 %v2228, %v2950
      %2952 = vmatmul.f32.gmra.mxu0 %v2553
      %v2953 = vpop.f32.mrf.mxu0
      %v2954 = vadd.f32 %v2228, %v2953
      %2955 = vmatmul.f32.gmra.mxu0 %v2556
      %v2956 = vpop.f32.mrf.mxu0
      %v2957 = vadd.f32 %v2228, %v2956
      %2958 = vmatmul.f32.gmra.mxu0 %v2559
      %v2959 = vpop.f32.mrf.mxu0
      %v2960 = vadd.f32 %v2228, %v2959
      %2961 = vmatmul.f32.gmra.mxu0 %v2562
      %v2962 = vpop.f32.mrf.mxu0
      %v2963 = vadd.f32 %v2228, %v2962
      %2964 = vmatmul.f32.gmra.mxu0 %v2565
      %v2965 = vpop.f32.mrf.mxu0
      %v2966 = vadd.f32 %v2228, %v2965
      %2967 = vmatmul.f32.gmra.mxu0 %v2568
      %v2968 = vpop.f32.mrf.mxu0
      %v2969 = vadd.f32 %v2228, %v2968
      %2970 = vmatmul.f32.gmra.mxu0 %v2571
      %v2971 = vpop.f32.mrf.mxu0
      %v2972 = vadd.f32 %v2228, %v2971
      %2973 = vmatmul.f32.gmra.mxu0 %v2574
      %v2974 = vpop.f32.mrf.mxu0
      %v2975 = vadd.f32 %v2228, %v2974
      %2976 = vmatmul.f32.gmra.mxu0 %v2577
      %v2977 = vpop.f32.mrf.mxu0
      %v2978 = vadd.f32 %v2228, %v2977
      %2979 = vmatmul.f32.gmra.mxu0 %v2580
      %v2980 = vpop.f32.mrf.mxu0
      %v2981 = vadd.f32 %v2228, %v2980
      %2982 = vmatmul.f32.gmra.mxu0 %v2583
      %v2983 = vpop.f32.mrf.mxu0
      %v2984 = vadd.f32 %v2228, %v2983
      %2985 = vmatmul.f32.gmra.mxu0 %v2586
      %v2986 = vpop.f32.mrf.mxu0
      %v2987 = vadd.f32 %v2228, %v2986
      %2988 = vmatmul.f32.gmra.mxu0 %v2589
      %v2989 = vpop.f32.mrf.mxu0
      %v2990 = vadd.f32 %v2228, %v2989
      %2991 = vmatmul.f32.gmra.mxu0 %v2592
      %v2992 = vpop.f32.mrf.mxu0
      %v2993 = vadd.f32 %v2228, %v2992
      %2994 = vmatmul.f32.gmra.mxu0 %v2595
      %v2995 = vpop.f32.mrf.mxu0
      %v2996 = vadd.f32 %v2228, %v2995
      %2997 = vmatmul.f32.gmra.mxu0 %v2598
      %v2998 = vpop.f32.mrf.mxu0
      %v2999 = vadd.f32 %v2228, %v2998
      %3000 = vmatmul.f32.gmra.mxu0 %v2601
      %v3001 = vpop.f32.mrf.mxu0
      %v3002 = vadd.f32 %v2228, %v3001
      %3003 = vmatmul.f32.gmra.mxu0 %v2604
      %v3004 = vpop.f32.mrf.mxu0
      %v3005 = vadd.f32 %v2228, %v3004
      %3006 = vmatmul.f32.gmra.mxu0 %v2607
      %v3007 = vpop.f32.mrf.mxu0
      %v3008 = vadd.f32 %v2228, %v3007
      %3009 = vmatmul.f32.gmra.mxu0 %v2610
      %v3010 = vpop.f32.mrf.mxu0
      %v3011 = vadd.f32 %v2228, %v3010
      %3012 = vmatmul.f32.gmra.mxu0 %v2613
      %v3013 = vpop.f32.mrf.mxu0
      %v3014 = vadd.f32 %v2228, %v3013
      %3015 = vdwg.mxu0
      %v3016 = vmul.f32 %v2633, 0.5
      %v3017 = vmul.f32 %v2636, 0.5
      %v3018 = vmul.f32 %v2639, 0.5
      %v3019 = vmul.f32 %v2642, 0.5
      %v3020 = vmul.f32 %v2645, 0.5
      %v3021 = vmul.f32 %v2648, 0.5
      %v3022 = vmul.f32 %v2651, 0.5
      %v3023 = vmul.f32 %v2654, 0.5
      %v3024 = vmul.f32 %v2657, 0.5
      %v3025 = vmul.f32 %v2660, 0.5
      %v3026 = vmul.f32 %v2663, 0.5
      %v3027 = vmul.f32 %v2666, 0.5
      %v3028 = vmul.f32 %v2669, 0.5
      %v3029 = vmul.f32 %v2672, 0.5
      %v3030 = vmul.f32 %v2675, 0.5
      %v3031 = vmul.f32 %v2678, 0.5
      %v3032 = vmul.f32 %v2681, 0.5
      %v3033 = vmul.f32 %v2684, 0.5
      %v3034 = vmul.f32 %v2687, 0.5
      %v3035 = vmul.f32 %v2690, 0.5
      %v3036 = vmul.f32 %v2693, 0.5
      %v3037 = vmul.f32 %v2696, 0.5
      %v3038 = vmul.f32 %v2699, 0.5
      %v3039 = vmul.f32 %v2702, 0.5
      %v3040 = vmul.f32 %v2705, 0.5
      %v3041 = vmul.f32 %v2708, 0.5
      %v3042 = vmul.f32 %v2711, 0.5
      %v3043 = vmul.f32 %v2714, 0.5
      %v3044 = vmul.f32 %v2717, 0.5
      %v3045 = vmul.f32 %v2720, 0.5
      %v3046 = vmul.f32 %v2723, 0.5
      %v3047 = vmul.f32 %v2726, 0.5
      %v3048 = vmul.f32 %v2729, 0.5
      %v3049 = vmul.f32 %v2732, 0.5
      %v3050 = vmul.f32 %v2735, 0.5
      %v3051 = vmul.f32 %v2738, 0.5
      %v3052 = vmul.f32 %v2741, 0.5
      %v3053 = vmul.f32 %v2744, 0.5
      %v3054 = vmul.f32 %v2747, 0.5
      %v3055 = vmul.f32 %v2750, 0.5
      %v3056 = vmul.f32 %v2753, 0.5
      %v3057 = vmul.f32 %v2756, 0.5
      %v3058 = vmul.f32 %v2759, 0.5
      %v3059 = vmul.f32 %v2762, 0.5
      %v3060 = vmul.f32 %v2765, 0.5
      %v3061 = vmul.f32 %v2768, 0.5
      %v3062 = vmul.f32 %v2771, 0.5
      %v3063 = vmul.f32 %v2774, 0.5
      %v3064 = vmul.f32 %v2777, 0.5
      %v3065 = vmul.f32 %v2780, 0.5
      %v3066 = vmul.f32 %v2783, 0.5
      %v3067 = vmul.f32 %v2786, 0.5
      %v3068 = vmul.f32 %v2789, 0.5
      %v3069 = vmul.f32 %v2792, 0.5
      %v3070 = vmul.f32 %v2795, 0.5
      %v3071 = vmul.f32 %v2798, 0.5
      %v3072 = vmul.f32 %v2801, 0.5
      %v3073 = vmul.f32 %v2804, 0.5
      %v3074 = vmul.f32 %v2807, 0.5
      %v3075 = vmul.f32 %v2810, 0.5
      %v3076 = vmul.f32 %v2813, 0.5
      %v3077 = vmul.f32 %v2816, 0.5
      %v3078 = vmul.f32 %v2819, 0.5
      %v3079 = vmul.f32 %v2822, 0.5
      %v3080 = vmul.f32 %v2825, 0.5
      %v3081 = vmul.f32 %v2828, 0.5
      %v3082 = vmul.f32 %v2831, 0.5
      %v3083 = vmul.f32 %v2834, 0.5
      %v3084 = vmul.f32 %v2837, 0.5
      %v3085 = vmul.f32 %v2840, 0.5
      %v3086 = vmul.f32 %v2843, 0.5
      %v3087 = vmul.f32 %v2846, 0.5
      %v3088 = vmul.f32 %v2849, 0.5
      %v3089 = vmul.f32 %v2852, 0.5
      %v3090 = vmul.f32 %v2855, 0.5
      %v3091 = vmul.f32 %v2858, 0.5
      %v3092 = vmul.f32 %v2861, 0.5
      %v3093 = vmul.f32 %v2864, 0.5
      %v3094 = vmul.f32 %v2867, 0.5
      %v3095 = vmul.f32 %v2870, 0.5
      %v3096 = vmul.f32 %v2873, 0.5
      %v3097 = vmul.f32 %v2876, 0.5
      %v3098 = vmul.f32 %v2879, 0.5
      %v3099 = vmul.f32 %v2882, 0.5
      %v3100 = vmul.f32 %v2885, 0.5
      %v3101 = vmul.f32 %v2888, 0.5
      %v3102 = vmul.f32 %v2891, 0.5
      %v3103 = vmul.f32 %v2894, 0.5
      %v3104 = vmul.f32 %v2897, 0.5
      %v3105 = vmul.f32 %v2900, 0.5
      %v3106 = vmul.f32 %v2903, 0.5
      %v3107 = vmul.f32 %v2906, 0.5
      %v3108 = vmul.f32 %v2909, 0.5
      %v3109 = vmul.f32 %v2912, 0.5
      %v3110 = vmul.f32 %v2915, 0.5
      %v3111 = vmul.f32 %v2918, 0.5
      %v3112 = vmul.f32 %v2921, 0.5
      %v3113 = vmul.f32 %v2924, 0.5
      %v3114 = vmul.f32 %v2927, 0.5
      %v3115 = vmul.f32 %v2930, 0.5
      %v3116 = vmul.f32 %v2933, 0.5
      %v3117 = vmul.f32 %v2936, 0.5
      %v3118 = vmul.f32 %v2939, 0.5
      %v3119 = vmul.f32 %v2942, 0.5
      %v3120 = vmul.f32 %v2945, 0.5
      %v3121 = vmul.f32 %v2948, 0.5
      %v3122 = vmul.f32 %v2951, 0.5
      %v3123 = vmul.f32 %v2954, 0.5
      %v3124 = vmul.f32 %v2957, 0.5
      %v3125 = vmul.f32 %v2960, 0.5
      %v3126 = vmul.f32 %v2963, 0.5
      %v3127 = vmul.f32 %v2966, 0.5
      %v3128 = vmul.f32 %v2969, 0.5
      %v3129 = vmul.f32 %v2972, 0.5
      %v3130 = vmul.f32 %v2975, 0.5
      %v3131 = vmul.f32 %v2978, 0.5
      %v3132 = vmul.f32 %v2981, 0.5
      %v3133 = vmul.f32 %v2984, 0.5
      %v3134 = vmul.f32 %v2987, 0.5
      %v3135 = vmul.f32 %v2990, 0.5
      %v3136 = vmul.f32 %v2993, 0.5
      %v3137 = vmul.f32 %v2996, 0.5
      %v3138 = vmul.f32 %v2999, 0.5
      %v3139 = vmul.f32 %v3002, 0.5
      %v3140 = vmul.f32 %v3005, 0.5
      %v3141 = vmul.f32 %v3008, 0.5
      %v3142 = vmul.f32 %v3011, 0.5
      %v3143 = vmul.f32 %v3014, 0.5
      %v3144 = vtanh.pop %v3016
      %v3145 = vtanh.pop %v3017
      %v3146 = vtanh.pop %v3018
      %v3147 = vtanh.pop %v3019
      %v3148 = vtanh.pop %v3020
      %v3149 = vtanh.pop %v3021
      %v3150 = vtanh.pop %v3022
      %v3151 = vtanh.pop %v3023
      %v3152 = vtanh.pop %v3024
      %v3153 = vtanh.pop %v3025
      %v3154 = vtanh.pop %v3026
      %v3155 = vtanh.pop %v3027
      %v3156 = vtanh.pop %v3028
      %v3157 = vtanh.pop %v3029
      %v3158 = vtanh.pop %v3030
      %v3159 = vtanh.pop %v3031
      %v3160 = vtanh.pop %v3032
      %v3161 = vtanh.pop %v3033
      %v3162 = vtanh.pop %v3034
      %v3163 = vtanh.pop %v3035
      %v3164 = vtanh.pop %v3036
      %v3165 = vtanh.pop %v3037
      %v3166 = vtanh.pop %v3038
      %v3167 = vtanh.pop %v3039
      %v3168 = vtanh.pop %v3040
      %v3169 = vtanh.pop %v3041
      %v3170 = vtanh.pop %v3042
      %v3171 = vtanh.pop %v3043
      %v3172 = vtanh.pop %v3044
      %v3173 = vtanh.pop %v3045
      %v3174 = vtanh.pop %v3046
      %v3175 = vtanh.pop %v3047
      %v3176 = vtanh.pop %v3048
      %v3177 = vtanh.pop %v3049
      %v3178 = vtanh.pop %v3050
      %v3179 = vtanh.pop %v3051
      %v3180 = vtanh.pop %v3052
      %v3181 = vtanh.pop %v3053
      %v3182 = vtanh.pop %v3054
      %v3183 = vtanh.pop %v3055
      %v3184 = vtanh.pop %v3056
      %v3185 = vtanh.pop %v3057
      %v3186 = vtanh.pop %v3058
      %v3187 = vtanh.pop %v3059
      %v3188 = vtanh.pop %v3060
      %v3189 = vtanh.pop %v3061
      %v3190 = vtanh.pop %v3062
      %v3191 = vtanh.pop %v3063
      %v3192 = vtanh.pop %v3064
      %v3193 = vtanh.pop %v3065
      %v3194 = vtanh.pop %v3066
      %v3195 = vtanh.pop %v3067
      %v3196 = vtanh.pop %v3068
      %v3197 = vtanh.pop %v3069
      %v3198 = vtanh.pop %v3070
      %v3199 = vtanh.pop %v3071
      %v3200 = vtanh.pop %v3072
      %v3201 = vtanh.pop %v3073
      %v3202 = vtanh.pop %v3074
      %v3203 = vtanh.pop %v3075
      %v3204 = vtanh.pop %v3076
      %v3205 = vtanh.pop %v3077
      %v3206 = vtanh.pop %v3078
      %v3207 = vtanh.pop %v3079
      %v3208 = vtanh.pop %v3080
      %v3209 = vtanh.pop %v3081
      %v3210 = vtanh.pop %v3082
      %v3211 = vtanh.pop %v3083
      %v3212 = vtanh.pop %v3084
      %v3213 = vtanh.pop %v3085
      %v3214 = vtanh.pop %v3086
      %v3215 = vtanh.pop %v3087
      %v3216 = vtanh.pop %v3088
      %v3217 = vtanh.pop %v3089
      %v3218 = vtanh.pop %v3090
      %v3219 = vtanh.pop %v3091
      %v3220 = vtanh.pop %v3092
      %v3221 = vtanh.pop %v3093
      %v3222 = vtanh.pop %v3094
      %v3223 = vtanh.pop %v3095
      %v3224 = vtanh.pop %v3096
      %v3225 = vtanh.pop %v3097
      %v3226 = vtanh.pop %v3098
      %v3227 = vtanh.pop %v3099
      %v3228 = vtanh.pop %v3100
      %v3229 = vtanh.pop %v3101
      %v3230 = vtanh.pop %v3102
      %v3231 = vtanh.pop %v3103
      %v3232 = vtanh.pop %v3104
      %v3233 = vtanh.pop %v3105
      %v3234 = vtanh.pop %v3106
      %v3235 = vtanh.pop %v3107
      %v3236 = vtanh.pop %v3108
      %v3237 = vtanh.pop %v3109
      %v3238 = vtanh.pop %v3110
      %v3239 = vtanh.pop %v3111
      %v3240 = vtanh.pop %v3112
      %v3241 = vtanh.pop %v3113
      %v3242 = vtanh.pop %v3114
      %v3243 = vtanh.pop %v3115
      %v3244 = vtanh.pop %v3116
      %v3245 = vtanh.pop %v3117
      %v3246 = vtanh.pop %v3118
      %v3247 = vtanh.pop %v3119
      %v3248 = vtanh.pop %v3120
      %v3249 = vtanh.pop %v3121
      %v3250 = vtanh.pop %v3122
      %v3251 = vtanh.pop %v3123
      %v3252 = vtanh.pop %v3124
      %v3253 = vtanh.pop %v3125
      %v3254 = vtanh.pop %v3126
      %v3255 = vtanh.pop %v3127
      %v3256 = vtanh.pop %v3128
      %v3257 = vtanh.pop %v3129
      %v3258 = vtanh.pop %v3130
      %v3259 = vtanh.pop %v3131
      %v3260 = vtanh.pop %v3132
      %v3261 = vtanh.pop %v3133
      %v3262 = vtanh.pop %v3134
      %v3263 = vtanh.pop %v3135
      %v3264 = vtanh.pop %v3136
      %v3265 = vtanh.pop %v3137
      %v3266 = vtanh.pop %v3138
      %v3267 = vtanh.pop %v3139
      %v3268 = vtanh.pop %v3140
      %v3269 = vtanh.pop %v3141
      %v3270 = vtanh.pop %v3142
      %v3271 = vtanh.pop %v3143
      %v3272 = vmul.f32 %v3144, 0.5
      %v3273 = vmul.f32 %v3145, 0.5
      %v3274 = vmul.f32 %v3146, 0.5
      %v3275 = vmul.f32 %v3147, 0.5
      %v3276 = vmul.f32 %v3148, 0.5
      %v3277 = vmul.f32 %v3149, 0.5
      %v3278 = vmul.f32 %v3150, 0.5
      %v3279 = vmul.f32 %v3151, 0.5
      %v3280 = vmul.f32 %v3152, 0.5
      %v3281 = vmul.f32 %v3153, 0.5
      %v3282 = vmul.f32 %v3154, 0.5
      %v3283 = vmul.f32 %v3155, 0.5
      %v3284 = vmul.f32 %v3156, 0.5
      %v3285 = vmul.f32 %v3157, 0.5
      %v3286 = vmul.f32 %v3158, 0.5
      %v3287 = vmul.f32 %v3159, 0.5
      %v3288 = vmul.f32 %v3160, 0.5
      %v3289 = vmul.f32 %v3161, 0.5
      %v3290 = vmul.f32 %v3162, 0.5
      %v3291 = vmul.f32 %v3163, 0.5
      %v3292 = vmul.f32 %v3164, 0.5
      %v3293 = vmul.f32 %v3165, 0.5
      %v3294 = vmul.f32 %v3166, 0.5
      %v3295 = vmul.f32 %v3167, 0.5
      %v3296 = vmul.f32 %v3168, 0.5
      %v3297 = vmul.f32 %v3169, 0.5
      %v3298 = vmul.f32 %v3170, 0.5
      %v3299 = vmul.f32 %v3171, 0.5
      %v3300 = vmul.f32 %v3172, 0.5
      %v3301 = vmul.f32 %v3173, 0.5
      %v3302 = vmul.f32 %v3174, 0.5
      %v3303 = vmul.f32 %v3175, 0.5
      %v3304 = vmul.f32 %v3176, 0.5
      %v3305 = vmul.f32 %v3177, 0.5
      %v3306 = vmul.f32 %v3178, 0.5
      %v3307 = vmul.f32 %v3179, 0.5
      %v3308 = vmul.f32 %v3180, 0.5
      %v3309 = vmul.f32 %v3181, 0.5
      %v3310 = vmul.f32 %v3182, 0.5
      %v3311 = vmul.f32 %v3183, 0.5
      %v3312 = vmul.f32 %v3184, 0.5
      %v3313 = vmul.f32 %v3185, 0.5
      %v3314 = vmul.f32 %v3186, 0.5
      %v3315 = vmul.f32 %v3187, 0.5
      %v3316 = vmul.f32 %v3188, 0.5
      %v3317 = vmul.f32 %v3189, 0.5
      %v3318 = vmul.f32 %v3190, 0.5
      %v3319 = vmul.f32 %v3191, 0.5
      %v3320 = vmul.f32 %v3192, 0.5
      %v3321 = vmul.f32 %v3193, 0.5
      %v3322 = vmul.f32 %v3194, 0.5
      %v3323 = vmul.f32 %v3195, 0.5
      %v3324 = vmul.f32 %v3196, 0.5
      %v3325 = vmul.f32 %v3197, 0.5
      %v3326 = vmul.f32 %v3198, 0.5
      %v3327 = vmul.f32 %v3199, 0.5
      %v3328 = vmul.f32 %v3200, 0.5
      %v3329 = vmul.f32 %v3201, 0.5
      %v3330 = vmul.f32 %v3202, 0.5
      %v3331 = vmul.f32 %v3203, 0.5
      %v3332 = vmul.f32 %v3204, 0.5
      %v3333 = vmul.f32 %v3205, 0.5
      %v3334 = vmul.f32 %v3206, 0.5
      %v3335 = vmul.f32 %v3207, 0.5
      %v3336 = vmul.f32 %v3208, 0.5
      %v3337 = vmul.f32 %v3209, 0.5
      %v3338 = vmul.f32 %v3210, 0.5
      %v3339 = vmul.f32 %v3211, 0.5
      %v3340 = vmul.f32 %v3212, 0.5
      %v3341 = vmul.f32 %v3213, 0.5
      %v3342 = vmul.f32 %v3214, 0.5
      %v3343 = vmul.f32 %v3215, 0.5
      %v3344 = vmul.f32 %v3216, 0.5
      %v3345 = vmul.f32 %v3217, 0.5
      %v3346 = vmul.f32 %v3218, 0.5
      %v3347 = vmul.f32 %v3219, 0.5
      %v3348 = vmul.f32 %v3220, 0.5
      %v3349 = vmul.f32 %v3221, 0.5
      %v3350 = vmul.f32 %v3222, 0.5
      %v3351 = vmul.f32 %v3223, 0.5
      %v3352 = vmul.f32 %v3224, 0.5
      %v3353 = vmul.f32 %v3225, 0.5
      %v3354 = vmul.f32 %v3226, 0.5
      %v3355 = vmul.f32 %v3227, 0.5
      %v3356 = vmul.f32 %v3228, 0.5
      %v3357 = vmul.f32 %v3229, 0.5
      %v3358 = vmul.f32 %v3230, 0.5
      %v3359 = vmul.f32 %v3231, 0.5
      %v3360 = vmul.f32 %v3232, 0.5
      %v3361 = vmul.f32 %v3233, 0.5
      %v3362 = vmul.f32 %v3234, 0.5
      %v3363 = vmul.f32 %v3235, 0.5
      %v3364 = vmul.f32 %v3236, 0.5
      %v3365 = vmul.f32 %v3237, 0.5
      %v3366 = vmul.f32 %v3238, 0.5
      %v3367 = vmul.f32 %v3239, 0.5
      %v3368 = vmul.f32 %v3240, 0.5
      %v3369 = vmul.f32 %v3241, 0.5
      %v3370 = vmul.f32 %v3242, 0.5
      %v3371 = vmul.f32 %v3243, 0.5
      %v3372 = vmul.f32 %v3244, 0.5
      %v3373 = vmul.f32 %v3245, 0.5
      %v3374 = vmul.f32 %v3246, 0.5
      %v3375 = vmul.f32 %v3247, 0.5
      %v3376 = vmul.f32 %v3248, 0.5
      %v3377 = vmul.f32 %v3249, 0.5
      %v3378 = vmul.f32 %v3250, 0.5
      %v3379 = vmul.f32 %v3251, 0.5
      %v3380 = vmul.f32 %v3252, 0.5
      %v3381 = vmul.f32 %v3253, 0.5
      %v3382 = vmul.f32 %v3254, 0.5
      %v3383 = vmul.f32 %v3255, 0.5
      %v3384 = vmul.f32 %v3256, 0.5
      %v3385 = vmul.f32 %v3257, 0.5
      %v3386 = vmul.f32 %v3258, 0.5
      %v3387 = vmul.f32 %v3259, 0.5
      %v3388 = vmul.f32 %v3260, 0.5
      %v3389 = vmul.f32 %v3261, 0.5
      %v3390 = vmul.f32 %v3262, 0.5
      %v3391 = vmul.f32 %v3263, 0.5
      %v3392 = vmul.f32 %v3264, 0.5
      %v3393 = vmul.f32 %v3265, 0.5
      %v3394 = vmul.f32 %v3266, 0.5
      %v3395 = vmul.f32 %v3267, 0.5
      %v3396 = vmul.f32 %v3268, 0.5
      %v3397 = vmul.f32 %v3269, 0.5
      %v3398 = vmul.f32 %v3270, 0.5
      %v3399 = vmul.f32 %v3271, 0.5
      %v3400 = vadd.f32 %v3272, 0.5
      %v3401 = vadd.f32 %v3273, 0.5
      %v3402 = vadd.f32 %v3274, 0.5
      %v3403 = vadd.f32 %v3275, 0.5
      %v3404 = vadd.f32 %v3276, 0.5
      %v3405 = vadd.f32 %v3277, 0.5
      %v3406 = vadd.f32 %v3278, 0.5
      %v3407 = vadd.f32 %v3279, 0.5
      %v3408 = vadd.f32 %v3280, 0.5
      %v3409 = vadd.f32 %v3281, 0.5
      %v3410 = vadd.f32 %v3282, 0.5
      %v3411 = vadd.f32 %v3283, 0.5
      %v3412 = vadd.f32 %v3284, 0.5
      %v3413 = vadd.f32 %v3285, 0.5
      %v3414 = vadd.f32 %v3286, 0.5
      %v3415 = vadd.f32 %v3287, 0.5
      %v3416 = vadd.f32 %v3288, 0.5
      %v3417 = vadd.f32 %v3289, 0.5
      %v3418 = vadd.f32 %v3290, 0.5
      %v3419 = vadd.f32 %v3291, 0.5
      %v3420 = vadd.f32 %v3292, 0.5
      %v3421 = vadd.f32 %v3293, 0.5
      %v3422 = vadd.f32 %v3294, 0.5
      %v3423 = vadd.f32 %v3295, 0.5
      %v3424 = vadd.f32 %v3296, 0.5
      %v3425 = vadd.f32 %v3297, 0.5
      %v3426 = vadd.f32 %v3298, 0.5
      %v3427 = vadd.f32 %v3299, 0.5
      %v3428 = vadd.f32 %v3300, 0.5
      %v3429 = vadd.f32 %v3301, 0.5
      %v3430 = vadd.f32 %v3302, 0.5
      %v3431 = vadd.f32 %v3303, 0.5
      %v3432 = vadd.f32 %v3304, 0.5
      %v3433 = vadd.f32 %v3305, 0.5
      %v3434 = vadd.f32 %v3306, 0.5
      %v3435 = vadd.f32 %v3307, 0.5
      %v3436 = vadd.f32 %v3308, 0.5
      %v3437 = vadd.f32 %v3309, 0.5
      %v3438 = vadd.f32 %v3310, 0.5
      %v3439 = vadd.f32 %v3311, 0.5
      %v3440 = vadd.f32 %v3312, 0.5
      %v3441 = vadd.f32 %v3313, 0.5
      %v3442 = vadd.f32 %v3314, 0.5
      %v3443 = vadd.f32 %v3315, 0.5
      %v3444 = vadd.f32 %v3316, 0.5
      %v3445 = vadd.f32 %v3317, 0.5
      %v3446 = vadd.f32 %v3318, 0.5
      %v3447 = vadd.f32 %v3319, 0.5
      %v3448 = vadd.f32 %v3320, 0.5
      %v3449 = vadd.f32 %v3321, 0.5
      %v3450 = vadd.f32 %v3322, 0.5
      %v3451 = vadd.f32 %v3323, 0.5
      %v3452 = vadd.f32 %v3324, 0.5
      %v3453 = vadd.f32 %v3325, 0.5
      %v3454 = vadd.f32 %v3326, 0.5
      %v3455 = vadd.f32 %v3327, 0.5
      %v3456 = vadd.f32 %v3328, 0.5
      %v3457 = vadd.f32 %v3329, 0.5
      %v3458 = vadd.f32 %v3330, 0.5
      %v3459 = vadd.f32 %v3331, 0.5
      %v3460 = vadd.f32 %v3332, 0.5
      %v3461 = vadd.f32 %v3333, 0.5
      %v3462 = vadd.f32 %v3334, 0.5
      %v3463 = vadd.f32 %v3335, 0.5
      %v3464 = vadd.f32 %v3336, 0.5
      %v3465 = vadd.f32 %v3337, 0.5
      %v3466 = vadd.f32 %v3338, 0.5
      %v3467 = vadd.f32 %v3339, 0.5
      %v3468 = vadd.f32 %v3340, 0.5
      %v3469 = vadd.f32 %v3341, 0.5
      %v3470 = vadd.f32 %v3342, 0.5
      %v3471 = vadd.f32 %v3343, 0.5
      %v3472 = vadd.f32 %v3344, 0.5
      %v3473 = vadd.f32 %v3345, 0.5
      %v3474 = vadd.f32 %v3346, 0.5
      %v3475 = vadd.f32 %v3347, 0.5
      %v3476 = vadd.f32 %v3348, 0.5
      %v3477 = vadd.f32 %v3349, 0.5
      %v3478 = vadd.f32 %v3350, 0.5
      %v3479 = vadd.f32 %v3351, 0.5
      %v3480 = vadd.f32 %v3352, 0.5
      %v3481 = vadd.f32 %v3353, 0.5
      %v3482 = vadd.f32 %v3354, 0.5
      %v3483 = vadd.f32 %v3355, 0.5
      %v3484 = vadd.f32 %v3356, 0.5
      %v3485 = vadd.f32 %v3357, 0.5
      %v3486 = vadd.f32 %v3358, 0.5
      %v3487 = vadd.f32 %v3359, 0.5
      %v3488 = vadd.f32 %v3360, 0.5
      %v3489 = vadd.f32 %v3361, 0.5
      %v3490 = vadd.f32 %v3362, 0.5
      %v3491 = vadd.f32 %v3363, 0.5
      %v3492 = vadd.f32 %v3364, 0.5
      %v3493 = vadd.f32 %v3365, 0.5
      %v3494 = vadd.f32 %v3366, 0.5
      %v3495 = vadd.f32 %v3367, 0.5
      %v3496 = vadd.f32 %v3368, 0.5
      %v3497 = vadd.f32 %v3369, 0.5
      %v3498 = vadd.f32 %v3370, 0.5
      %v3499 = vadd.f32 %v3371, 0.5
      %v3500 = vadd.f32 %v3372, 0.5
      %v3501 = vadd.f32 %v3373, 0.5
      %v3502 = vadd.f32 %v3374, 0.5
      %v3503 = vadd.f32 %v3375, 0.5
      %v3504 = vadd.f32 %v3376, 0.5
      %v3505 = vadd.f32 %v3377, 0.5
      %v3506 = vadd.f32 %v3378, 0.5
      %v3507 = vadd.f32 %v3379, 0.5
      %v3508 = vadd.f32 %v3380, 0.5
      %v3509 = vadd.f32 %v3381, 0.5
      %v3510 = vadd.f32 %v3382, 0.5
      %v3511 = vadd.f32 %v3383, 0.5
      %v3512 = vadd.f32 %v3384, 0.5
      %v3513 = vadd.f32 %v3385, 0.5
      %v3514 = vadd.f32 %v3386, 0.5
      %v3515 = vadd.f32 %v3387, 0.5
      %v3516 = vadd.f32 %v3388, 0.5
      %v3517 = vadd.f32 %v3389, 0.5
      %v3518 = vadd.f32 %v3390, 0.5
      %v3519 = vadd.f32 %v3391, 0.5
      %v3520 = vadd.f32 %v3392, 0.5
      %v3521 = vadd.f32 %v3393, 0.5
      %v3522 = vadd.f32 %v3394, 0.5
      %v3523 = vadd.f32 %v3395, 0.5
      %v3524 = vadd.f32 %v3396, 0.5
      %v3525 = vadd.f32 %v3397, 0.5
      %v3526 = vadd.f32 %v3398, 0.5
      %v3527 = vadd.f32 %v3399, 0.5
      %3528 = vst [vmem:[%s172] sm:$0xff] %v3400
      %3529 = vst [vmem:[%s172 + $0x8] sm:$0xff] %v3401
      %3530 = vst [vmem:[%s172 + $0x10] sm:$0xff] %v3402
      %3531 = vst [vmem:[%s172 + $0x18] sm:$0xff] %v3403
      %3532 = vst [vmem:[%s172 + $0x20] sm:$0xff] %v3404
      %3533 = vst [vmem:[%s172 + $0x28] sm:$0xff] %v3405
      %3534 = vst [vmem:[%s172 + $0x30] sm:$0xff] %v3406
      %3535 = vst [vmem:[%s172 + $0x38] sm:$0xff] %v3407
      %3536 = vst [vmem:[%s172 + $0x40] sm:$0xff] %v3408
      %3537 = vst [vmem:[%s172 + $0x48] sm:$0xff] %v3409
      %3538 = vst [vmem:[%s172 + $0x50] sm:$0xff] %v3410
      %3539 = vst [vmem:[%s172 + $0x58] sm:$0xff] %v3411
      %3540 = vst [vmem:[%s172 + $0x60] sm:$0xff] %v3412
      %3541 = vst [vmem:[%s172 + $0x68] sm:$0xff] %v3413
      %3542 = vst [vmem:[%s172 + $0x70] sm:$0xff] %v3414
      %3543 = vst [vmem:[%s172 + $0x78] sm:$0xff] %v3415
      %3544 = vst [vmem:[%s172 + $0x80] sm:$0xff] %v3416
      %3545 = vst [vmem:[%s172 + $0x88] sm:$0xff] %v3417
      %3546 = vst [vmem:[%s172 + $0x90] sm:$0xff] %v3418
      %3547 = vst [vmem:[%s172 + $0x98] sm:$0xff] %v3419
      %3548 = vst [vmem:[%s172 + $0xa0] sm:$0xff] %v3420
      %3549 = vst [vmem:[%s172 + $0xa8] sm:$0xff] %v3421
      %3550 = vst [vmem:[%s172 + $0xb0] sm:$0xff] %v3422
      %3551 = vst [vmem:[%s172 + $0xb8] sm:$0xff] %v3423
      %3552 = vst [vmem:[%s172 + $0xc0] sm:$0xff] %v3424
      %3553 = vst [vmem:[%s172 + $0xc8] sm:$0xff] %v3425
      %3554 = vst [vmem:[%s172 + $0xd0] sm:$0xff] %v3426
      %3555 = vst [vmem:[%s172 + $0xd8] sm:$0xff] %v3427
      %3556 = vst [vmem:[%s172 + $0xe0] sm:$0xff] %v3428
      %3557 = vst [vmem:[%s172 + $0xe8] sm:$0xff] %v3429
      %3558 = vst [vmem:[%s172 + $0xf0] sm:$0xff] %v3430
      %3559 = vst [vmem:[%s172 + $0xf8] sm:$0xff] %v3431
      %3560 = vst [vmem:[%s172 + $0x100] sm:$0xff] %v3432
      %3561 = vst [vmem:[%s172 + $0x108] sm:$0xff] %v3433
      %3562 = vst [vmem:[%s172 + $0x110] sm:$0xff] %v3434
      %3563 = vst [vmem:[%s172 + $0x118] sm:$0xff] %v3435
      %3564 = vst [vmem:[%s172 + $0x120] sm:$0xff] %v3436
      %3565 = vst [vmem:[%s172 + $0x128] sm:$0xff] %v3437
      %3566 = vst [vmem:[%s172 + $0x130] sm:$0xff] %v3438
      %3567 = vst [vmem:[%s172 + $0x138] sm:$0xff] %v3439
      %3568 = vst [vmem:[%s172 + $0x140] sm:$0xff] %v3440
      %3569 = vst [vmem:[%s172 + $0x148] sm:$0xff] %v3441
      %3570 = vst [vmem:[%s172 + $0x150] sm:$0xff] %v3442
      %3571 = vst [vmem:[%s172 + $0x158] sm:$0xff] %v3443
      %3572 = vst [vmem:[%s172 + $0x160] sm:$0xff] %v3444
      %3573 = vst [vmem:[%s172 + $0x168] sm:$0xff] %v3445
      %3574 = vst [vmem:[%s172 + $0x170] sm:$0xff] %v3446
      %3575 = vst [vmem:[%s172 + $0x178] sm:$0xff] %v3447
      %3576 = vst [vmem:[%s172 + $0x180] sm:$0xff] %v3448
      %3577 = vst [vmem:[%s172 + $0x188] sm:$0xff] %v3449
      %3578 = vst [vmem:[%s172 + $0x190] sm:$0xff] %v3450
      %3579 = vst [vmem:[%s172 + $0x198] sm:$0xff] %v3451
      %3580 = vst [vmem:[%s172 + $0x1a0] sm:$0xff] %v3452
      %3581 = vst [vmem:[%s172 + $0x1a8] sm:$0xff] %v3453
      %3582 = vst [vmem:[%s172 + $0x1b0] sm:$0xff] %v3454
      %3583 = vst [vmem:[%s172 + $0x1b8] sm:$0xff] %v3455
      %3584 = vst [vmem:[%s172 + $0x1c0] sm:$0xff] %v3456
      %3585 = vst [vmem:[%s172 + $0x1c8] sm:$0xff] %v3457
      %3586 = vst [vmem:[%s172 + $0x1d0] sm:$0xff] %v3458
      %3587 = vst [vmem:[%s172 + $0x1d8] sm:$0xff] %v3459
      %3588 = vst [vmem:[%s172 + $0x1e0] sm:$0xff] %v3460
      %3589 = vst [vmem:[%s172 + $0x1e8] sm:$0xff] %v3461
      %3590 = vst [vmem:[%s172 + $0x1f0] sm:$0xff] %v3462
      %3591 = vst [vmem:[%s172 + $0x1f8] sm:$0xff] %v3463
      %3592 = vst [vmem:[%s172 + $0x200] sm:$0xff] %v3464
      %3593 = vst [vmem:[%s172 + $0x208] sm:$0xff] %v3465
      %3594 = vst [vmem:[%s172 + $0x210] sm:$0xff] %v3466
      %3595 = vst [vmem:[%s172 + $0x218] sm:$0xff] %v3467
      %3596 = vst [vmem:[%s172 + $0x220] sm:$0xff] %v3468
      %3597 = vst [vmem:[%s172 + $0x228] sm:$0xff] %v3469
      %3598 = vst [vmem:[%s172 + $0x230] sm:$0xff] %v3470
      %3599 = vst [vmem:[%s172 + $0x238] sm:$0xff] %v3471
      %3600 = vst [vmem:[%s172 + $0x240] sm:$0xff] %v3472
      %3601 = vst [vmem:[%s172 + $0x248] sm:$0xff] %v3473
      %3602 = vst [vmem:[%s172 + $0x250] sm:$0xff] %v3474
      %3603 = vst [vmem:[%s172 + $0x258] sm:$0xff] %v3475
      %3604 = vst [vmem:[%s172 + $0x260] sm:$0xff] %v3476
      %3605 = vst [vmem:[%s172 + $0x268] sm:$0xff] %v3477
      %3606 = vst [vmem:[%s172 + $0x270] sm:$0xff] %v3478
      %3607 = vst [vmem:[%s172 + $0x278] sm:$0xff] %v3479
      %3608 = vst [vmem:[%s172 + $0x280] sm:$0xff] %v3480
      %3609 = vst [vmem:[%s172 + $0x288] sm:$0xff] %v3481
      %3610 = vst [vmem:[%s172 + $0x290] sm:$0xff] %v3482
      %3611 = vst [vmem:[%s172 + $0x298] sm:$0xff] %v3483
      %3612 = vst [vmem:[%s172 + $0x2a0] sm:$0xff] %v3484
      %3613 = vst [vmem:[%s172 + $0x2a8] sm:$0xff] %v3485
      %3614 = vst [vmem:[%s172 + $0x2b0] sm:$0xff] %v3486
      %3615 = vst [vmem:[%s172 + $0x2b8] sm:$0xff] %v3487
      %3616 = vst [vmem:[%s172 + $0x2c0] sm:$0xff] %v3488
      %3617 = vst [vmem:[%s172 + $0x2c8] sm:$0xff] %v3489
      %3618 = vst [vmem:[%s172 + $0x2d0] sm:$0xff] %v3490
      %3619 = vst [vmem:[%s172 + $0x2d8] sm:$0xff] %v3491
      %3620 = vst [vmem:[%s172 + $0x2e0] sm:$0xff] %v3492
      %3621 = vst [vmem:[%s172 + $0x2e8] sm:$0xff] %v3493
      %3622 = vst [vmem:[%s172 + $0x2f0] sm:$0xff] %v3494
      %3623 = vst [vmem:[%s172 + $0x2f8] sm:$0xff] %v3495
      %3624 = vst [vmem:[%s172 + $0x300] sm:$0xff] %v3496
      %3625 = vst [vmem:[%s172 + $0x308] sm:$0xff] %v3497
      %3626 = vst [vmem:[%s172 + $0x310] sm:$0xff] %v3498
      %3627 = vst [vmem:[%s172 + $0x318] sm:$0xff] %v3499
      %3628 = vst [vmem:[%s172 + $0x320] sm:$0xff] %v3500
      %3629 = vst [vmem:[%s172 + $0x328] sm:$0xff] %v3501
      %3630 = vst [vmem:[%s172 + $0x330] sm:$0xff] %v3502
      %3631 = vst [vmem:[%s172 + $0x338] sm:$0xff] %v3503
      %3632 = vst [vmem:[%s172 + $0x340] sm:$0xff] %v3504
      %3633 = vst [vmem:[%s172 + $0x348] sm:$0xff] %v3505
      %3634 = vst [vmem:[%s172 + $0x350] sm:$0xff] %v3506
      %3635 = vst [vmem:[%s172 + $0x358] sm:$0xff] %v3507
      %3636 = vst [vmem:[%s172 + $0x360] sm:$0xff] %v3508
      %3637 = vst [vmem:[%s172 + $0x368] sm:$0xff] %v3509
      %3638 = vst [vmem:[%s172 + $0x370] sm:$0xff] %v3510
      %3639 = vst [vmem:[%s172 + $0x378] sm:$0xff] %v3511
      %3640 = vst [vmem:[%s172 + $0x380] sm:$0xff] %v3512
      %3641 = vst [vmem:[%s172 + $0x388] sm:$0xff] %v3513
      %3642 = vst [vmem:[%s172 + $0x390] sm:$0xff] %v3514
      %3643 = vst [vmem:[%s172 + $0x398] sm:$0xff] %v3515
      %3644 = vst [vmem:[%s172 + $0x3a0] sm:$0xff] %v3516
      %3645 = vst [vmem:[%s172 + $0x3a8] sm:$0xff] %v3517
      %3646 = vst [vmem:[%s172 + $0x3b0] sm:$0xff] %v3518
      %3647 = vst [vmem:[%s172 + $0x3b8] sm:$0xff] %v3519
      %3648 = vst [vmem:[%s172 + $0x3c0] sm:$0xff] %v3520
      %3649 = vst [vmem:[%s172 + $0x3c8] sm:$0xff] %v3521
      %3650 = vst [vmem:[%s172 + $0x3d0] sm:$0xff] %v3522
      %3651 = vst [vmem:[%s172 + $0x3d8] sm:$0xff] %v3523
      %3652 = vst [vmem:[%s172 + $0x3e0] sm:$0xff] %v3524
      %3653 = vst [vmem:[%s172 + $0x3e8] sm:$0xff] %v3525
      %3654 = vst [vmem:[%s172 + $0x3f0] sm:$0xff] %v3526
      %3655 = vst [vmem:[%s172 + $0x3f8] sm:$0xff] %v3527
      %s3656 = smul.u32 128, %s14
      %p3657 = scmp.lt.s32.totalorder %s3656, 255
      %s3658 = scalar_select %p3657, %s3656, 255
      %s3659 = smul.addr %s3658, 8
      %s3660 = scalar_lea.vmem %s3, %s3659
      // Predicated region
      $region33: #{bgmf_forward.1} parent=31 // pred_check
        %p3661 = pneg %p100
      $region34: #{bgmf_forward.1} parent=31 // pred_check_branch
        %3663 = sbr.rel (%p3661) target = $region36
      $region35: #{bgmf_forward.1} parent=31 // pred_region
        %s3664 = smul.u32 128, %s14
      $region36: #{bgmf_forward.1} parent=31 // pred_fallthru
        _
    $region32: #{bgmf_forward.1} parent=5 // pred_fallthru
      _
    %p3665 = scmp.le.s32.totalorder 2, %s9
    // Predicated region
    $region37: #{bgmf_forward.1} parent=5 // pred_check
      %p3666 = pneg %p3665
    $region38: #{bgmf_forward.1} parent=5 // pred_check_branch
      %3668 = sbr.rel (%p3666) target = $region40
    $region39: #{bgmf_forward.1} parent=5 // pred_region
      %s3669 = ssub.s32 %s9, 2
      // Predicated region
      $region41: #{bgmf_forward.1} parent=39 // pred_check
        %p3670 = pneg %p106
      $region42: #{bgmf_forward.1} parent=39 // pred_check_branch
        %3672 = sbr.rel (%p3670) target = $region44
      $region43: #{bgmf_forward.1} parent=39 // pred_region
        %s3673 = smul.u32 128, %s15
        %p3674 = scmp.lt.s32.totalorder %s3673, 255
        %s3675 = scalar_select %p3674, %s3673, 255
        %s3676 = smul.addr %s3675, 8
        %s3677 = scalar_lea.vmem %s3, %s3676
      $region44: #{bgmf_forward.1} parent=39 // pred_fallthru
        _
    $region40: #{bgmf_forward.1} parent=5 // pred_fallthru
      _
  $region6: #{bgmf_forward.1} parent=0 // loop_footer
    %s13 = sadd.s32 1, %s9
  $region7: #{bgmf_forward.1} parent=0 // loop_footer_branch
    %8 = sbr.rel target = $region3
  $region8: #{bgmf_forward.1} parent=0 // loop_exit
    _

</llo_original>
